<compile_context>
chip_gen: v6e
topology: v6e:2x2x1
jax: 0.10.0
libtpu: 0.0.40
codegen_flags: <defaults>
</compile_context>

<pallas_src>
import functools

import jax
import jax.numpy as jnp
from jax import lax
from jax.experimental import pallas as pl
from jax.experimental.pallas import tpu as pltpu


def _round_up(x, m):
    return (x + m - 1) // m * m


def _conv_bn_lrelu_kernel(a0_ref, a1_ref, w_ref, bias_ref, o_ref,
                          buf_ref, patch_ref, *, tm, halo, kh, kw, c_in, wp):
    # a0_ref, a1_ref: (tm, c_in) bf16   consecutive row tiles of flattened padded input
    # w_ref:          (kh*kw*c_in, c_out_pad) bf16   BN-scale-folded conv weight
    # bias_ref:       (1, c_out_pad) f32
    # o_ref:          (tm, c_out_pad) f32 (lane-dense)
    # buf_ref:        (tm + halo, c_in) bf16 scratch  -- tile + halo rows
    # patch_ref:      (tm, kh*kw*c_in) bf16 scratch   -- in-kernel im2col tile
    buf_ref[:tm, :] = a0_ref[...]
    buf_ref[tm:, :] = a1_ref[:halo, :]

    # Build the im2col tile from shifted views of the row buffer (stride=1 flat shifts).
    for di in range(kh):
        for dj in range(kw):
            t = di * kw + dj
            s = di * wp + dj
            patch_ref[:, t * c_in:(t + 1) * c_in] = buf_ref[s:s + tm, :]

    acc = jnp.dot(patch_ref[...], w_ref[...], preferred_element_type=jnp.float32)
    y = acc + bias_ref[...]
    o_ref[...] = jnp.where(y > 0, y, 0.1 * y).astype(o_ref.dtype)


@functools.partial(jax.jit, static_argnames=("stride", "pad", "tm"))
def cnn_block_forward(x, weight, gamma, beta, running_mean, running_var,
                      *, stride=1, pad=1, eps=1e-5, tm=512):
    """x: (N, C_in, H, W) NCHW; weight: (C_out, C_in, kH, kW). Returns NCHW like PyTorch."""
    if stride != 1:
        # TODO(synk): stride != 1 needs strided row reads in the flat-shift scheme.
        raise NotImplementedError("cnn_block_forward currently supports stride=1 only")

    n, c_in, h, w = x.shape
    c_out, _, kh, kw = weight.shape
    hp, wp = h + 2 * pad, w + 2 * pad
    h_out = hp - kh + 1
    w_out = wp - kw + 1

    # ---- geometry ----
    g = h_out * wp                          # flat output rows per image (cols >= w_out are discarded)
    s_max = (kh - 1) * wp + (kw - 1)        # largest flat tap shift
    halo = max(8, _round_up(s_max, 8))
    tm = max(min(_round_up(tm, 8), _round_up(g, 8)), halo)
    n_tiles = pl.cdiv(g, tm)
    m_pad = n_tiles * tm
    a_rows = (n_tiles + 1) * tm             # per image; extra block so halo reads stay in-bounds
    blocks_per_img = n_tiles + 1
    c_out_pad = _round_up(c_out, 128)       # lane-dense output
    k = kh * kw * c_in

    # ---- operands: bf16 into the MXU, f32 accumulate / epilogue ----
    xt = jnp.transpose(x, (0, 2, 3, 1))                                   # NHWC
    xp = jnp.pad(xt, ((0, 0), (pad, pad), (pad, pad), (0, 0)))
    a = xp.reshape(n, hp * wp, c_in).astype(jnp.bfloat16)
    a = jnp.pad(a, ((0, 0), (0, a_rows - hp * wp), (0, 0)))
    a = a.reshape(n * a_rows, c_in)

    scale = gamma / jnp.sqrt(running_var + eps)                           # (C_out,)
    bias = beta - running_mean * scale
    w2 = jnp.transpose(weight, (2, 3, 1, 0)).reshape(k, c_out)            # (kh,kw,C_in) x C_out
    w2 = (w2 * scale[None, :]).astype(jnp.bfloat16)                       # fold BN scale into weights
    w2 = jnp.pad(w2, ((0, 0), (0, c_out_pad - c_out)))
    bias = jnp.pad(bias, (0, c_out_pad - c_out)).reshape(1, c_out_pad).astype(jnp.float32)

    kernel = functools.partial(_conv_bn_lrelu_kernel, tm=tm, halo=halo,
                               kh=kh, kw=kw, c_in=c_in, wp=wp)

    out_flat = pl.pallas_call(
        kernel,
        out_shape=jax.ShapeDtypeStruct((n * m_pad, c_out_pad), x.dtype),
        grid_spec=pltpu.PrefetchScalarGridSpec(
            num_scalar_prefetch=0,
            grid=(n, n_tiles),
            in_specs=[
                pl.BlockSpec((tm, c_in), lambda b, m: (b * blocks_per_img + m, 0)),
                pl.BlockSpec((tm, c_in), lambda b, m: (b * blocks_per_img + m + 1, 0)),
                pl.BlockSpec((k, c_out_pad), lambda b, m: (0, 0)),
                pl.BlockSpec((1, c_out_pad), lambda b, m: (0, 0)),
            ],
            out_specs=pl.BlockSpec((tm, c_out_pad), lambda b, m: (b * n_tiles + m, 0)),
            scratch_shapes=[
                pltpu.VMEM((tm + halo, c_in), jnp.bfloat16),
                pltpu.VMEM((tm, k), jnp.bfloat16),
            ],
        ),
        compiler_params=pltpu.CompilerParams(
            dimension_semantics=("parallel", "parallel"),
            vmem_limit_bytes=32 * 1024 * 1024,
        ),
    )(a, a, w2, bias)

    # Discard padded rows / padded output channels, restore NCHW (API requirement).
    out = out_flat.reshape(n, m_pad, c_out_pad)[:, :g, :c_out]
    out = out.reshape(n, h_out, wp, c_out)[:, :, :w_out, :]
    return jnp.transpose(out, (0, 3, 1, 2))


def _reference(x, weight, gamma, beta, running_mean, running_var,
               *, stride=1, pad=1, eps=1e-5):
    y = lax.conv_general_dilated(
        x, weight, window_strides=(stride, stride),
        padding=((pad, pad), (pad, pad)),
        dimension_numbers=("NCHW", "OIHW", "NCHW"))
    s = (gamma / jnp.sqrt(running_var + eps)).reshape(1, -1, 1, 1)
    b = (beta - running_mean * gamma / jnp.sqrt(running_var + eps)).reshape(1, -1, 1, 1)
    y = y * s + b
    return jnp.where(y > 0, y, 0.1 * y)


if __name__ == "__main__":
    key = jax.random.PRNGKey(0)
    k1, k2, k3, k4, k5, k6 = jax.random.split(key, 6)

    N, C_IN, H, W = 2, 4, 16, 16
    C_OUT, KH, KW = 8, 3, 3
    STRIDE, PAD = 1, 1

    x = jax.random.normal(k1, (N, C_IN, H, W), jnp.float32)
    weight = 0.1 * jax.random.normal(k2, (C_OUT, C_IN, KH, KW), jnp.float32)
    gamma = 1.0 + 0.1 * jax.random.normal(k3, (C_OUT,), jnp.float32)
    beta = 0.1 * jax.random.normal(k4, (C_OUT,), jnp.float32)
    running_mean = 0.1 * jax.random.normal(k5, (C_OUT,), jnp.float32)
    running_var = jnp.abs(jax.random.normal(k6, (C_OUT,), jnp.float32)) + 0.5

    out = cnn_block_forward(x, weight, gamma, beta, running_mean, running_var,
                            stride=STRIDE, pad=PAD)
    out = jax.block_until_ready(out)

    ref = _reference(x, weight, gamma, beta, running_mean, running_var,
                     stride=STRIDE, pad=PAD)
    assert out.shape == (N, C_OUT, H, W), out.shape
    err = float(jnp.abs(out - ref).max())
    # bf16 MXU operands with f32 accumulation vs a pure-f32 reference.
    assert err < 5e-2, err
    print("KERNEL_OK")
</pallas_src>

<mosaic_0001>
module attributes {stable_mosaic.version = 11 : i64} {
  func.func @_conv_bn_lrelu_kernel(%arg0: i32, %arg1: i32, %arg2: memref<288x4xbf16, #tpu.memory_space<vmem>>, %arg3: memref<288x4xbf16, #tpu.memory_space<vmem>>, %arg4: memref<36x128xbf16, #tpu.memory_space<vmem>>, %arg5: memref<1x128xf32, #tpu.memory_space<vmem>>, %arg6: memref<288x128xf32, #tpu.memory_space<vmem>>, %arg7: memref<328x4xbf16, #tpu.memory_space<vmem>>, %arg8: memref<288x36xbf16, #tpu.memory_space<vmem>>) attributes {dimension_semantics = [#tpu.dimension_semantics<parallel>, #tpu.dimension_semantics<parallel>], iteration_bounds = array<i64: 2, 1>, scalar_prefetch = 0 : i64, scratch_operands = 2 : i64, tpu.core_type = #tpu.core_type<tc>, window_params = [{transform_indices = @transform_0, window_bounds = array<i64: 288, 4>}, {transform_indices = @transform_1, window_bounds = array<i64: 288, 4>}, {pipeline_mode = #tpu.pipeline_mode<synchronous>, transform_indices = @transform_2, window_bounds = array<i64: 36, 128>}, {pipeline_mode = #tpu.pipeline_mode<synchronous>, transform_indices = @transform_3, window_bounds = array<i64: 1, 128>}, {transform_indices = @transform_4, window_bounds = array<i64: 288, 128>}]} {
    %c0 = arith.constant 0 : index
    %c0_0 = arith.constant 0 : index
    %0 = vector.load %arg2[%c0, %c0_0] : memref<288x4xbf16, #tpu.memory_space<vmem>>, vector<288x4xbf16>
    %c0_1 = arith.constant 0 : index
    %c0_2 = arith.constant 0 : index
    %1 = vector.load %arg7[%c0_1, %c0_2] : memref<328x4xbf16, #tpu.memory_space<vmem>>, vector<288x4xbf16>
    tpu.vector_store %arg7[%c0_1, %c0_2], %0 {strides = array<i32>} : memref<328x4xbf16, #tpu.memory_space<vmem>>, vector<288x4xbf16>,
    %c0_3 = arith.constant 0 : index
    %c0_4 = arith.constant 0 : index
    %2 = vector.load %arg3[%c0_3, %c0_4] : memref<288x4xbf16, #tpu.memory_space<vmem>>, vector<40x4xbf16>
    %c288 = arith.constant 288 : index
    %c0_5 = arith.constant 0 : index
    %3 = vector.load %arg7[%c288, %c0_5] : memref<328x4xbf16, #tpu.memory_space<vmem>>, vector<40x4xbf16>
    tpu.vector_store %arg7[%c288, %c0_5], %2 {strides = array<i32>} : memref<328x4xbf16, #tpu.memory_space<vmem>>, vector<40x4xbf16>,
    %c0_6 = arith.constant 0 : index
    %c0_7 = arith.constant 0 : index
    %4 = vector.load %arg7[%c0_6, %c0_7] : memref<328x4xbf16, #tpu.memory_space<vmem>>, vector<288x4xbf16>
    %c0_8 = arith.constant 0 : index
    %c0_9 = arith.constant 0 : index
    %5 = vector.load %arg8[%c0_8, %c0_9] : memref<288x36xbf16, #tpu.memory_space<vmem>>, vector<288x4xbf16>
    tpu.vector_store %arg8[%c0_8, %c0_9], %4 {strides = array<i32>} : memref<288x36xbf16, #tpu.memory_space<vmem>>, vector<288x4xbf16>,
    %c1 = arith.constant 1 : index
    %c0_10 = arith.constant 0 : index
    %6 = vector.load %arg7[%c1, %c0_10] : memref<328x4xbf16, #tpu.memory_space<vmem>>, vector<288x4xbf16>
    %c0_11 = arith.constant 0 : index
    %c4 = arith.constant 4 : index
    %7 = vector.load %arg8[%c0_11, %c4] : memref<288x36xbf16, #tpu.memory_space<vmem>>, vector<288x4xbf16>
    tpu.vector_store %arg8[%c0_11, %c4], %6 {strides = array<i32>} : memref<288x36xbf16, #tpu.memory_space<vmem>>, vector<288x4xbf16>,
    %c2 = arith.constant 2 : index
    %c0_12 = arith.constant 0 : index
    %8 = vector.load %arg7[%c2, %c0_12] : memref<328x4xbf16, #tpu.memory_space<vmem>>, vector<288x4xbf16>
    %c0_13 = arith.constant 0 : index
    %c8 = arith.constant 8 : index
    %9 = vector.load %arg8[%c0_13, %c8] : memref<288x36xbf16, #tpu.memory_space<vmem>>, vector<288x4xbf16>
    tpu.vector_store %arg8[%c0_13, %c8], %8 {strides = array<i32>} : memref<288x36xbf16, #tpu.memory_space<vmem>>, vector<288x4xbf16>,
    %c18 = arith.constant 18 : index
    %c0_14 = arith.constant 0 : index
    %10 = vector.load %arg7[%c18, %c0_14] : memref<328x4xbf16, #tpu.memory_space<vmem>>, vector<288x4xbf16>
    %c0_15 = arith.constant 0 : index
    %c12 = arith.constant 12 : index
    %11 = vector.load %arg8[%c0_15, %c12] : memref<288x36xbf16, #tpu.memory_space<vmem>>, vector<288x4xbf16>
    tpu.vector_store %arg8[%c0_15, %c12], %10 {strides = array<i32>} : memref<288x36xbf16, #tpu.memory_space<vmem>>, vector<288x4xbf16>,
    %c19 = arith.constant 19 : index
    %c0_16 = arith.constant 0 : index
    %12 = vector.load %arg7[%c19, %c0_16] : memref<328x4xbf16, #tpu.memory_space<vmem>>, vector<288x4xbf16>
    %c0_17 = arith.constant 0 : index
    %c16 = arith.constant 16 : index
    %13 = vector.load %arg8[%c0_17, %c16] : memref<288x36xbf16, #tpu.memory_space<vmem>>, vector<288x4xbf16>
    tpu.vector_store %arg8[%c0_17, %c16], %12 {strides = array<i32>} : memref<288x36xbf16, #tpu.memory_space<vmem>>, vector<288x4xbf16>,
    %c20 = arith.constant 20 : index
    %c0_18 = arith.constant 0 : index
    %14 = vector.load %arg7[%c20, %c0_18] : memref<328x4xbf16, #tpu.memory_space<vmem>>, vector<288x4xbf16>
    %c0_19 = arith.constant 0 : index
    %c20_20 = arith.constant 20 : index
    %15 = vector.load %arg8[%c0_19, %c20_20] : memref<288x36xbf16, #tpu.memory_space<vmem>>, vector<288x4xbf16>
    tpu.vector_store %arg8[%c0_19, %c20_20], %14 {strides = array<i32>} : memref<288x36xbf16, #tpu.memory_space<vmem>>, vector<288x4xbf16>,
    %c36 = arith.constant 36 : index
    %c0_21 = arith.constant 0 : index
    %16 = vector.load %arg7[%c36, %c0_21] : memref<328x4xbf16, #tpu.memory_space<vmem>>, vector<288x4xbf16>
    %c0_22 = arith.constant 0 : index
    %c24 = arith.constant 24 : index
    %17 = vector.load %arg8[%c0_22, %c24] : memref<288x36xbf16, #tpu.memory_space<vmem>>, vector<288x4xbf16>
    tpu.vector_store %arg8[%c0_22, %c24], %16 {strides = array<i32>} : memref<288x36xbf16, #tpu.memory_space<vmem>>, vector<288x4xbf16>,
    %c37 = arith.constant 37 : index
    %c0_23 = arith.constant 0 : index
    %18 = vector.load %arg7[%c37, %c0_23] : memref<328x4xbf16, #tpu.memory_space<vmem>>, vector<288x4xbf16>
    %c0_24 = arith.constant 0 : index
    %c28 = arith.constant 28 : index
    %19 = vector.load %arg8[%c0_24, %c28] : memref<288x36xbf16, #tpu.memory_space<vmem>>, vector<288x4xbf16>
    tpu.vector_store %arg8[%c0_24, %c28], %18 {strides = array<i32>} : memref<288x36xbf16, #tpu.memory_space<vmem>>, vector<288x4xbf16>,
    %c38 = arith.constant 38 : index
    %c0_25 = arith.constant 0 : index
    %20 = vector.load %arg7[%c38, %c0_25] : memref<328x4xbf16, #tpu.memory_space<vmem>>, vector<288x4xbf16>
    %c0_26 = arith.constant 0 : index
    %c32 = arith.constant 32 : index
    %21 = vector.load %arg8[%c0_26, %c32] : memref<288x36xbf16, #tpu.memory_space<vmem>>, vector<288x4xbf16>
    tpu.vector_store %arg8[%c0_26, %c32], %20 {strides = array<i32>} : memref<288x36xbf16, #tpu.memory_space<vmem>>, vector<288x4xbf16>,
    %c0_27 = arith.constant 0 : index
    %c0_28 = arith.constant 0 : index
    %22 = vector.load %arg8[%c0_27, %c0_28] : memref<288x36xbf16, #tpu.memory_space<vmem>>, vector<288x36xbf16>
    %c0_29 = arith.constant 0 : index
    %c0_30 = arith.constant 0 : index
    %23 = vector.load %arg4[%c0_29, %c0_30] : memref<36x128xbf16, #tpu.memory_space<vmem>>, vector<36x128xbf16>
    %cst = arith.constant dense<0.000000e+00> : vector<288x128xf32>
    %24 = tpu.matmul %22, %23, %cst {dimension_numbers = #tpu.dot_dimension_numbers<[1], [0], [0], [1], [0, 0, 1, 1], [], []>} : vector<288x36xbf16>, vector<36x128xbf16>, vector<288x128xf32> -> vector<288x128xf32>
    %c0_31 = arith.constant 0 : index
    %c0_32 = arith.constant 0 : index
    %25 = vector.load %arg5[%c0_31, %c0_32] : memref<1x128xf32, #tpu.memory_space<vmem>>, vector<1x128xf32>
    %26 = vector.broadcast %25 : vector<1x128xf32> to vector<288x128xf32>
    %27 = arith.addf %24, %26 : vector<288x128xf32>
    %cst_33 = arith.constant 0.000000e+00 : f32
    %28 = vector.broadcast %cst_33 : f32 to vector<288x128xf32>
    %29 = arith.cmpf ogt, %27, %28 : vector<288x128xf32>
    %cst_34 = arith.constant 1.000000e-01 : f32
    %30 = vector.broadcast %cst_34 : f32 to vector<288x128xf32>
    %31 = arith.mulf %30, %27 : vector<288x128xf32>
    %32 = arith.select %29, %27, %31 : vector<288x128xi1>, vector<288x128xf32>
    %c0_35 = arith.constant 0 : index
    %c0_36 = arith.constant 0 : index
    %33 = vector.load %arg6[%c0_35, %c0_36] : memref<288x128xf32, #tpu.memory_space<vmem>>, vector<288x128xf32>
    tpu.vector_store %arg6[%c0_35, %c0_36], %32 {strides = array<i32>} : memref<288x128xf32, #tpu.memory_space<vmem>>, vector<288x128xf32>,
    return
  }
  func.func @transform_0(%arg0: i32, %arg1: i32) -> (i32, i32) {
    %c2_i32 = arith.constant 2 : i32
    %0 = arith.muli %arg0, %c2_i32 : i32
    %1 = arith.addi %0, %arg1 : i32
    %c0_i32 = arith.constant 0 : i32
    %c0_i32_0 = arith.constant 0 : i32
    return %1, %c0_i32 : i32, i32
  }
  func.func @transform_1(%arg0: i32, %arg1: i32) -> (i32, i32) {
    %c2_i32 = arith.constant 2 : i32
    %0 = arith.muli %arg0, %c2_i32 : i32
    %1 = arith.addi %0, %arg1 : i32
    %c1_i32 = arith.constant 1 : i32
    %2 = arith.addi %1, %c1_i32 : i32
    %c0_i32 = arith.constant 0 : i32
    %c0_i32_0 = arith.constant 0 : i32
    return %2, %c0_i32 : i32, i32
  }
  func.func @transform_2(%arg0: i32, %arg1: i32) -> (i32, i32) {
    %c0_i32 = arith.constant 0 : i32
    %c0_i32_0 = arith.constant 0 : i32
    %c0_i32_1 = arith.constant 0 : i32
    return %c0_i32, %c0_i32_0 : i32, i32
  }
  func.func @transform_3(%arg0: i32, %arg1: i32) -> (i32, i32) {
    %c0_i32 = arith.constant 0 : i32
    %c0_i32_0 = arith.constant 0 : i32
    %c0_i32_1 = arith.constant 0 : i32
    return %c0_i32, %c0_i32_0 : i32, i32
  }
  func.func @transform_4(%arg0: i32, %arg1: i32) -> (i32, i32) {
    %c1_i32 = arith.constant 1 : i32
    %0 = arith.muli %arg0, %c1_i32 : i32
    %1 = arith.addi %0, %arg1 : i32
    %c0_i32 = arith.constant 0 : i32
    %c0_i32_0 = arith.constant 0 : i32
    return %1, %c0_i32 : i32, i32
  }
}

</mosaic_0001>

<llo_original>
// kernel: cnn_block_forward.1
$region0: #{cnn_block_forward.1}
  #allocation0 [shape = 'u32[]', space=smem, size = 0x4, offset = 0x4, fixed_abs, tag = 'smem constant byte address 0x4 - core index']
  #allocation1 [shape = 'u32[144,128]{1,0:T(1,128)}', space=vmem, size = 0x12000, scoped, tag = 'internal scratch']
  #allocation2 [shape = 'bf16[328,4]{1,0:T(8,128)(2,1)}', space=vmem, size = 0x14800, scoped, tag = 'scratch operand']
  #allocation3 [shape = 'bf16[288,36]{1,0:T(8,128)(2,1)}', space=vmem, size = 0x12000, scoped, tag = 'scratch operand']
  %s0 = inlined_call_operand.vmem [shape: bf16[1152,4], index: 0, kind: input, shape index: {}, may-alias: {0,1}]
  %s1 = inlined_call_operand.vmem [shape: bf16[1152,4], index: 1, kind: input, shape index: {}, may-alias: {0,1}]
  %s2 = inlined_call_operand.vmem [shape: bf16[36,128], index: 2, kind: input, shape index: {}]
  %s3 = inlined_call_operand.vmem [shape: f32[1,128], index: 3, kind: input, shape index: {}]
  %s4 = inlined_call_operand.vmem [shape: f32[576,128], index: 4, kind: output, shape index: {}]
  %s5 = sld [smem:[#allocation0]]
  $region49: #{cnn_block_forward.1} parent=0
    _
  %s7 = ssub.s32 1, %s5
  %s8 = scalar_select 0, %s7, %s5
  loop: start=0, step=1, limit=4
  $region2: #{cnn_block_forward.1} parent=0 // loop_pre_header
    _
  $region3: #{cnn_block_forward.1} parent=0 // loop_header
    %s10 = sphi 0, %s14
    %p11 = scmp.ge.s32.totalorder %s10, 4
    %s17 = sphi 0, %s29
    %s18 = sphi 0, %s25
    %s19 = sphi 0, %s17
    %s20 = sphi 0, %s18
    %s21 = sphi 0, %s19
    %s22 = sphi 0, %s20
    %s36 = sphi 0, %s38
    %s39 = sphi 0, %s36
    %s40 = sphi 0, %s39
    %s56 = sphi 0, %s40
    %s68 = sphi 0, %s70
    %s71 = sphi 0, %s68
    %s72 = sphi 0, %s71
    %s88 = sphi 0, %s72
    %s92 = sphi 0, %s92
    %s94 = sphi 0, %s92
    %s95 = sphi 0, %s94
    %s109 = sphi 0, %s95
    %s113 = sphi 0, %s113
    %s115 = sphi 0, %s113
    %s116 = sphi 0, %s115
    %s130 = sphi 0, %s116
    %s138 = sphi 0, %s140
    %s141 = sphi 0, %s138
    %s142 = sphi 0, %s141
    %s158 = sphi 0, %s142
  $region4: #{cnn_block_forward.1} parent=0 // loop_header_branch
    %13 = sbr.rel (%p11) target = $region8
  $region5: #{cnn_block_forward.1} parent=0 // loop_body
    %s15 = ssub.s32 %s10, 1
    %s16 = ssub.s32 %s10, 2
    %s23 = sadd.s32 1, %s18
    %p24 = scmp.ge.s32.totalorder %s23, 1
    %s25 = scalar_select %p24, 0, %s23
    %s26 = sadd.s32 1, %s17
    %s27 = scalar_select %p24, %s26, %s17
    %p28 = scmp.ge.s32.totalorder %s27, 2
    %s29 = scalar_select %p28, 0, %s27
    %s30 = smul.u32 %s17, 2
    %s31 = sadd.s32 %s30, %s18
    %s32 = smul.u32 %s29, 2
    %s33 = sadd.s32 %s32, %s25
    %s34 = ssub.s32 %s31, %s33
    %p35 = scmp.eq.s32.totalorder %s34, 0
    %s37 = sadd.s32 %s36, 1
    %s38 = scalar_select %p35, %s36, %s37
    %p41 = pneg %p35
    %p42 = scmp.eq.s32.totalorder %s10, 1
    %p43 = por %p41, %p42
    %p44 = scmp.ne.s32.totalorder %s36, %s39
    %p45 = scmp.eq.s32.totalorder %s10, 0
    %p46 = por %p44, %p45
    %p47 = scmp.ne.s32.totalorder %s36, %s39
    %p48 = scmp.eq.s32.totalorder %s15, 1
    %p49 = por %p47, %p48
    %p50 = scmp.ne.s32.totalorder %s39, %s40
    %p51 = scmp.eq.s32.totalorder %s15, 0
    %p52 = por %p50, %p51
    %p53 = scmp.ne.s32.totalorder %s39, %s40
    %p54 = scmp.eq.s32.totalorder %s16, 1
    %p55 = por %p53, %p54
    %p57 = scmp.ne.s32.totalorder %s40, %s56
    %p58 = scmp.eq.s32.totalorder %s16, 0
    %p59 = por %p57, %p58
    %s60 = smul.u32 %s17, 2
    %s61 = sadd.s32 %s60, %s18
    %s62 = sadd.s32 %s61, 1
    %s63 = smul.u32 %s29, 2
    %s64 = sadd.s32 %s63, %s25
    %s65 = sadd.s32 %s64, 1
    %s66 = ssub.s32 %s62, %s65
    %p67 = scmp.eq.s32.totalorder %s66, 0
    %s69 = sadd.s32 %s68, 1
    %s70 = scalar_select %p67, %s68, %s69
    %p73 = pneg %p67
    %p74 = scmp.eq.s32.totalorder %s10, 1
    %p75 = por %p73, %p74
    %p76 = scmp.ne.s32.totalorder %s68, %s71
    %p77 = scmp.eq.s32.totalorder %s10, 0
    %p78 = por %p76, %p77
    %p79 = scmp.ne.s32.totalorder %s68, %s71
    %p80 = scmp.eq.s32.totalorder %s15, 1
    %p81 = por %p79, %p80
    %p82 = scmp.ne.s32.totalorder %s71, %s72
    %p83 = scmp.eq.s32.totalorder %s15, 0
    %p84 = por %p82, %p83
    %p85 = scmp.ne.s32.totalorder %s71, %s72
    %p86 = scmp.eq.s32.totalorder %s16, 1
    %p87 = por %p85, %p86
    %p89 = scmp.ne.s32.totalorder %s72, %s88
    %p90 = scmp.eq.s32.totalorder %s16, 0
    %p91 = por %p89, %p90
    %s93 = sadd.s32 %s92, 1
    %p96 = scmp.eq.s32.totalorder %s10, 1
    %p97 = scmp.ne.s32.totalorder %s92, %s94
    %p98 = scmp.eq.s32.totalorder %s10, 0
    %p99 = por %p97, %p98
    %p100 = scmp.ne.s32.totalorder %s92, %s94
    %p101 = scmp.eq.s32.totalorder %s15, 1
    %p102 = por %p100, %p101
    %p103 = scmp.ne.s32.totalorder %s94, %s95
    %p104 = scmp.eq.s32.totalorder %s15, 0
    %p105 = por %p103, %p104
    %p106 = scmp.ne.s32.totalorder %s94, %s95
    %p107 = scmp.eq.s32.totalorder %s16, 1
    %p108 = por %p106, %p107
    %p110 = scmp.ne.s32.totalorder %s95, %s109
    %p111 = scmp.eq.s32.totalorder %s16, 0
    %p112 = por %p110, %p111
    %s114 = sadd.s32 %s113, 1
    %p117 = scmp.eq.s32.totalorder %s10, 1
    %p118 = scmp.ne.s32.totalorder %s113, %s115
    %p119 = scmp.eq.s32.totalorder %s10, 0
    %p120 = por %p118, %p119
    %p121 = scmp.ne.s32.totalorder %s113, %s115
    %p122 = scmp.eq.s32.totalorder %s15, 1
    %p123 = por %p121, %p122
    %p124 = scmp.ne.s32.totalorder %s115, %s116
    %p125 = scmp.eq.s32.totalorder %s15, 0
    %p126 = por %p124, %p125
    %p127 = scmp.ne.s32.totalorder %s115, %s116
    %p128 = scmp.eq.s32.totalorder %s16, 1
    %p129 = por %p127, %p128
    %p131 = scmp.ne.s32.totalorder %s116, %s130
    %p132 = scmp.eq.s32.totalorder %s16, 0
    %p133 = por %p131, %p132
    %s134 = sadd.s32 %s17, %s18
    %s135 = sadd.s32 %s29, %s25
    %s136 = ssub.s32 %s134, %s135
    %p137 = scmp.eq.s32.totalorder %s136, 0
    %s139 = sadd.s32 %s138, 1
    %s140 = scalar_select %p137, %s138, %s139
    %p143 = pneg %p137
    %p144 = scmp.eq.s32.totalorder %s10, 1
    %p145 = por %p143, %p144
    %p146 = scmp.ne.s32.totalorder %s138, %s141
    %p147 = scmp.eq.s32.totalorder %s10, 0
    %p148 = por %p146, %p147
    %p149 = scmp.ne.s32.totalorder %s138, %s141
    %p150 = scmp.eq.s32.totalorder %s15, 1
    %p151 = por %p149, %p150
    %p152 = scmp.ne.s32.totalorder %s141, %s142
    %p153 = scmp.eq.s32.totalorder %s15, 0
    %p154 = por %p152, %p153
    %p155 = scmp.ne.s32.totalorder %s141, %s142
    %p156 = scmp.eq.s32.totalorder %s16, 1
    %p157 = por %p155, %p156
    %p159 = scmp.ne.s32.totalorder %s142, %s158
    %p160 = scmp.eq.s32.totalorder %s16, 0
    %p161 = por %p159, %p160
    %p162 = scmp.le.s32.totalorder 1, %s10
    %p163 = scmp.lt.s32.totalorder %s10, 3
    %p164 = pnand %p162, %p163
    %p165 = pneg %p164
    // Predicated region
    $region9: #{cnn_block_forward.1} parent=5 // pred_check
      _
    $region10: #{cnn_block_forward.1} parent=5 // pred_check_branch
      %167 = sbr.rel (%p164) target = $region12
    $region11: #{cnn_block_forward.1} parent=5 // pred_region
      %s168 = ssub.s32 %s10, 1
      // Predicated region
      $region13: #{cnn_block_forward.1} parent=11 // pred_check
        %p169 = pneg %p105
      $region14: #{cnn_block_forward.1} parent=11 // pred_check_branch
        %171 = sbr.rel (%p169) target = $region16
      $region15: #{cnn_block_forward.1} parent=11 // pred_region
        _
      $region16: #{cnn_block_forward.1} parent=11 // pred_fallthru
        _
      // Predicated region
      $region17: #{cnn_block_forward.1} parent=11 // pred_check
        %p172 = pneg %p126
      $region18: #{cnn_block_forward.1} parent=11 // pred_check_branch
        %174 = sbr.rel (%p172) target = $region20
      $region19: #{cnn_block_forward.1} parent=11 // pred_region
        _
      $region20: #{cnn_block_forward.1} parent=11 // pred_fallthru
        _
    $region12: #{cnn_block_forward.1} parent=5 // pred_fallthru
      _
    %p175 = scmp.lt.s32.totalorder %s10, 2
    // Predicated region
    $region21: #{cnn_block_forward.1} parent=5 // pred_check
      %p176 = pneg %p175
    $region22: #{cnn_block_forward.1} parent=5 // pred_check_branch
      %178 = sbr.rel (%p176) target = $region24
    $region23: #{cnn_block_forward.1} parent=5 // pred_region
      // Predicated region
      $region25: #{cnn_block_forward.1} parent=23 // pred_check
        %p179 = pneg %p46
      $region26: #{cnn_block_forward.1} parent=23 // pred_check_branch
        %181 = sbr.rel (%p179) target = $region28
      $region27: #{cnn_block_forward.1} parent=23 // pred_region
        %s182 = smul.u32 %s17, 2
        %s183 = sadd.s32 %s182, %s18
        %s184 = smul.u32 36, %s183
        %p185 = scmp.lt.s32.totalorder %s184, 143
        %s186 = scalar_select %p185, %s184, 143
        %s187 = smul.addr %s186, 4
        %s188 = scalar_lea.vmem %s0, %s187
        %s189 = smul.u32 %s17, 2
        %s190 = sadd.s32 %s189, %s18
        %s191 = smul.u32 36, %s190
      $region28: #{cnn_block_forward.1} parent=23 // pred_fallthru
        _
      // Predicated region
      $region29: #{cnn_block_forward.1} parent=23 // pred_check
        %p192 = pneg %p78
      $region30: #{cnn_block_forward.1} parent=23 // pred_check_branch
        %194 = sbr.rel (%p192) target = $region32
      $region31: #{cnn_block_forward.1} parent=23 // pred_region
        %s195 = smul.u32 %s17, 2
        %s196 = sadd.s32 %s195, %s18
        %s197 = sadd.s32 %s196, 1
        %s198 = smul.u32 36, %s197
        %p199 = scmp.lt.s32.totalorder %s198, 143
        %s200 = scalar_select %p199, %s198, 143
        %s201 = smul.addr %s200, 4
        %s202 = scalar_lea.vmem %s1, %s201
        %s203 = smul.u32 %s17, 2
        %s204 = sadd.s32 %s203, %s18
        %s205 = sadd.s32 %s204, 1
        %s206 = smul.u32 36, %s205
      $region32: #{cnn_block_forward.1} parent=23 // pred_fallthru
        _
    $region24: #{cnn_block_forward.1} parent=5 // pred_fallthru
      _
    %p207 = scmp.le.s32.totalorder 1, %s10
    %p208 = scmp.lt.s32.totalorder %s10, 3
    %p209 = pnand %p207, %p208
    %p210 = pneg %p209
    // Predicated region
    $region33: #{cnn_block_forward.1} parent=5 // pred_check
      _
    $region34: #{cnn_block_forward.1} parent=5 // pred_check_branch
      %212 = sbr.rel (%p209) target = $region36
    $region35: #{cnn_block_forward.1} parent=5 // pred_region
      %s213 = ssub.s32 %s10, 1
      %s214 = smul.u32 %s19, 2
      %s215 = sadd.s32 %s214, %s20
      %s216 = smul.u32 36, %s215
      %p217 = scmp.lt.s32.totalorder %s216, 143
      %s218 = scalar_select %p217, %s216, 143
      %s219 = smul.addr %s218, 4
      %s220 = scalar_lea.vmem %s0, %s219
      %p221 = pneg %p52
      %p222 = pneg %p49
      %s223 = smul.u32 %s19, 2
      %s224 = sadd.s32 %s223, %s20
      %s225 = sadd.s32 %s224, 1
      %s226 = smul.u32 36, %s225
      %p227 = scmp.lt.s32.totalorder %s226, 143
      %s228 = scalar_select %p227, %s226, 143
      %s229 = smul.addr %s228, 4
      %s230 = scalar_lea.vmem %s1, %s229
      %p231 = pneg %p84
      %p232 = pneg %p81
      %p233 = pneg %p105
      %p234 = pneg %p102
      %p235 = pneg %p126
      %p236 = pneg %p123
      %p237 = pneg %p154
      %p238 = pneg %p151
      %s239 = sadd.s32 %s19, %s20
      %s240 = smul.u32 36, %s239
      %p241 = scmp.lt.s32.totalorder %s240, 71
      %s242 = scalar_select %p241, %s240, 71
      %s243 = smul.addr %s242, 8
      %s244 = scalar_lea.vmem %s4, %s243
      %s245 = smul.u32 %s19, 2
      %s246 = sadd.s32 %s245, %s20
      %s247 = smul.u32 36, %s246
      %p248 = scmp.lt.s32.totalorder %s247, 143
      %s249 = scalar_select %p248, %s247, 143
      %s250 = smul.addr %s249, 4
      %s251 = scalar_lea.vmem %s0, %s250
      %s252 = smul.u32 %s19, 2
      %s253 = sadd.s32 %s252, %s20
      %s254 = smul.u32 36, %s253
      %s255 = smul.u32 %s19, 2
      %s256 = sadd.s32 %s255, %s20
      %s257 = sadd.s32 %s256, 1
      %s258 = smul.u32 36, %s257
      %p259 = scmp.lt.s32.totalorder %s258, 143
      %s260 = scalar_select %p259, %s258, 143
      %s261 = smul.addr %s260, 4
      %s262 = scalar_lea.vmem %s1, %s261
      %s263 = smul.u32 %s19, 2
      %s264 = sadd.s32 %s263, %s20
      %s265 = sadd.s32 %s264, 1
      %s266 = smul.u32 36, %s265
      %s267 = sadd.s32 %s19, %s20
      %s268 = smul.u32 36, %s267
      %p269 = scmp.lt.s32.totalorder %s268, 71
      %s270 = scalar_select %p269, %s268, 71
      %s271 = smul.addr %s270, 8
      %s272 = scalar_lea.vmem %s4, %s271
      %s273 = sadd.s32 %s19, %s20
      %s274 = smul.u32 36, %s273
      %v276 = vld [vmem:[%s251] sm:$0xf]
      %v277 = vld [vmem:[%s251 + $0x4] sm:$0xf]
      %v278 = vld [vmem:[%s251 + $0x8] sm:$0xf]
      %v279 = vld [vmem:[%s251 + $0xc] sm:$0xf]
      %v280 = vld [vmem:[%s251 + $0x10] sm:$0xf]
      %v281 = vld [vmem:[%s251 + $0x14] sm:$0xf]
      %v282 = vld [vmem:[%s251 + $0x18] sm:$0xf]
      %v283 = vld [vmem:[%s251 + $0x1c] sm:$0xf]
      %v284 = vld [vmem:[%s251 + $0x20] sm:$0xf]
      %v285 = vld [vmem:[%s251 + $0x24] sm:$0xf]
      %v286 = vld [vmem:[%s251 + $0x28] sm:$0xf]
      %v287 = vld [vmem:[%s251 + $0x2c] sm:$0xf]
      %v288 = vld [vmem:[%s251 + $0x30] sm:$0xf]
      %v289 = vld [vmem:[%s251 + $0x34] sm:$0xf]
      %v290 = vld [vmem:[%s251 + $0x38] sm:$0xf]
      %v291 = vld [vmem:[%s251 + $0x3c] sm:$0xf]
      %v292 = vld [vmem:[%s251 + $0x40] sm:$0xf]
      %v293 = vld [vmem:[%s251 + $0x44] sm:$0xf]
      %v294 = vld [vmem:[%s251 + $0x48] sm:$0xf]
      %v295 = vld [vmem:[%s251 + $0x4c] sm:$0xf]
      %v296 = vld [vmem:[%s251 + $0x50] sm:$0xf]
      %v297 = vld [vmem:[%s251 + $0x54] sm:$0xf]
      %v298 = vld [vmem:[%s251 + $0x58] sm:$0xf]
      %v299 = vld [vmem:[%s251 + $0x5c] sm:$0xf]
      %v300 = vld [vmem:[%s251 + $0x60] sm:$0xf]
      %v301 = vld [vmem:[%s251 + $0x64] sm:$0xf]
      %v302 = vld [vmem:[%s251 + $0x68] sm:$0xf]
      %v303 = vld [vmem:[%s251 + $0x6c] sm:$0xf]
      %v304 = vld [vmem:[%s251 + $0x70] sm:$0xf]
      %v305 = vld [vmem:[%s251 + $0x74] sm:$0xf]
      %v306 = vld [vmem:[%s251 + $0x78] sm:$0xf]
      %v307 = vld [vmem:[%s251 + $0x7c] sm:$0xf]
      %v308 = vld [vmem:[%s251 + $0x80] sm:$0xf]
      %v309 = vld [vmem:[%s251 + $0x84] sm:$0xf]
      %v310 = vld [vmem:[%s251 + $0x88] sm:$0xf]
      %v311 = vld [vmem:[%s251 + $0x8c] sm:$0xf]
      %vm312 = vcmask 27648
      %313 = vst.msk [vmem:[#allocation2] sm:$0xf] %vm312, %v276
      %314 = vst.msk [vmem:[#allocation2 + $0x4] sm:$0xf] %vm312, %v277
      %315 = vst.msk [vmem:[#allocation2 + $0x8] sm:$0xf] %vm312, %v278
      %316 = vst.msk [vmem:[#allocation2 + $0xc] sm:$0xf] %vm312, %v279
      %317 = vst.msk [vmem:[#allocation2 + $0x10] sm:$0xf] %vm312, %v280
      %318 = vst.msk [vmem:[#allocation2 + $0x14] sm:$0xf] %vm312, %v281
      %319 = vst.msk [vmem:[#allocation2 + $0x18] sm:$0xf] %vm312, %v282
      %320 = vst.msk [vmem:[#allocation2 + $0x1c] sm:$0xf] %vm312, %v283
      %321 = vst.msk [vmem:[#allocation2 + $0x20] sm:$0xf] %vm312, %v284
      %322 = vst.msk [vmem:[#allocation2 + $0x24] sm:$0xf] %vm312, %v285
      %323 = vst.msk [vmem:[#allocation2 + $0x28] sm:$0xf] %vm312, %v286
      %324 = vst.msk [vmem:[#allocation2 + $0x2c] sm:$0xf] %vm312, %v287
      %325 = vst.msk [vmem:[#allocation2 + $0x30] sm:$0xf] %vm312, %v288
      %326 = vst.msk [vmem:[#allocation2 + $0x34] sm:$0xf] %vm312, %v289
      %327 = vst.msk [vmem:[#allocation2 + $0x38] sm:$0xf] %vm312, %v290
      %328 = vst.msk [vmem:[#allocation2 + $0x3c] sm:$0xf] %vm312, %v291
      %329 = vst.msk [vmem:[#allocation2 + $0x40] sm:$0xf] %vm312, %v292
      %330 = vst.msk [vmem:[#allocation2 + $0x44] sm:$0xf] %vm312, %v293
      %331 = vst.msk [vmem:[#allocation2 + $0x48] sm:$0xf] %vm312, %v294
      %332 = vst.msk [vmem:[#allocation2 + $0x4c] sm:$0xf] %vm312, %v295
      %333 = vst.msk [vmem:[#allocation2 + $0x50] sm:$0xf] %vm312, %v296
      %334 = vst.msk [vmem:[#allocation2 + $0x54] sm:$0xf] %vm312, %v297
      %335 = vst.msk [vmem:[#allocation2 + $0x58] sm:$0xf] %vm312, %v298
      %336 = vst.msk [vmem:[#allocation2 + $0x5c] sm:$0xf] %vm312, %v299
      %337 = vst.msk [vmem:[#allocation2 + $0x60] sm:$0xf] %vm312, %v300
      %338 = vst.msk [vmem:[#allocation2 + $0x64] sm:$0xf] %vm312, %v301
      %339 = vst.msk [vmem:[#allocation2 + $0x68] sm:$0xf] %vm312, %v302
      %340 = vst.msk [vmem:[#allocation2 + $0x6c] sm:$0xf] %vm312, %v303
      %341 = vst.msk [vmem:[#allocation2 + $0x70] sm:$0xf] %vm312, %v304
      %342 = vst.msk [vmem:[#allocation2 + $0x74] sm:$0xf] %vm312, %v305
      %343 = vst.msk [vmem:[#allocation2 + $0x78] sm:$0xf] %vm312, %v306
      %344 = vst.msk [vmem:[#allocation2 + $0x7c] sm:$0xf] %vm312, %v307
      %345 = vst.msk [vmem:[#allocation2 + $0x80] sm:$0xf] %vm312, %v308
      %346 = vst.msk [vmem:[#allocation2 + $0x84] sm:$0xf] %vm312, %v309
      %347 = vst.msk [vmem:[#allocation2 + $0x88] sm:$0xf] %vm312, %v310
      %348 = vst.msk [vmem:[#allocation2 + $0x8c] sm:$0xf] %vm312, %v311
      %v349 = vld [vmem:[%s262] sm:$0xf]
      %v350 = vld [vmem:[%s262 + $0x4] sm:$0xf]
      %v351 = vld [vmem:[%s262 + $0x8] sm:$0xf]
      %v352 = vld [vmem:[%s262 + $0xc] sm:$0xf]
      %v353 = vld [vmem:[%s262 + $0x10] sm:$0xf]
      %354 = vst.msk [vmem:[#allocation2 + $0x90] sm:$0xf] %vm312, %v349
      %355 = vst.msk [vmem:[#allocation2 + $0x94] sm:$0xf] %vm312, %v350
      %356 = vst.msk [vmem:[#allocation2 + $0x98] sm:$0xf] %vm312, %v351
      %357 = vst.msk [vmem:[#allocation2 + $0x9c] sm:$0xf] %vm312, %v352
      %358 = vst.msk [vmem:[#allocation2 + $0xa0] sm:$0xf] %vm312, %v353
      %v359 = vld [vmem:[#allocation2] sm:$0xf]
      %v360 = vld [vmem:[#allocation2 + $0x4] sm:$0xf]
      %v361 = vld [vmem:[#allocation2 + $0x8] sm:$0xf]
      %v362 = vld [vmem:[#allocation2 + $0xc] sm:$0xf]
      %v363 = vld [vmem:[#allocation2 + $0x10] sm:$0xf]
      %v364 = vld [vmem:[#allocation2 + $0x14] sm:$0xf]
      %v365 = vld [vmem:[#allocation2 + $0x18] sm:$0xf]
      %v366 = vld [vmem:[#allocation2 + $0x1c] sm:$0xf]
      %v367 = vld [vmem:[#allocation2 + $0x20] sm:$0xf]
      %v368 = vld [vmem:[#allocation2 + $0x24] sm:$0xf]
      %v369 = vld [vmem:[#allocation2 + $0x28] sm:$0xf]
      %v370 = vld [vmem:[#allocation2 + $0x2c] sm:$0xf]
      %v371 = vld [vmem:[#allocation2 + $0x30] sm:$0xf]
      %v372 = vld [vmem:[#allocation2 + $0x34] sm:$0xf]
      %v373 = vld [vmem:[#allocation2 + $0x38] sm:$0xf]
      %v374 = vld [vmem:[#allocation2 + $0x3c] sm:$0xf]
      %v375 = vld [vmem:[#allocation2 + $0x40] sm:$0xf]
      %v376 = vld [vmem:[#allocation2 + $0x44] sm:$0xf]
      %v377 = vld [vmem:[#allocation2 + $0x48] sm:$0xf]
      %v378 = vld [vmem:[#allocation2 + $0x4c] sm:$0xf]
      %v379 = vld [vmem:[#allocation2 + $0x50] sm:$0xf]
      %v380 = vld [vmem:[#allocation2 + $0x54] sm:$0xf]
      %v381 = vld [vmem:[#allocation2 + $0x58] sm:$0xf]
      %v382 = vld [vmem:[#allocation2 + $0x5c] sm:$0xf]
      %v383 = vld [vmem:[#allocation2 + $0x60] sm:$0xf]
      %v384 = vld [vmem:[#allocation2 + $0x64] sm:$0xf]
      %v385 = vld [vmem:[#allocation2 + $0x68] sm:$0xf]
      %v386 = vld [vmem:[#allocation2 + $0x6c] sm:$0xf]
      %v387 = vld [vmem:[#allocation2 + $0x70] sm:$0xf]
      %v388 = vld [vmem:[#allocation2 + $0x74] sm:$0xf]
      %v389 = vld [vmem:[#allocation2 + $0x78] sm:$0xf]
      %v390 = vld [vmem:[#allocation2 + $0x7c] sm:$0xf]
      %v391 = vld [vmem:[#allocation2 + $0x80] sm:$0xf]
      %v392 = vld [vmem:[#allocation2 + $0x84] sm:$0xf]
      %v393 = vld [vmem:[#allocation2 + $0x88] sm:$0xf]
      %v394 = vld [vmem:[#allocation2 + $0x8c] sm:$0xf]
      %395 = vst.msk [vmem:[#allocation3] sm:$0xf] %vm312, %v359
      %396 = vst.msk [vmem:[#allocation3 + $0x4] sm:$0xf] %vm312, %v360
      %397 = vst.msk [vmem:[#allocation3 + $0x8] sm:$0xf] %vm312, %v361
      %398 = vst.msk [vmem:[#allocation3 + $0xc] sm:$0xf] %vm312, %v362
      %399 = vst.msk [vmem:[#allocation3 + $0x10] sm:$0xf] %vm312, %v363
      %400 = vst.msk [vmem:[#allocation3 + $0x14] sm:$0xf] %vm312, %v364
      %401 = vst.msk [vmem:[#allocation3 + $0x18] sm:$0xf] %vm312, %v365
      %402 = vst.msk [vmem:[#allocation3 + $0x1c] sm:$0xf] %vm312, %v366
      %403 = vst.msk [vmem:[#allocation3 + $0x20] sm:$0xf] %vm312, %v367
      %404 = vst.msk [vmem:[#allocation3 + $0x24] sm:$0xf] %vm312, %v368
      %405 = vst.msk [vmem:[#allocation3 + $0x28] sm:$0xf] %vm312, %v369
      %406 = vst.msk [vmem:[#allocation3 + $0x2c] sm:$0xf] %vm312, %v370
      %407 = vst.msk [vmem:[#allocation3 + $0x30] sm:$0xf] %vm312, %v371
      %408 = vst.msk [vmem:[#allocation3 + $0x34] sm:$0xf] %vm312, %v372
      %409 = vst.msk [vmem:[#allocation3 + $0x38] sm:$0xf] %vm312, %v373
      %410 = vst.msk [vmem:[#allocation3 + $0x3c] sm:$0xf] %vm312, %v374
      %411 = vst.msk [vmem:[#allocation3 + $0x40] sm:$0xf] %vm312, %v375
      %412 = vst.msk [vmem:[#allocation3 + $0x44] sm:$0xf] %vm312, %v376
      %413 = vst.msk [vmem:[#allocation3 + $0x48] sm:$0xf] %vm312, %v377
      %414 = vst.msk [vmem:[#allocation3 + $0x4c] sm:$0xf] %vm312, %v378
      %415 = vst.msk [vmem:[#allocation3 + $0x50] sm:$0xf] %vm312, %v379
      %416 = vst.msk [vmem:[#allocation3 + $0x54] sm:$0xf] %vm312, %v380
      %417 = vst.msk [vmem:[#allocation3 + $0x58] sm:$0xf] %vm312, %v381
      %418 = vst.msk [vmem:[#allocation3 + $0x5c] sm:$0xf] %vm312, %v382
      %419 = vst.msk [vmem:[#allocation3 + $0x60] sm:$0xf] %vm312, %v383
      %420 = vst.msk [vmem:[#allocation3 + $0x64] sm:$0xf] %vm312, %v384
      %421 = vst.msk [vmem:[#allocation3 + $0x68] sm:$0xf] %vm312, %v385
      %422 = vst.msk [vmem:[#allocation3 + $0x6c] sm:$0xf] %vm312, %v386
      %423 = vst.msk [vmem:[#allocation3 + $0x70] sm:$0xf] %vm312, %v387
      %424 = vst.msk [vmem:[#allocation3 + $0x74] sm:$0xf] %vm312, %v388
      %425 = vst.msk [vmem:[#allocation3 + $0x78] sm:$0xf] %vm312, %v389
      %426 = vst.msk [vmem:[#allocation3 + $0x7c] sm:$0xf] %vm312, %v390
      %427 = vst.msk [vmem:[#allocation3 + $0x80] sm:$0xf] %vm312, %v391
      %428 = vst.msk [vmem:[#allocation3 + $0x84] sm:$0xf] %vm312, %v392
      %429 = vst.msk [vmem:[#allocation3 + $0x88] sm:$0xf] %vm312, %v393
      %430 = vst.msk [vmem:[#allocation3 + $0x8c] sm:$0xf] %vm312, %v394
      %v431 = vld [vmem:[#allocation2] sm:$0xf]
      %v432 = vld [vmem:[#allocation2 + $0x4] sm:$0xf]
      %v433 = vld [vmem:[#allocation2 + $0x8] sm:$0xf]
      %v434 = vld [vmem:[#allocation2 + $0xc] sm:$0xf]
      %v435 = vld [vmem:[#allocation2 + $0x10] sm:$0xf]
      %v436 = vld [vmem:[#allocation2 + $0x14] sm:$0xf]
      %v437 = vld [vmem:[#allocation2 + $0x18] sm:$0xf]
      %v438 = vld [vmem:[#allocation2 + $0x1c] sm:$0xf]
      %v439 = vld [vmem:[#allocation2 + $0x20] sm:$0xf]
      %v440 = vld [vmem:[#allocation2 + $0x24] sm:$0xf]
      %v441 = vld [vmem:[#allocation2 + $0x28] sm:$0xf]
      %v442 = vld [vmem:[#allocation2 + $0x2c] sm:$0xf]
      %v443 = vld [vmem:[#allocation2 + $0x30] sm:$0xf]
      %v444 = vld [vmem:[#allocation2 + $0x34] sm:$0xf]
      %v445 = vld [vmem:[#allocation2 + $0x38] sm:$0xf]
      %v446 = vld [vmem:[#allocation2 + $0x3c] sm:$0xf]
      %v447 = vld [vmem:[#allocation2 + $0x40] sm:$0xf]
      %v448 = vld [vmem:[#allocation2 + $0x44] sm:$0xf]
      %v449 = vld [vmem:[#allocation2 + $0x48] sm:$0xf]
      %v450 = vld [vmem:[#allocation2 + $0x4c] sm:$0xf]
      %v451 = vld [vmem:[#allocation2 + $0x50] sm:$0xf]
      %v452 = vld [vmem:[#allocation2 + $0x54] sm:$0xf]
      %v453 = vld [vmem:[#allocation2 + $0x58] sm:$0xf]
      %v454 = vld [vmem:[#allocation2 + $0x5c] sm:$0xf]
      %v455 = vld [vmem:[#allocation2 + $0x60] sm:$0xf]
      %v456 = vld [vmem:[#allocation2 + $0x64] sm:$0xf]
      %v457 = vld [vmem:[#allocation2 + $0x68] sm:$0xf]
      %v458 = vld [vmem:[#allocation2 + $0x6c] sm:$0xf]
      %v459 = vld [vmem:[#allocation2 + $0x70] sm:$0xf]
      %v460 = vld [vmem:[#allocation2 + $0x74] sm:$0xf]
      %v461 = vld [vmem:[#allocation2 + $0x78] sm:$0xf]
      %v462 = vld [vmem:[#allocation2 + $0x7c] sm:$0xf]
      %v463 = vld [vmem:[#allocation2 + $0x80] sm:$0xf]
      %v464 = vld [vmem:[#allocation2 + $0x84] sm:$0xf]
      %v465 = vld [vmem:[#allocation2 + $0x88] sm:$0xf]
      %v466 = vld [vmem:[#allocation2 + $0x8c] sm:$0xf]
      %v467 = vld [vmem:[#allocation2 + $0x90] sm:$0x1]
      %vm468 = vsmask.f32 3328
      %vm469 = vsmask.f32 7440
      %vm470 = vmor %vm468, %vm469
      %v472 = vshrl.u32 %v431, 16
      %v474 = vrot.slane %v472, 4
      %v475 = vshll.u32 %v431, 16
      %v477 = vrot.slane %v475, 5
      %v478 = vor.u32 %v474, %v477
      %v479 = vrot.slane %v478, 4
      %v481 = vshll.u32 %v432, 16
      %v483 = vrot.slane %v481, 5
      %v484 = vsel %vm470, %v479, %v483
      %v485 = vshrl.u32 %v432, 16
      %v487 = vrot.slane %v485, 4
      %v488 = vor.u32 %v487, %v483
      %v489 = vrot.slane %v488, 4
      %v491 = vshll.u32 %v433, 16
      %v493 = vrot.slane %v491, 5
      %v494 = vsel %vm470, %v489, %v493
      %v495 = vshrl.u32 %v433, 16
      %v497 = vrot.slane %v495, 4
      %v498 = vor.u32 %v497, %v493
      %v499 = vrot.slane %v498, 4
      %v501 = vshll.u32 %v434, 16
      %v503 = vrot.slane %v501, 5
      %v504 = vsel %vm470, %v499, %v503
      %v505 = vshrl.u32 %v434, 16
      %v507 = vrot.slane %v505, 4
      %v508 = vor.u32 %v507, %v503
      %v509 = vrot.slane %v508, 4
      %v511 = vshll.u32 %v435, 16
      %v513 = vrot.slane %v511, 5
      %v514 = vsel %vm470, %v509, %v513
      %v515 = vshrl.u32 %v435, 16
      %v517 = vrot.slane %v515, 4
      %v518 = vor.u32 %v517, %v513
      %v519 = vrot.slane %v518, 4
      %v521 = vshll.u32 %v436, 16
      %v523 = vrot.slane %v521, 5
      %v524 = vsel %vm470, %v519, %v523
      %v525 = vshrl.u32 %v436, 16
      %v527 = vrot.slane %v525, 4
      %v528 = vor.u32 %v527, %v523
      %v529 = vrot.slane %v528, 4
      %v531 = vshll.u32 %v437, 16
      %v533 = vrot.slane %v531, 5
      %v534 = vsel %vm470, %v529, %v533
      %v535 = vshrl.u32 %v437, 16
      %v537 = vrot.slane %v535, 4
      %v538 = vor.u32 %v537, %v533
      %v539 = vrot.slane %v538, 4
      %v541 = vshll.u32 %v438, 16
      %v543 = vrot.slane %v541, 5
      %v544 = vsel %vm470, %v539, %v543
      %v545 = vshrl.u32 %v438, 16
      %v547 = vrot.slane %v545, 4
      %v548 = vor.u32 %v547, %v543
      %v549 = vrot.slane %v548, 4
      %v551 = vshll.u32 %v439, 16
      %v553 = vrot.slane %v551, 5
      %v554 = vsel %vm470, %v549, %v553
      %v555 = vshrl.u32 %v439, 16
      %v557 = vrot.slane %v555, 4
      %v558 = vor.u32 %v557, %v553
      %v559 = vrot.slane %v558, 4
      %v561 = vshll.u32 %v440, 16
      %v563 = vrot.slane %v561, 5
      %v564 = vsel %vm470, %v559, %v563
      %v565 = vshrl.u32 %v440, 16
      %v567 = vrot.slane %v565, 4
      %v568 = vor.u32 %v567, %v563
      %v569 = vrot.slane %v568, 4
      %v571 = vshll.u32 %v441, 16
      %v573 = vrot.slane %v571, 5
      %v574 = vsel %vm470, %v569, %v573
      %v575 = vshrl.u32 %v441, 16
      %v577 = vrot.slane %v575, 4
      %v578 = vor.u32 %v577, %v573
      %v579 = vrot.slane %v578, 4
      %v581 = vshll.u32 %v442, 16
      %v583 = vrot.slane %v581, 5
      %v584 = vsel %vm470, %v579, %v583
      %v585 = vshrl.u32 %v442, 16
      %v587 = vrot.slane %v585, 4
      %v588 = vor.u32 %v587, %v583
      %v589 = vrot.slane %v588, 4
      %v591 = vshll.u32 %v443, 16
      %v593 = vrot.slane %v591, 5
      %v594 = vsel %vm470, %v589, %v593
      %v595 = vshrl.u32 %v443, 16
      %v597 = vrot.slane %v595, 4
      %v598 = vor.u32 %v597, %v593
      %v599 = vrot.slane %v598, 4
      %v601 = vshll.u32 %v444, 16
      %v603 = vrot.slane %v601, 5
      %v604 = vsel %vm470, %v599, %v603
      %v605 = vshrl.u32 %v444, 16
      %v607 = vrot.slane %v605, 4
      %v608 = vor.u32 %v607, %v603
      %v609 = vrot.slane %v608, 4
      %v611 = vshll.u32 %v445, 16
      %v613 = vrot.slane %v611, 5
      %v614 = vsel %vm470, %v609, %v613
      %v615 = vshrl.u32 %v445, 16
      %v617 = vrot.slane %v615, 4
      %v618 = vor.u32 %v617, %v613
      %v619 = vrot.slane %v618, 4
      %v621 = vshll.u32 %v446, 16
      %v623 = vrot.slane %v621, 5
      %v624 = vsel %vm470, %v619, %v623
      %v625 = vshrl.u32 %v446, 16
      %v627 = vrot.slane %v625, 4
      %v628 = vor.u32 %v627, %v623
      %v629 = vrot.slane %v628, 4
      %v631 = vshll.u32 %v447, 16
      %v633 = vrot.slane %v631, 5
      %v634 = vsel %vm470, %v629, %v633
      %v635 = vshrl.u32 %v447, 16
      %v637 = vrot.slane %v635, 4
      %v638 = vor.u32 %v637, %v633
      %v639 = vrot.slane %v638, 4
      %v641 = vshll.u32 %v448, 16
      %v643 = vrot.slane %v641, 5
      %v644 = vsel %vm470, %v639, %v643
      %v645 = vshrl.u32 %v448, 16
      %v647 = vrot.slane %v645, 4
      %v648 = vor.u32 %v647, %v643
      %v649 = vrot.slane %v648, 4
      %v651 = vshll.u32 %v449, 16
      %v653 = vrot.slane %v651, 5
      %v654 = vsel %vm470, %v649, %v653
      %v655 = vshrl.u32 %v449, 16
      %v657 = vrot.slane %v655, 4
      %v658 = vor.u32 %v657, %v653
      %v659 = vrot.slane %v658, 4
      %v661 = vshll.u32 %v450, 16
      %v663 = vrot.slane %v661, 5
      %v664 = vsel %vm470, %v659, %v663
      %v665 = vshrl.u32 %v450, 16
      %v667 = vrot.slane %v665, 4
      %v668 = vor.u32 %v667, %v663
      %v669 = vrot.slane %v668, 4
      %v671 = vshll.u32 %v451, 16
      %v673 = vrot.slane %v671, 5
      %v674 = vsel %vm470, %v669, %v673
      %v675 = vshrl.u32 %v451, 16
      %v677 = vrot.slane %v675, 4
      %v678 = vor.u32 %v677, %v673
      %v679 = vrot.slane %v678, 4
      %v681 = vshll.u32 %v452, 16
      %v683 = vrot.slane %v681, 5
      %v684 = vsel %vm470, %v679, %v683
      %v685 = vshrl.u32 %v452, 16
      %v687 = vrot.slane %v685, 4
      %v688 = vor.u32 %v687, %v683
      %v689 = vrot.slane %v688, 4
      %v691 = vshll.u32 %v453, 16
      %v693 = vrot.slane %v691, 5
      %v694 = vsel %vm470, %v689, %v693
      %v695 = vshrl.u32 %v453, 16
      %v697 = vrot.slane %v695, 4
      %v698 = vor.u32 %v697, %v693
      %v699 = vrot.slane %v698, 4
      %v701 = vshll.u32 %v454, 16
      %v703 = vrot.slane %v701, 5
      %v704 = vsel %vm470, %v699, %v703
      %v705 = vshrl.u32 %v454, 16
      %v707 = vrot.slane %v705, 4
      %v708 = vor.u32 %v707, %v703
      %v709 = vrot.slane %v708, 4
      %v711 = vshll.u32 %v455, 16
      %v713 = vrot.slane %v711, 5
      %v714 = vsel %vm470, %v709, %v713
      %v715 = vshrl.u32 %v455, 16
      %v717 = vrot.slane %v715, 4
      %v718 = vor.u32 %v717, %v713
      %v719 = vrot.slane %v718, 4
      %v721 = vshll.u32 %v456, 16
      %v723 = vrot.slane %v721, 5
      %v724 = vsel %vm470, %v719, %v723
      %v725 = vshrl.u32 %v456, 16
      %v727 = vrot.slane %v725, 4
      %v728 = vor.u32 %v727, %v723
      %v729 = vrot.slane %v728, 4
      %v731 = vshll.u32 %v457, 16
      %v733 = vrot.slane %v731, 5
      %v734 = vsel %vm470, %v729, %v733
      %v735 = vshrl.u32 %v457, 16
      %v737 = vrot.slane %v735, 4
      %v738 = vor.u32 %v737, %v733
      %v739 = vrot.slane %v738, 4
      %v741 = vshll.u32 %v458, 16
      %v743 = vrot.slane %v741, 5
      %v744 = vsel %vm470, %v739, %v743
      %v745 = vshrl.u32 %v458, 16
      %v747 = vrot.slane %v745, 4
      %v748 = vor.u32 %v747, %v743
      %v749 = vrot.slane %v748, 4
      %v751 = vshll.u32 %v459, 16
      %v753 = vrot.slane %v751, 5
      %v754 = vsel %vm470, %v749, %v753
      %v755 = vshrl.u32 %v459, 16
      %v757 = vrot.slane %v755, 4
      %v758 = vor.u32 %v757, %v753
      %v759 = vrot.slane %v758, 4
      %v761 = vshll.u32 %v460, 16
      %v763 = vrot.slane %v761, 5
      %v764 = vsel %vm470, %v759, %v763
      %v765 = vshrl.u32 %v460, 16
      %v767 = vrot.slane %v765, 4
      %v768 = vor.u32 %v767, %v763
      %v769 = vrot.slane %v768, 4
      %v771 = vshll.u32 %v461, 16
      %v773 = vrot.slane %v771, 5
      %v774 = vsel %vm470, %v769, %v773
      %v775 = vshrl.u32 %v461, 16
      %v777 = vrot.slane %v775, 4
      %v778 = vor.u32 %v777, %v773
      %v779 = vrot.slane %v778, 4
      %v781 = vshll.u32 %v462, 16
      %v783 = vrot.slane %v781, 5
      %v784 = vsel %vm470, %v779, %v783
      %v785 = vshrl.u32 %v462, 16
      %v787 = vrot.slane %v785, 4
      %v788 = vor.u32 %v787, %v783
      %v789 = vrot.slane %v788, 4
      %v791 = vshll.u32 %v463, 16
      %v793 = vrot.slane %v791, 5
      %v794 = vsel %vm470, %v789, %v793
      %v795 = vshrl.u32 %v463, 16
      %v797 = vrot.slane %v795, 4
      %v798 = vor.u32 %v797, %v793
      %v799 = vrot.slane %v798, 4
      %v801 = vshll.u32 %v464, 16
      %v803 = vrot.slane %v801, 5
      %v804 = vsel %vm470, %v799, %v803
      %v805 = vshrl.u32 %v464, 16
      %v807 = vrot.slane %v805, 4
      %v808 = vor.u32 %v807, %v803
      %v809 = vrot.slane %v808, 4
      %v811 = vshll.u32 %v465, 16
      %v813 = vrot.slane %v811, 5
      %v814 = vsel %vm470, %v809, %v813
      %v815 = vshrl.u32 %v465, 16
      %v817 = vrot.slane %v815, 4
      %v818 = vor.u32 %v817, %v813
      %v819 = vrot.slane %v818, 4
      %v821 = vshll.u32 %v466, 16
      %v823 = vrot.slane %v821, 5
      %v824 = vsel %vm470, %v819, %v823
      %v825 = vshrl.u32 %v466, 16
      %v827 = vrot.slane %v825, 4
      %v828 = vor.u32 %v827, %v823
      %v829 = vrot.slane %v828, 4
      %v831 = vshll.u32 %v467, 16
      %v833 = vrot.slane %v831, 5
      %v834 = vsel %vm470, %v829, %v833
      %835 = vrot.lane.b32.xlu0 %v484, 4
      %v836 = vpop.permute.xlu0 %835
      %837 = vrot.lane.b32.xlu0 %v494, 4
      %v838 = vpop.permute.xlu0 %837
      %839 = vrot.lane.b32.xlu0 %v504, 4
      %v840 = vpop.permute.xlu0 %839
      %841 = vrot.lane.b32.xlu0 %v514, 4
      %v842 = vpop.permute.xlu0 %841
      %843 = vrot.lane.b32.xlu0 %v524, 4
      %v844 = vpop.permute.xlu0 %843
      %845 = vrot.lane.b32.xlu0 %v534, 4
      %v846 = vpop.permute.xlu0 %845
      %847 = vrot.lane.b32.xlu0 %v544, 4
      %v848 = vpop.permute.xlu0 %847
      %849 = vrot.lane.b32.xlu0 %v554, 4
      %v850 = vpop.permute.xlu0 %849
      %851 = vrot.lane.b32.xlu0 %v564, 4
      %v852 = vpop.permute.xlu0 %851
      %853 = vrot.lane.b32.xlu0 %v574, 4
      %v854 = vpop.permute.xlu0 %853
      %855 = vrot.lane.b32.xlu0 %v584, 4
      %v856 = vpop.permute.xlu0 %855
      %857 = vrot.lane.b32.xlu0 %v594, 4
      %v858 = vpop.permute.xlu0 %857
      %859 = vrot.lane.b32.xlu0 %v604, 4
      %v860 = vpop.permute.xlu0 %859
      %861 = vrot.lane.b32.xlu0 %v614, 4
      %v862 = vpop.permute.xlu0 %861
      %863 = vrot.lane.b32.xlu0 %v624, 4
      %v864 = vpop.permute.xlu0 %863
      %865 = vrot.lane.b32.xlu0 %v634, 4
      %v866 = vpop.permute.xlu0 %865
      %867 = vrot.lane.b32.xlu0 %v644, 4
      %v868 = vpop.permute.xlu0 %867
      %869 = vrot.lane.b32.xlu0 %v654, 4
      %v870 = vpop.permute.xlu0 %869
      %871 = vrot.lane.b32.xlu0 %v664, 4
      %v872 = vpop.permute.xlu0 %871
      %873 = vrot.lane.b32.xlu0 %v674, 4
      %v874 = vpop.permute.xlu0 %873
      %875 = vrot.lane.b32.xlu0 %v684, 4
      %v876 = vpop.permute.xlu0 %875
      %877 = vrot.lane.b32.xlu0 %v694, 4
      %v878 = vpop.permute.xlu0 %877
      %879 = vrot.lane.b32.xlu0 %v704, 4
      %v880 = vpop.permute.xlu0 %879
      %881 = vrot.lane.b32.xlu0 %v714, 4
      %v882 = vpop.permute.xlu0 %881
      %883 = vrot.lane.b32.xlu0 %v724, 4
      %v884 = vpop.permute.xlu0 %883
      %885 = vrot.lane.b32.xlu0 %v734, 4
      %v886 = vpop.permute.xlu0 %885
      %887 = vrot.lane.b32.xlu0 %v744, 4
      %v888 = vpop.permute.xlu0 %887
      %889 = vrot.lane.b32.xlu0 %v754, 4
      %v890 = vpop.permute.xlu0 %889
      %891 = vrot.lane.b32.xlu0 %v764, 4
      %v892 = vpop.permute.xlu0 %891
      %893 = vrot.lane.b32.xlu0 %v774, 4
      %v894 = vpop.permute.xlu0 %893
      %895 = vrot.lane.b32.xlu0 %v784, 4
      %v896 = vpop.permute.xlu0 %895
      %897 = vrot.lane.b32.xlu0 %v794, 4
      %v898 = vpop.permute.xlu0 %897
      %899 = vrot.lane.b32.xlu0 %v804, 4
      %v900 = vpop.permute.xlu0 %899
      %901 = vrot.lane.b32.xlu0 %v814, 4
      %v902 = vpop.permute.xlu0 %901
      %903 = vrot.lane.b32.xlu0 %v824, 4
      %v904 = vpop.permute.xlu0 %903
      %905 = vrot.lane.b32.xlu0 %v834, 4
      %v906 = vpop.permute.xlu0 %905
      %vm943 = vcmask 60448
      %944 = vst.msk [vmem:[#allocation3] sm:$0xf] %vm943, %v836
      %945 = vst.msk [vmem:[#allocation3 + $0x4] sm:$0xf] %vm943, %v838
      %946 = vst.msk [vmem:[#allocation3 + $0x8] sm:$0xf] %vm943, %v840
      %947 = vst.msk [vmem:[#allocation3 + $0xc] sm:$0xf] %vm943, %v842
      %948 = vst.msk [vmem:[#allocation3 + $0x10] sm:$0xf] %vm943, %v844
      %949 = vst.msk [vmem:[#allocation3 + $0x14] sm:$0xf] %vm943, %v846
      %950 = vst.msk [vmem:[#allocation3 + $0x18] sm:$0xf] %vm943, %v848
      %951 = vst.msk [vmem:[#allocation3 + $0x1c] sm:$0xf] %vm943, %v850
      %952 = vst.msk [vmem:[#allocation3 + $0x20] sm:$0xf] %vm943, %v852
      %953 = vst.msk [vmem:[#allocation3 + $0x24] sm:$0xf] %vm943, %v854
      %954 = vst.msk [vmem:[#allocation3 + $0x28] sm:$0xf] %vm943, %v856
      %955 = vst.msk [vmem:[#allocation3 + $0x2c] sm:$0xf] %vm943, %v858
      %956 = vst.msk [vmem:[#allocation3 + $0x30] sm:$0xf] %vm943, %v860
      %957 = vst.msk [vmem:[#allocation3 + $0x34] sm:$0xf] %vm943, %v862
      %958 = vst.msk [vmem:[#allocation3 + $0x38] sm:$0xf] %vm943, %v864
      %959 = vst.msk [vmem:[#allocation3 + $0x3c] sm:$0xf] %vm943, %v866
      %960 = vst.msk [vmem:[#allocation3 + $0x40] sm:$0xf] %vm943, %v868
      %961 = vst.msk [vmem:[#allocation3 + $0x44] sm:$0xf] %vm943, %v870
      %962 = vst.msk [vmem:[#allocation3 + $0x48] sm:$0xf] %vm943, %v872
      %963 = vst.msk [vmem:[#allocation3 + $0x4c] sm:$0xf] %vm943, %v874
      %964 = vst.msk [vmem:[#allocation3 + $0x50] sm:$0xf] %vm943, %v876
      %965 = vst.msk [vmem:[#allocation3 + $0x54] sm:$0xf] %vm943, %v878
      %966 = vst.msk [vmem:[#allocation3 + $0x58] sm:$0xf] %vm943, %v880
      %967 = vst.msk [vmem:[#allocation3 + $0x5c] sm:$0xf] %vm943, %v882
      %968 = vst.msk [vmem:[#allocation3 + $0x60] sm:$0xf] %vm943, %v884
      %969 = vst.msk [vmem:[#allocation3 + $0x64] sm:$0xf] %vm943, %v886
      %970 = vst.msk [vmem:[#allocation3 + $0x68] sm:$0xf] %vm943, %v888
      %971 = vst.msk [vmem:[#allocation3 + $0x6c] sm:$0xf] %vm943, %v890
      %972 = vst.msk [vmem:[#allocation3 + $0x70] sm:$0xf] %vm943, %v892
      %973 = vst.msk [vmem:[#allocation3 + $0x74] sm:$0xf] %vm943, %v894
      %974 = vst.msk [vmem:[#allocation3 + $0x78] sm:$0xf] %vm943, %v896
      %975 = vst.msk [vmem:[#allocation3 + $0x7c] sm:$0xf] %vm943, %v898
      %976 = vst.msk [vmem:[#allocation3 + $0x80] sm:$0xf] %vm943, %v900
      %977 = vst.msk [vmem:[#allocation3 + $0x84] sm:$0xf] %vm943, %v902
      %978 = vst.msk [vmem:[#allocation3 + $0x88] sm:$0xf] %vm943, %v904
      %979 = vst.msk [vmem:[#allocation3 + $0x8c] sm:$0xf] %vm943, %v906
      %v980 = vld [vmem:[#allocation2] sm:$0xe]
      %v981 = vld [vmem:[#allocation2 + $0x4] sm:$0xf]
      %v982 = vld [vmem:[#allocation2 + $0x8] sm:$0xf]
      %v983 = vld [vmem:[#allocation2 + $0xc] sm:$0xf]
      %v984 = vld [vmem:[#allocation2 + $0x10] sm:$0xf]
      %v985 = vld [vmem:[#allocation2 + $0x14] sm:$0xf]
      %v986 = vld [vmem:[#allocation2 + $0x18] sm:$0xf]
      %v987 = vld [vmem:[#allocation2 + $0x1c] sm:$0xf]
      %v988 = vld [vmem:[#allocation2 + $0x20] sm:$0xf]
      %v989 = vld [vmem:[#allocation2 + $0x24] sm:$0xf]
      %v990 = vld [vmem:[#allocation2 + $0x28] sm:$0xf]
      %v991 = vld [vmem:[#allocation2 + $0x2c] sm:$0xf]
      %v992 = vld [vmem:[#allocation2 + $0x30] sm:$0xf]
      %v993 = vld [vmem:[#allocation2 + $0x34] sm:$0xf]
      %v994 = vld [vmem:[#allocation2 + $0x38] sm:$0xf]
      %v995 = vld [vmem:[#allocation2 + $0x3c] sm:$0xf]
      %v996 = vld [vmem:[#allocation2 + $0x40] sm:$0xf]
      %v997 = vld [vmem:[#allocation2 + $0x44] sm:$0xf]
      %v998 = vld [vmem:[#allocation2 + $0x48] sm:$0xf]
      %v999 = vld [vmem:[#allocation2 + $0x4c] sm:$0xf]
      %v1000 = vld [vmem:[#allocation2 + $0x50] sm:$0xf]
      %v1001 = vld [vmem:[#allocation2 + $0x54] sm:$0xf]
      %v1002 = vld [vmem:[#allocation2 + $0x58] sm:$0xf]
      %v1003 = vld [vmem:[#allocation2 + $0x5c] sm:$0xf]
      %v1004 = vld [vmem:[#allocation2 + $0x60] sm:$0xf]
      %v1005 = vld [vmem:[#allocation2 + $0x64] sm:$0xf]
      %v1006 = vld [vmem:[#allocation2 + $0x68] sm:$0xf]
      %v1007 = vld [vmem:[#allocation2 + $0x6c] sm:$0xf]
      %v1008 = vld [vmem:[#allocation2 + $0x70] sm:$0xf]
      %v1009 = vld [vmem:[#allocation2 + $0x74] sm:$0xf]
      %v1010 = vld [vmem:[#allocation2 + $0x78] sm:$0xf]
      %v1011 = vld [vmem:[#allocation2 + $0x7c] sm:$0xf]
      %v1012 = vld [vmem:[#allocation2 + $0x80] sm:$0xf]
      %v1013 = vld [vmem:[#allocation2 + $0x84] sm:$0xf]
      %v1014 = vld [vmem:[#allocation2 + $0x88] sm:$0xf]
      %v1015 = vld [vmem:[#allocation2 + $0x8c] sm:$0xf]
      %v1016 = vld [vmem:[#allocation2 + $0x90] sm:$0x1]
      %vm1054 = vcmask 1042432
      %vm1055 = vcmask 1046532
      %vm1056 = vmor %vm1054, %vm1055
      %v1057 = vrot.slane %v980, 5
      %v1058 = vrot.slane %v1057, 4
      %v1059 = vrot.slane %v981, 5
      %v1060 = vsel %vm1056, %v1058, %v1059
      %v1061 = vrot.slane %v1059, 4
      %v1062 = vrot.slane %v982, 5
      %v1063 = vsel %vm1056, %v1061, %v1062
      %v1064 = vrot.slane %v1062, 4
      %v1065 = vrot.slane %v983, 5
      %v1066 = vsel %vm1056, %v1064, %v1065
      %v1067 = vrot.slane %v1065, 4
      %v1068 = vrot.slane %v984, 5
      %v1069 = vsel %vm1056, %v1067, %v1068
      %v1070 = vrot.slane %v1068, 4
      %v1071 = vrot.slane %v985, 5
      %v1072 = vsel %vm1056, %v1070, %v1071
      %v1073 = vrot.slane %v1071, 4
      %v1074 = vrot.slane %v986, 5
      %v1075 = vsel %vm1056, %v1073, %v1074
      %v1076 = vrot.slane %v1074, 4
      %v1077 = vrot.slane %v987, 5
      %v1078 = vsel %vm1056, %v1076, %v1077
      %v1079 = vrot.slane %v1077, 4
      %v1080 = vrot.slane %v988, 5
      %v1081 = vsel %vm1056, %v1079, %v1080
      %v1082 = vrot.slane %v1080, 4
      %v1083 = vrot.slane %v989, 5
      %v1084 = vsel %vm1056, %v1082, %v1083
      %v1085 = vrot.slane %v1083, 4
      %v1086 = vrot.slane %v990, 5
      %v1087 = vsel %vm1056, %v1085, %v1086
      %v1088 = vrot.slane %v1086, 4
      %v1089 = vrot.slane %v991, 5
      %v1090 = vsel %vm1056, %v1088, %v1089
      %v1091 = vrot.slane %v1089, 4
      %v1092 = vrot.slane %v992, 5
      %v1093 = vsel %vm1056, %v1091, %v1092
      %v1094 = vrot.slane %v1092, 4
      %v1095 = vrot.slane %v993, 5
      %v1096 = vsel %vm1056, %v1094, %v1095
      %v1097 = vrot.slane %v1095, 4
      %v1098 = vrot.slane %v994, 5
      %v1099 = vsel %vm1056, %v1097, %v1098
      %v1100 = vrot.slane %v1098, 4
      %v1101 = vrot.slane %v995, 5
      %v1102 = vsel %vm1056, %v1100, %v1101
      %v1103 = vrot.slane %v1101, 4
      %v1104 = vrot.slane %v996, 5
      %v1105 = vsel %vm1056, %v1103, %v1104
      %v1106 = vrot.slane %v1104, 4
      %v1107 = vrot.slane %v997, 5
      %v1108 = vsel %vm1056, %v1106, %v1107
      %v1109 = vrot.slane %v1107, 4
      %v1110 = vrot.slane %v998, 5
      %v1111 = vsel %vm1056, %v1109, %v1110
      %v1112 = vrot.slane %v1110, 4
      %v1113 = vrot.slane %v999, 5
      %v1114 = vsel %vm1056, %v1112, %v1113
      %v1115 = vrot.slane %v1113, 4
      %v1116 = vrot.slane %v1000, 5
      %v1117 = vsel %vm1056, %v1115, %v1116
      %v1118 = vrot.slane %v1116, 4
      %v1119 = vrot.slane %v1001, 5
      %v1120 = vsel %vm1056, %v1118, %v1119
      %v1121 = vrot.slane %v1119, 4
      %v1122 = vrot.slane %v1002, 5
      %v1123 = vsel %vm1056, %v1121, %v1122
      %v1124 = vrot.slane %v1122, 4
      %v1125 = vrot.slane %v1003, 5
      %v1126 = vsel %vm1056, %v1124, %v1125
      %v1127 = vrot.slane %v1125, 4
      %v1128 = vrot.slane %v1004, 5
      %v1129 = vsel %vm1056, %v1127, %v1128
      %v1130 = vrot.slane %v1128, 4
      %v1131 = vrot.slane %v1005, 5
      %v1132 = vsel %vm1056, %v1130, %v1131
      %v1133 = vrot.slane %v1131, 4
      %v1134 = vrot.slane %v1006, 5
      %v1135 = vsel %vm1056, %v1133, %v1134
      %v1136 = vrot.slane %v1134, 4
      %v1137 = vrot.slane %v1007, 5
      %v1138 = vsel %vm1056, %v1136, %v1137
      %v1139 = vrot.slane %v1137, 4
      %v1140 = vrot.slane %v1008, 5
      %v1141 = vsel %vm1056, %v1139, %v1140
      %v1142 = vrot.slane %v1140, 4
      %v1143 = vrot.slane %v1009, 5
      %v1144 = vsel %vm1056, %v1142, %v1143
      %v1145 = vrot.slane %v1143, 4
      %v1146 = vrot.slane %v1010, 5
      %v1147 = vsel %vm1056, %v1145, %v1146
      %v1148 = vrot.slane %v1146, 4
      %v1149 = vrot.slane %v1011, 5
      %v1150 = vsel %vm1056, %v1148, %v1149
      %v1151 = vrot.slane %v1149, 4
      %v1152 = vrot.slane %v1012, 5
      %v1153 = vsel %vm1056, %v1151, %v1152
      %v1154 = vrot.slane %v1152, 4
      %v1155 = vrot.slane %v1013, 5
      %v1156 = vsel %vm1056, %v1154, %v1155
      %v1157 = vrot.slane %v1155, 4
      %v1158 = vrot.slane %v1014, 5
      %v1159 = vsel %vm1056, %v1157, %v1158
      %v1160 = vrot.slane %v1158, 4
      %v1161 = vrot.slane %v1015, 5
      %v1162 = vsel %vm1056, %v1160, %v1161
      %v1163 = vrot.slane %v1161, 4
      %v1164 = vrot.slane %v1016, 5
      %v1165 = vsel %vm1056, %v1163, %v1164
      %1166 = vrot.lane.b32.xlu0 %v1060, 8
      %v1167 = vpop.permute.xlu0 %1166
      %1168 = vrot.lane.b32.xlu0 %v1063, 8
      %v1169 = vpop.permute.xlu0 %1168
      %1170 = vrot.lane.b32.xlu0 %v1066, 8
      %v1171 = vpop.permute.xlu0 %1170
      %1172 = vrot.lane.b32.xlu0 %v1069, 8
      %v1173 = vpop.permute.xlu0 %1172
      %1174 = vrot.lane.b32.xlu0 %v1072, 8
      %v1175 = vpop.permute.xlu0 %1174
      %1176 = vrot.lane.b32.xlu0 %v1075, 8
      %v1177 = vpop.permute.xlu0 %1176
      %1178 = vrot.lane.b32.xlu0 %v1078, 8
      %v1179 = vpop.permute.xlu0 %1178
      %1180 = vrot.lane.b32.xlu0 %v1081, 8
      %v1181 = vpop.permute.xlu0 %1180
      %1182 = vrot.lane.b32.xlu0 %v1084, 8
      %v1183 = vpop.permute.xlu0 %1182
      %1184 = vrot.lane.b32.xlu0 %v1087, 8
      %v1185 = vpop.permute.xlu0 %1184
      %1186 = vrot.lane.b32.xlu0 %v1090, 8
      %v1187 = vpop.permute.xlu0 %1186
      %1188 = vrot.lane.b32.xlu0 %v1093, 8
      %v1189 = vpop.permute.xlu0 %1188
      %1190 = vrot.lane.b32.xlu0 %v1096, 8
      %v1191 = vpop.permute.xlu0 %1190
      %1192 = vrot.lane.b32.xlu0 %v1099, 8
      %v1193 = vpop.permute.xlu0 %1192
      %1194 = vrot.lane.b32.xlu0 %v1102, 8
      %v1195 = vpop.permute.xlu0 %1194
      %1196 = vrot.lane.b32.xlu0 %v1105, 8
      %v1197 = vpop.permute.xlu0 %1196
      %1198 = vrot.lane.b32.xlu0 %v1108, 8
      %v1199 = vpop.permute.xlu0 %1198
      %1200 = vrot.lane.b32.xlu0 %v1111, 8
      %v1201 = vpop.permute.xlu0 %1200
      %1202 = vrot.lane.b32.xlu0 %v1114, 8
      %v1203 = vpop.permute.xlu0 %1202
      %1204 = vrot.lane.b32.xlu0 %v1117, 8
      %v1205 = vpop.permute.xlu0 %1204
      %1206 = vrot.lane.b32.xlu0 %v1120, 8
      %v1207 = vpop.permute.xlu0 %1206
      %1208 = vrot.lane.b32.xlu0 %v1123, 8
      %v1209 = vpop.permute.xlu0 %1208
      %1210 = vrot.lane.b32.xlu0 %v1126, 8
      %v1211 = vpop.permute.xlu0 %1210
      %1212 = vrot.lane.b32.xlu0 %v1129, 8
      %v1213 = vpop.permute.xlu0 %1212
      %1214 = vrot.lane.b32.xlu0 %v1132, 8
      %v1215 = vpop.permute.xlu0 %1214
      %1216 = vrot.lane.b32.xlu0 %v1135, 8
      %v1217 = vpop.permute.xlu0 %1216
      %1218 = vrot.lane.b32.xlu0 %v1138, 8
      %v1219 = vpop.permute.xlu0 %1218
      %1220 = vrot.lane.b32.xlu0 %v1141, 8
      %v1221 = vpop.permute.xlu0 %1220
      %1222 = vrot.lane.b32.xlu0 %v1144, 8
      %v1223 = vpop.permute.xlu0 %1222
      %1224 = vrot.lane.b32.xlu0 %v1147, 8
      %v1225 = vpop.permute.xlu0 %1224
      %1226 = vrot.lane.b32.xlu0 %v1150, 8
      %v1227 = vpop.permute.xlu0 %1226
      %1228 = vrot.lane.b32.xlu0 %v1153, 8
      %v1229 = vpop.permute.xlu0 %1228
      %1230 = vrot.lane.b32.xlu0 %v1156, 8
      %v1231 = vpop.permute.xlu0 %1230
      %1232 = vrot.lane.b32.xlu0 %v1159, 8
      %v1233 = vpop.permute.xlu0 %1232
      %1234 = vrot.lane.b32.xlu0 %v1162, 8
      %v1235 = vpop.permute.xlu0 %1234
      %1236 = vrot.lane.b32.xlu0 %v1165, 8
      %v1237 = vpop.permute.xlu0 %1236
      %vm1274 = vcmask 93248
      %1275 = vst.msk [vmem:[#allocation3] sm:$0xf] %vm1274, %v1167
      %1276 = vst.msk [vmem:[#allocation3 + $0x4] sm:$0xf] %vm1274, %v1169
      %1277 = vst.msk [vmem:[#allocation3 + $0x8] sm:$0xf] %vm1274, %v1171
      %1278 = vst.msk [vmem:[#allocation3 + $0xc] sm:$0xf] %vm1274, %v1173
      %1279 = vst.msk [vmem:[#allocation3 + $0x10] sm:$0xf] %vm1274, %v1175
      %1280 = vst.msk [vmem:[#allocation3 + $0x14] sm:$0xf] %vm1274, %v1177
      %1281 = vst.msk [vmem:[#allocation3 + $0x18] sm:$0xf] %vm1274, %v1179
      %1282 = vst.msk [vmem:[#allocation3 + $0x1c] sm:$0xf] %vm1274, %v1181
      %1283 = vst.msk [vmem:[#allocation3 + $0x20] sm:$0xf] %vm1274, %v1183
      %1284 = vst.msk [vmem:[#allocation3 + $0x24] sm:$0xf] %vm1274, %v1185
      %1285 = vst.msk [vmem:[#allocation3 + $0x28] sm:$0xf] %vm1274, %v1187
      %1286 = vst.msk [vmem:[#allocation3 + $0x2c] sm:$0xf] %vm1274, %v1189
      %1287 = vst.msk [vmem:[#allocation3 + $0x30] sm:$0xf] %vm1274, %v1191
      %1288 = vst.msk [vmem:[#allocation3 + $0x34] sm:$0xf] %vm1274, %v1193
      %1289 = vst.msk [vmem:[#allocation3 + $0x38] sm:$0xf] %vm1274, %v1195
      %1290 = vst.msk [vmem:[#allocation3 + $0x3c] sm:$0xf] %vm1274, %v1197
      %1291 = vst.msk [vmem:[#allocation3 + $0x40] sm:$0xf] %vm1274, %v1199
      %1292 = vst.msk [vmem:[#allocation3 + $0x44] sm:$0xf] %vm1274, %v1201
      %1293 = vst.msk [vmem:[#allocation3 + $0x48] sm:$0xf] %vm1274, %v1203
      %1294 = vst.msk [vmem:[#allocation3 + $0x4c] sm:$0xf] %vm1274, %v1205
      %1295 = vst.msk [vmem:[#allocation3 + $0x50] sm:$0xf] %vm1274, %v1207
      %1296 = vst.msk [vmem:[#allocation3 + $0x54] sm:$0xf] %vm1274, %v1209
      %1297 = vst.msk [vmem:[#allocation3 + $0x58] sm:$0xf] %vm1274, %v1211
      %1298 = vst.msk [vmem:[#allocation3 + $0x5c] sm:$0xf] %vm1274, %v1213
      %1299 = vst.msk [vmem:[#allocation3 + $0x60] sm:$0xf] %vm1274, %v1215
      %1300 = vst.msk [vmem:[#allocation3 + $0x64] sm:$0xf] %vm1274, %v1217
      %1301 = vst.msk [vmem:[#allocation3 + $0x68] sm:$0xf] %vm1274, %v1219
      %1302 = vst.msk [vmem:[#allocation3 + $0x6c] sm:$0xf] %vm1274, %v1221
      %1303 = vst.msk [vmem:[#allocation3 + $0x70] sm:$0xf] %vm1274, %v1223
      %1304 = vst.msk [vmem:[#allocation3 + $0x74] sm:$0xf] %vm1274, %v1225
      %1305 = vst.msk [vmem:[#allocation3 + $0x78] sm:$0xf] %vm1274, %v1227
      %1306 = vst.msk [vmem:[#allocation3 + $0x7c] sm:$0xf] %vm1274, %v1229
      %1307 = vst.msk [vmem:[#allocation3 + $0x80] sm:$0xf] %vm1274, %v1231
      %1308 = vst.msk [vmem:[#allocation3 + $0x84] sm:$0xf] %vm1274, %v1233
      %1309 = vst.msk [vmem:[#allocation3 + $0x88] sm:$0xf] %vm1274, %v1235
      %1310 = vst.msk [vmem:[#allocation3 + $0x8c] sm:$0xf] %vm1274, %v1237
      %v1311 = vld [vmem:[#allocation2 + $0x8] sm:$0xe]
      %v1312 = vld [vmem:[#allocation2 + $0xc] sm:$0xf]
      %v1313 = vld [vmem:[#allocation2 + $0x10] sm:$0xf]
      %v1314 = vld [vmem:[#allocation2 + $0x14] sm:$0xf]
      %v1315 = vld [vmem:[#allocation2 + $0x18] sm:$0xf]
      %v1316 = vld [vmem:[#allocation2 + $0x1c] sm:$0xf]
      %v1317 = vld [vmem:[#allocation2 + $0x20] sm:$0xf]
      %v1318 = vld [vmem:[#allocation2 + $0x24] sm:$0xf]
      %v1319 = vld [vmem:[#allocation2 + $0x28] sm:$0xf]
      %v1320 = vld [vmem:[#allocation2 + $0x2c] sm:$0xf]
      %v1321 = vld [vmem:[#allocation2 + $0x30] sm:$0xf]
      %v1322 = vld [vmem:[#allocation2 + $0x34] sm:$0xf]
      %v1323 = vld [vmem:[#allocation2 + $0x38] sm:$0xf]
      %v1324 = vld [vmem:[#allocation2 + $0x3c] sm:$0xf]
      %v1325 = vld [vmem:[#allocation2 + $0x40] sm:$0xf]
      %v1326 = vld [vmem:[#allocation2 + $0x44] sm:$0xf]
      %v1327 = vld [vmem:[#allocation2 + $0x48] sm:$0xf]
      %v1328 = vld [vmem:[#allocation2 + $0x4c] sm:$0xf]
      %v1329 = vld [vmem:[#allocation2 + $0x50] sm:$0xf]
      %v1330 = vld [vmem:[#allocation2 + $0x54] sm:$0xf]
      %v1331 = vld [vmem:[#allocation2 + $0x58] sm:$0xf]
      %v1332 = vld [vmem:[#allocation2 + $0x5c] sm:$0xf]
      %v1333 = vld [vmem:[#allocation2 + $0x60] sm:$0xf]
      %v1334 = vld [vmem:[#allocation2 + $0x64] sm:$0xf]
      %v1335 = vld [vmem:[#allocation2 + $0x68] sm:$0xf]
      %v1336 = vld [vmem:[#allocation2 + $0x6c] sm:$0xf]
      %v1337 = vld [vmem:[#allocation2 + $0x70] sm:$0xf]
      %v1338 = vld [vmem:[#allocation2 + $0x74] sm:$0xf]
      %v1339 = vld [vmem:[#allocation2 + $0x78] sm:$0xf]
      %v1340 = vld [vmem:[#allocation2 + $0x7c] sm:$0xf]
      %v1341 = vld [vmem:[#allocation2 + $0x80] sm:$0xf]
      %v1342 = vld [vmem:[#allocation2 + $0x84] sm:$0xf]
      %v1343 = vld [vmem:[#allocation2 + $0x88] sm:$0xf]
      %v1344 = vld [vmem:[#allocation2 + $0x8c] sm:$0xf]
      %v1345 = vld [vmem:[#allocation2 + $0x90] sm:$0xf]
      %v1346 = vld [vmem:[#allocation2 + $0x94] sm:$0xf]
      %v1347 = vld [vmem:[#allocation2 + $0x98] sm:$0x1]
      %v1385 = vrot.slane %v1311, 5
      %v1386 = vrot.slane %v1385, 4
      %v1387 = vrot.slane %v1312, 5
      %v1388 = vsel %vm1056, %v1386, %v1387
      %v1389 = vrot.slane %v1387, 4
      %v1390 = vrot.slane %v1313, 5
      %v1391 = vsel %vm1056, %v1389, %v1390
      %v1392 = vrot.slane %v1390, 4
      %v1393 = vrot.slane %v1314, 5
      %v1394 = vsel %vm1056, %v1392, %v1393
      %v1395 = vrot.slane %v1393, 4
      %v1396 = vrot.slane %v1315, 5
      %v1397 = vsel %vm1056, %v1395, %v1396
      %v1398 = vrot.slane %v1396, 4
      %v1399 = vrot.slane %v1316, 5
      %v1400 = vsel %vm1056, %v1398, %v1399
      %v1401 = vrot.slane %v1399, 4
      %v1402 = vrot.slane %v1317, 5
      %v1403 = vsel %vm1056, %v1401, %v1402
      %v1404 = vrot.slane %v1402, 4
      %v1405 = vrot.slane %v1318, 5
      %v1406 = vsel %vm1056, %v1404, %v1405
      %v1407 = vrot.slane %v1405, 4
      %v1408 = vrot.slane %v1319, 5
      %v1409 = vsel %vm1056, %v1407, %v1408
      %v1410 = vrot.slane %v1408, 4
      %v1411 = vrot.slane %v1320, 5
      %v1412 = vsel %vm1056, %v1410, %v1411
      %v1413 = vrot.slane %v1411, 4
      %v1414 = vrot.slane %v1321, 5
      %v1415 = vsel %vm1056, %v1413, %v1414
      %v1416 = vrot.slane %v1414, 4
      %v1417 = vrot.slane %v1322, 5
      %v1418 = vsel %vm1056, %v1416, %v1417
      %v1419 = vrot.slane %v1417, 4
      %v1420 = vrot.slane %v1323, 5
      %v1421 = vsel %vm1056, %v1419, %v1420
      %v1422 = vrot.slane %v1420, 4
      %v1423 = vrot.slane %v1324, 5
      %v1424 = vsel %vm1056, %v1422, %v1423
      %v1425 = vrot.slane %v1423, 4
      %v1426 = vrot.slane %v1325, 5
      %v1427 = vsel %vm1056, %v1425, %v1426
      %v1428 = vrot.slane %v1426, 4
      %v1429 = vrot.slane %v1326, 5
      %v1430 = vsel %vm1056, %v1428, %v1429
      %v1431 = vrot.slane %v1429, 4
      %v1432 = vrot.slane %v1327, 5
      %v1433 = vsel %vm1056, %v1431, %v1432
      %v1434 = vrot.slane %v1432, 4
      %v1435 = vrot.slane %v1328, 5
      %v1436 = vsel %vm1056, %v1434, %v1435
      %v1437 = vrot.slane %v1435, 4
      %v1438 = vrot.slane %v1329, 5
      %v1439 = vsel %vm1056, %v1437, %v1438
      %v1440 = vrot.slane %v1438, 4
      %v1441 = vrot.slane %v1330, 5
      %v1442 = vsel %vm1056, %v1440, %v1441
      %v1443 = vrot.slane %v1441, 4
      %v1444 = vrot.slane %v1331, 5
      %v1445 = vsel %vm1056, %v1443, %v1444
      %v1446 = vrot.slane %v1444, 4
      %v1447 = vrot.slane %v1332, 5
      %v1448 = vsel %vm1056, %v1446, %v1447
      %v1449 = vrot.slane %v1447, 4
      %v1450 = vrot.slane %v1333, 5
      %v1451 = vsel %vm1056, %v1449, %v1450
      %v1452 = vrot.slane %v1450, 4
      %v1453 = vrot.slane %v1334, 5
      %v1454 = vsel %vm1056, %v1452, %v1453
      %v1455 = vrot.slane %v1453, 4
      %v1456 = vrot.slane %v1335, 5
      %v1457 = vsel %vm1056, %v1455, %v1456
      %v1458 = vrot.slane %v1456, 4
      %v1459 = vrot.slane %v1336, 5
      %v1460 = vsel %vm1056, %v1458, %v1459
      %v1461 = vrot.slane %v1459, 4
      %v1462 = vrot.slane %v1337, 5
      %v1463 = vsel %vm1056, %v1461, %v1462
      %v1464 = vrot.slane %v1462, 4
      %v1465 = vrot.slane %v1338, 5
      %v1466 = vsel %vm1056, %v1464, %v1465
      %v1467 = vrot.slane %v1465, 4
      %v1468 = vrot.slane %v1339, 5
      %v1469 = vsel %vm1056, %v1467, %v1468
      %v1470 = vrot.slane %v1468, 4
      %v1471 = vrot.slane %v1340, 5
      %v1472 = vsel %vm1056, %v1470, %v1471
      %v1473 = vrot.slane %v1471, 4
      %v1474 = vrot.slane %v1341, 5
      %v1475 = vsel %vm1056, %v1473, %v1474
      %v1476 = vrot.slane %v1474, 4
      %v1477 = vrot.slane %v1342, 5
      %v1478 = vsel %vm1056, %v1476, %v1477
      %v1479 = vrot.slane %v1477, 4
      %v1480 = vrot.slane %v1343, 5
      %v1481 = vsel %vm1056, %v1479, %v1480
      %v1482 = vrot.slane %v1480, 4
      %v1483 = vrot.slane %v1344, 5
      %v1484 = vsel %vm1056, %v1482, %v1483
      %v1485 = vrot.slane %v1483, 4
      %v1486 = vrot.slane %v1345, 5
      %v1487 = vsel %vm1056, %v1485, %v1486
      %v1488 = vrot.slane %v1486, 4
      %v1489 = vrot.slane %v1346, 5
      %v1490 = vsel %vm1056, %v1488, %v1489
      %v1491 = vrot.slane %v1489, 4
      %v1492 = vrot.slane %v1347, 5
      %v1493 = vsel %vm1056, %v1491, %v1492
      %1494 = vrot.lane.b32.xlu0 %v1388, 12
      %v1495 = vpop.permute.xlu0 %1494
      %1496 = vrot.lane.b32.xlu0 %v1391, 12
      %v1497 = vpop.permute.xlu0 %1496
      %1498 = vrot.lane.b32.xlu0 %v1394, 12
      %v1499 = vpop.permute.xlu0 %1498
      %1500 = vrot.lane.b32.xlu0 %v1397, 12
      %v1501 = vpop.permute.xlu0 %1500
      %1502 = vrot.lane.b32.xlu0 %v1400, 12
      %v1503 = vpop.permute.xlu0 %1502
      %1504 = vrot.lane.b32.xlu0 %v1403, 12
      %v1505 = vpop.permute.xlu0 %1504
      %1506 = vrot.lane.b32.xlu0 %v1406, 12
      %v1507 = vpop.permute.xlu0 %1506
      %1508 = vrot.lane.b32.xlu0 %v1409, 12
      %v1509 = vpop.permute.xlu0 %1508
      %1510 = vrot.lane.b32.xlu0 %v1412, 12
      %v1511 = vpop.permute.xlu0 %1510
      %1512 = vrot.lane.b32.xlu0 %v1415, 12
      %v1513 = vpop.permute.xlu0 %1512
      %1514 = vrot.lane.b32.xlu0 %v1418, 12
      %v1515 = vpop.permute.xlu0 %1514
      %1516 = vrot.lane.b32.xlu0 %v1421, 12
      %v1517 = vpop.permute.xlu0 %1516
      %1518 = vrot.lane.b32.xlu0 %v1424, 12
      %v1519 = vpop.permute.xlu0 %1518
      %1520 = vrot.lane.b32.xlu0 %v1427, 12
      %v1521 = vpop.permute.xlu0 %1520
      %1522 = vrot.lane.b32.xlu0 %v1430, 12
      %v1523 = vpop.permute.xlu0 %1522
      %1524 = vrot.lane.b32.xlu0 %v1433, 12
      %v1525 = vpop.permute.xlu0 %1524
      %1526 = vrot.lane.b32.xlu0 %v1436, 12
      %v1527 = vpop.permute.xlu0 %1526
      %1528 = vrot.lane.b32.xlu0 %v1439, 12
      %v1529 = vpop.permute.xlu0 %1528
      %1530 = vrot.lane.b32.xlu0 %v1442, 12
      %v1531 = vpop.permute.xlu0 %1530
      %1532 = vrot.lane.b32.xlu0 %v1445, 12
      %v1533 = vpop.permute.xlu0 %1532
      %1534 = vrot.lane.b32.xlu0 %v1448, 12
      %v1535 = vpop.permute.xlu0 %1534
      %1536 = vrot.lane.b32.xlu0 %v1451, 12
      %v1537 = vpop.permute.xlu0 %1536
      %1538 = vrot.lane.b32.xlu0 %v1454, 12
      %v1539 = vpop.permute.xlu0 %1538
      %1540 = vrot.lane.b32.xlu0 %v1457, 12
      %v1541 = vpop.permute.xlu0 %1540
      %1542 = vrot.lane.b32.xlu0 %v1460, 12
      %v1543 = vpop.permute.xlu0 %1542
      %1544 = vrot.lane.b32.xlu0 %v1463, 12
      %v1545 = vpop.permute.xlu0 %1544
      %1546 = vrot.lane.b32.xlu0 %v1466, 12
      %v1547 = vpop.permute.xlu0 %1546
      %1548 = vrot.lane.b32.xlu0 %v1469, 12
      %v1549 = vpop.permute.xlu0 %1548
      %1550 = vrot.lane.b32.xlu0 %v1472, 12
      %v1551 = vpop.permute.xlu0 %1550
      %1552 = vrot.lane.b32.xlu0 %v1475, 12
      %v1553 = vpop.permute.xlu0 %1552
      %1554 = vrot.lane.b32.xlu0 %v1478, 12
      %v1555 = vpop.permute.xlu0 %1554
      %1556 = vrot.lane.b32.xlu0 %v1481, 12
      %v1557 = vpop.permute.xlu0 %1556
      %1558 = vrot.lane.b32.xlu0 %v1484, 12
      %v1559 = vpop.permute.xlu0 %1558
      %1560 = vrot.lane.b32.xlu0 %v1487, 12
      %v1561 = vpop.permute.xlu0 %1560
      %1562 = vrot.lane.b32.xlu0 %v1490, 12
      %v1563 = vpop.permute.xlu0 %1562
      %1564 = vrot.lane.b32.xlu0 %v1493, 12
      %v1565 = vpop.permute.xlu0 %1564
      %vm1602 = vcmask 126048
      %1603 = vst.msk [vmem:[#allocation3] sm:$0xf] %vm1602, %v1495
      %1604 = vst.msk [vmem:[#allocation3 + $0x4] sm:$0xf] %vm1602, %v1497
      %1605 = vst.msk [vmem:[#allocation3 + $0x8] sm:$0xf] %vm1602, %v1499
      %1606 = vst.msk [vmem:[#allocation3 + $0xc] sm:$0xf] %vm1602, %v1501
      %1607 = vst.msk [vmem:[#allocation3 + $0x10] sm:$0xf] %vm1602, %v1503
      %1608 = vst.msk [vmem:[#allocation3 + $0x14] sm:$0xf] %vm1602, %v1505
      %1609 = vst.msk [vmem:[#allocation3 + $0x18] sm:$0xf] %vm1602, %v1507
      %1610 = vst.msk [vmem:[#allocation3 + $0x1c] sm:$0xf] %vm1602, %v1509
      %1611 = vst.msk [vmem:[#allocation3 + $0x20] sm:$0xf] %vm1602, %v1511
      %1612 = vst.msk [vmem:[#allocation3 + $0x24] sm:$0xf] %vm1602, %v1513
      %1613 = vst.msk [vmem:[#allocation3 + $0x28] sm:$0xf] %vm1602, %v1515
      %1614 = vst.msk [vmem:[#allocation3 + $0x2c] sm:$0xf] %vm1602, %v1517
      %1615 = vst.msk [vmem:[#allocation3 + $0x30] sm:$0xf] %vm1602, %v1519
      %1616 = vst.msk [vmem:[#allocation3 + $0x34] sm:$0xf] %vm1602, %v1521
      %1617 = vst.msk [vmem:[#allocation3 + $0x38] sm:$0xf] %vm1602, %v1523
      %1618 = vst.msk [vmem:[#allocation3 + $0x3c] sm:$0xf] %vm1602, %v1525
      %1619 = vst.msk [vmem:[#allocation3 + $0x40] sm:$0xf] %vm1602, %v1527
      %1620 = vst.msk [vmem:[#allocation3 + $0x44] sm:$0xf] %vm1602, %v1529
      %1621 = vst.msk [vmem:[#allocation3 + $0x48] sm:$0xf] %vm1602, %v1531
      %1622 = vst.msk [vmem:[#allocation3 + $0x4c] sm:$0xf] %vm1602, %v1533
      %1623 = vst.msk [vmem:[#allocation3 + $0x50] sm:$0xf] %vm1602, %v1535
      %1624 = vst.msk [vmem:[#allocation3 + $0x54] sm:$0xf] %vm1602, %v1537
      %1625 = vst.msk [vmem:[#allocation3 + $0x58] sm:$0xf] %vm1602, %v1539
      %1626 = vst.msk [vmem:[#allocation3 + $0x5c] sm:$0xf] %vm1602, %v1541
      %1627 = vst.msk [vmem:[#allocation3 + $0x60] sm:$0xf] %vm1602, %v1543
      %1628 = vst.msk [vmem:[#allocation3 + $0x64] sm:$0xf] %vm1602, %v1545
      %1629 = vst.msk [vmem:[#allocation3 + $0x68] sm:$0xf] %vm1602, %v1547
      %1630 = vst.msk [vmem:[#allocation3 + $0x6c] sm:$0xf] %vm1602, %v1549
      %1631 = vst.msk [vmem:[#allocation3 + $0x70] sm:$0xf] %vm1602, %v1551
      %1632 = vst.msk [vmem:[#allocation3 + $0x74] sm:$0xf] %vm1602, %v1553
      %1633 = vst.msk [vmem:[#allocation3 + $0x78] sm:$0xf] %vm1602, %v1555
      %1634 = vst.msk [vmem:[#allocation3 + $0x7c] sm:$0xf] %vm1602, %v1557
      %1635 = vst.msk [vmem:[#allocation3 + $0x80] sm:$0xf] %vm1602, %v1559
      %1636 = vst.msk [vmem:[#allocation3 + $0x84] sm:$0xf] %vm1602, %v1561
      %1637 = vst.msk [vmem:[#allocation3 + $0x88] sm:$0xf] %vm1602, %v1563
      %1638 = vst.msk [vmem:[#allocation3 + $0x8c] sm:$0xf] %vm1602, %v1565
      %v1639 = vld [vmem:[#allocation2 + $0x8] sm:$0xe]
      %v1640 = vld [vmem:[#allocation2 + $0xc] sm:$0xf]
      %v1641 = vld [vmem:[#allocation2 + $0x10] sm:$0xf]
      %v1642 = vld [vmem:[#allocation2 + $0x14] sm:$0xf]
      %v1643 = vld [vmem:[#allocation2 + $0x18] sm:$0xf]
      %v1644 = vld [vmem:[#allocation2 + $0x1c] sm:$0xf]
      %v1645 = vld [vmem:[#allocation2 + $0x20] sm:$0xf]
      %v1646 = vld [vmem:[#allocation2 + $0x24] sm:$0xf]
      %v1647 = vld [vmem:[#allocation2 + $0x28] sm:$0xf]
      %v1648 = vld [vmem:[#allocation2 + $0x2c] sm:$0xf]
      %v1649 = vld [vmem:[#allocation2 + $0x30] sm:$0xf]
      %v1650 = vld [vmem:[#allocation2 + $0x34] sm:$0xf]
      %v1651 = vld [vmem:[#allocation2 + $0x38] sm:$0xf]
      %v1652 = vld [vmem:[#allocation2 + $0x3c] sm:$0xf]
      %v1653 = vld [vmem:[#allocation2 + $0x40] sm:$0xf]
      %v1654 = vld [vmem:[#allocation2 + $0x44] sm:$0xf]
      %v1655 = vld [vmem:[#allocation2 + $0x48] sm:$0xf]
      %v1656 = vld [vmem:[#allocation2 + $0x4c] sm:$0xf]
      %v1657 = vld [vmem:[#allocation2 + $0x50] sm:$0xf]
      %v1658 = vld [vmem:[#allocation2 + $0x54] sm:$0xf]
      %v1659 = vld [vmem:[#allocation2 + $0x58] sm:$0xf]
      %v1660 = vld [vmem:[#allocation2 + $0x5c] sm:$0xf]
      %v1661 = vld [vmem:[#allocation2 + $0x60] sm:$0xf]
      %v1662 = vld [vmem:[#allocation2 + $0x64] sm:$0xf]
      %v1663 = vld [vmem:[#allocation2 + $0x68] sm:$0xf]
      %v1664 = vld [vmem:[#allocation2 + $0x6c] sm:$0xf]
      %v1665 = vld [vmem:[#allocation2 + $0x70] sm:$0xf]
      %v1666 = vld [vmem:[#allocation2 + $0x74] sm:$0xf]
      %v1667 = vld [vmem:[#allocation2 + $0x78] sm:$0xf]
      %v1668 = vld [vmem:[#allocation2 + $0x7c] sm:$0xf]
      %v1669 = vld [vmem:[#allocation2 + $0x80] sm:$0xf]
      %v1670 = vld [vmem:[#allocation2 + $0x84] sm:$0xf]
      %v1671 = vld [vmem:[#allocation2 + $0x88] sm:$0xf]
      %v1672 = vld [vmem:[#allocation2 + $0x8c] sm:$0xf]
      %v1673 = vld [vmem:[#allocation2 + $0x90] sm:$0xf]
      %v1674 = vld [vmem:[#allocation2 + $0x94] sm:$0xf]
      %v1675 = vld [vmem:[#allocation2 + $0x98] sm:$0x3]
      %vm1676 = vsmask.f32 2304
      %vm1677 = vsmask.f32 6416
      %vm1678 = vmor %vm1676, %vm1677
      %v1680 = vshrl.u32 %v1639, 16
      %v1682 = vrot.slane %v1680, 5
      %v1683 = vshll.u32 %v1639, 16
      %v1685 = vrot.slane %v1683, 6
      %v1686 = vor.u32 %v1682, %v1685
      %v1687 = vrot.slane %v1686, 4
      %v1689 = vshrl.u32 %v1640, 16
      %v1691 = vrot.slane %v1689, 5
      %v1692 = vshll.u32 %v1640, 16
      %v1694 = vrot.slane %v1692, 6
      %v1695 = vor.u32 %v1691, %v1694
      %v1696 = vsel %vm1678, %v1687, %v1695
      %v1697 = vrot.slane %v1695, 4
      %v1699 = vshrl.u32 %v1641, 16
      %v1701 = vrot.slane %v1699, 5
      %v1702 = vshll.u32 %v1641, 16
      %v1704 = vrot.slane %v1702, 6
      %v1705 = vor.u32 %v1701, %v1704
      %v1706 = vsel %vm1678, %v1697, %v1705
      %v1707 = vrot.slane %v1705, 4
      %v1709 = vshrl.u32 %v1642, 16
      %v1711 = vrot.slane %v1709, 5
      %v1712 = vshll.u32 %v1642, 16
      %v1714 = vrot.slane %v1712, 6
      %v1715 = vor.u32 %v1711, %v1714
      %v1716 = vsel %vm1678, %v1707, %v1715
      %v1717 = vrot.slane %v1715, 4
      %v1719 = vshrl.u32 %v1643, 16
      %v1721 = vrot.slane %v1719, 5
      %v1722 = vshll.u32 %v1643, 16
      %v1724 = vrot.slane %v1722, 6
      %v1725 = vor.u32 %v1721, %v1724
      %v1726 = vsel %vm1678, %v1717, %v1725
      %v1727 = vrot.slane %v1725, 4
      %v1729 = vshrl.u32 %v1644, 16
      %v1731 = vrot.slane %v1729, 5
      %v1732 = vshll.u32 %v1644, 16
      %v1734 = vrot.slane %v1732, 6
      %v1735 = vor.u32 %v1731, %v1734
      %v1736 = vsel %vm1678, %v1727, %v1735
      %v1737 = vrot.slane %v1735, 4
      %v1739 = vshrl.u32 %v1645, 16
      %v1741 = vrot.slane %v1739, 5
      %v1742 = vshll.u32 %v1645, 16
      %v1744 = vrot.slane %v1742, 6
      %v1745 = vor.u32 %v1741, %v1744
      %v1746 = vsel %vm1678, %v1737, %v1745
      %v1747 = vrot.slane %v1745, 4
      %v1749 = vshrl.u32 %v1646, 16
      %v1751 = vrot.slane %v1749, 5
      %v1752 = vshll.u32 %v1646, 16
      %v1754 = vrot.slane %v1752, 6
      %v1755 = vor.u32 %v1751, %v1754
      %v1756 = vsel %vm1678, %v1747, %v1755
      %v1757 = vrot.slane %v1755, 4
      %v1759 = vshrl.u32 %v1647, 16
      %v1761 = vrot.slane %v1759, 5
      %v1762 = vshll.u32 %v1647, 16
      %v1764 = vrot.slane %v1762, 6
      %v1765 = vor.u32 %v1761, %v1764
      %v1766 = vsel %vm1678, %v1757, %v1765
      %v1767 = vrot.slane %v1765, 4
      %v1769 = vshrl.u32 %v1648, 16
      %v1771 = vrot.slane %v1769, 5
      %v1772 = vshll.u32 %v1648, 16
      %v1774 = vrot.slane %v1772, 6
      %v1775 = vor.u32 %v1771, %v1774
      %v1776 = vsel %vm1678, %v1767, %v1775
      %v1777 = vrot.slane %v1775, 4
      %v1779 = vshrl.u32 %v1649, 16
      %v1781 = vrot.slane %v1779, 5
      %v1782 = vshll.u32 %v1649, 16
      %v1784 = vrot.slane %v1782, 6
      %v1785 = vor.u32 %v1781, %v1784
      %v1786 = vsel %vm1678, %v1777, %v1785
      %v1787 = vrot.slane %v1785, 4
      %v1789 = vshrl.u32 %v1650, 16
      %v1791 = vrot.slane %v1789, 5
      %v1792 = vshll.u32 %v1650, 16
      %v1794 = vrot.slane %v1792, 6
      %v1795 = vor.u32 %v1791, %v1794
      %v1796 = vsel %vm1678, %v1787, %v1795
      %v1797 = vrot.slane %v1795, 4
      %v1799 = vshrl.u32 %v1651, 16
      %v1801 = vrot.slane %v1799, 5
      %v1802 = vshll.u32 %v1651, 16
      %v1804 = vrot.slane %v1802, 6
      %v1805 = vor.u32 %v1801, %v1804
      %v1806 = vsel %vm1678, %v1797, %v1805
      %v1807 = vrot.slane %v1805, 4
      %v1809 = vshrl.u32 %v1652, 16
      %v1811 = vrot.slane %v1809, 5
      %v1812 = vshll.u32 %v1652, 16
      %v1814 = vrot.slane %v1812, 6
      %v1815 = vor.u32 %v1811, %v1814
      %v1816 = vsel %vm1678, %v1807, %v1815
      %v1817 = vrot.slane %v1815, 4
      %v1819 = vshrl.u32 %v1653, 16
      %v1821 = vrot.slane %v1819, 5
      %v1822 = vshll.u32 %v1653, 16
      %v1824 = vrot.slane %v1822, 6
      %v1825 = vor.u32 %v1821, %v1824
      %v1826 = vsel %vm1678, %v1817, %v1825
      %v1827 = vrot.slane %v1825, 4
      %v1829 = vshrl.u32 %v1654, 16
      %v1831 = vrot.slane %v1829, 5
      %v1832 = vshll.u32 %v1654, 16
      %v1834 = vrot.slane %v1832, 6
      %v1835 = vor.u32 %v1831, %v1834
      %v1836 = vsel %vm1678, %v1827, %v1835
      %v1837 = vrot.slane %v1835, 4
      %v1839 = vshrl.u32 %v1655, 16
      %v1841 = vrot.slane %v1839, 5
      %v1842 = vshll.u32 %v1655, 16
      %v1844 = vrot.slane %v1842, 6
      %v1845 = vor.u32 %v1841, %v1844
      %v1846 = vsel %vm1678, %v1837, %v1845
      %v1847 = vrot.slane %v1845, 4
      %v1849 = vshrl.u32 %v1656, 16
      %v1851 = vrot.slane %v1849, 5
      %v1852 = vshll.u32 %v1656, 16
      %v1854 = vrot.slane %v1852, 6
      %v1855 = vor.u32 %v1851, %v1854
      %v1856 = vsel %vm1678, %v1847, %v1855
      %v1857 = vrot.slane %v1855, 4
      %v1859 = vshrl.u32 %v1657, 16
      %v1861 = vrot.slane %v1859, 5
      %v1862 = vshll.u32 %v1657, 16
      %v1864 = vrot.slane %v1862, 6
      %v1865 = vor.u32 %v1861, %v1864
      %v1866 = vsel %vm1678, %v1857, %v1865
      %v1867 = vrot.slane %v1865, 4
      %v1869 = vshrl.u32 %v1658, 16
      %v1871 = vrot.slane %v1869, 5
      %v1872 = vshll.u32 %v1658, 16
      %v1874 = vrot.slane %v1872, 6
      %v1875 = vor.u32 %v1871, %v1874
      %v1876 = vsel %vm1678, %v1867, %v1875
      %v1877 = vrot.slane %v1875, 4
      %v1879 = vshrl.u32 %v1659, 16
      %v1881 = vrot.slane %v1879, 5
      %v1882 = vshll.u32 %v1659, 16
      %v1884 = vrot.slane %v1882, 6
      %v1885 = vor.u32 %v1881, %v1884
      %v1886 = vsel %vm1678, %v1877, %v1885
      %v1887 = vrot.slane %v1885, 4
      %v1889 = vshrl.u32 %v1660, 16
      %v1891 = vrot.slane %v1889, 5
      %v1892 = vshll.u32 %v1660, 16
      %v1894 = vrot.slane %v1892, 6
      %v1895 = vor.u32 %v1891, %v1894
      %v1896 = vsel %vm1678, %v1887, %v1895
      %v1897 = vrot.slane %v1895, 4
      %v1899 = vshrl.u32 %v1661, 16
      %v1901 = vrot.slane %v1899, 5
      %v1902 = vshll.u32 %v1661, 16
      %v1904 = vrot.slane %v1902, 6
      %v1905 = vor.u32 %v1901, %v1904
      %v1906 = vsel %vm1678, %v1897, %v1905
      %v1907 = vrot.slane %v1905, 4
      %v1909 = vshrl.u32 %v1662, 16
      %v1911 = vrot.slane %v1909, 5
      %v1912 = vshll.u32 %v1662, 16
      %v1914 = vrot.slane %v1912, 6
      %v1915 = vor.u32 %v1911, %v1914
      %v1916 = vsel %vm1678, %v1907, %v1915
      %v1917 = vrot.slane %v1915, 4
      %v1919 = vshrl.u32 %v1663, 16
      %v1921 = vrot.slane %v1919, 5
      %v1922 = vshll.u32 %v1663, 16
      %v1924 = vrot.slane %v1922, 6
      %v1925 = vor.u32 %v1921, %v1924
      %v1926 = vsel %vm1678, %v1917, %v1925
      %v1927 = vrot.slane %v1925, 4
      %v1929 = vshrl.u32 %v1664, 16
      %v1931 = vrot.slane %v1929, 5
      %v1932 = vshll.u32 %v1664, 16
      %v1934 = vrot.slane %v1932, 6
      %v1935 = vor.u32 %v1931, %v1934
      %v1936 = vsel %vm1678, %v1927, %v1935
      %v1937 = vrot.slane %v1935, 4
      %v1939 = vshrl.u32 %v1665, 16
      %v1941 = vrot.slane %v1939, 5
      %v1942 = vshll.u32 %v1665, 16
      %v1944 = vrot.slane %v1942, 6
      %v1945 = vor.u32 %v1941, %v1944
      %v1946 = vsel %vm1678, %v1937, %v1945
      %v1947 = vrot.slane %v1945, 4
      %v1949 = vshrl.u32 %v1666, 16
      %v1951 = vrot.slane %v1949, 5
      %v1952 = vshll.u32 %v1666, 16
      %v1954 = vrot.slane %v1952, 6
      %v1955 = vor.u32 %v1951, %v1954
      %v1956 = vsel %vm1678, %v1947, %v1955
      %v1957 = vrot.slane %v1955, 4
      %v1959 = vshrl.u32 %v1667, 16
      %v1961 = vrot.slane %v1959, 5
      %v1962 = vshll.u32 %v1667, 16
      %v1964 = vrot.slane %v1962, 6
      %v1965 = vor.u32 %v1961, %v1964
      %v1966 = vsel %vm1678, %v1957, %v1965
      %v1967 = vrot.slane %v1965, 4
      %v1969 = vshrl.u32 %v1668, 16
      %v1971 = vrot.slane %v1969, 5
      %v1972 = vshll.u32 %v1668, 16
      %v1974 = vrot.slane %v1972, 6
      %v1975 = vor.u32 %v1971, %v1974
      %v1976 = vsel %vm1678, %v1967, %v1975
      %v1977 = vrot.slane %v1975, 4
      %v1979 = vshrl.u32 %v1669, 16
      %v1981 = vrot.slane %v1979, 5
      %v1982 = vshll.u32 %v1669, 16
      %v1984 = vrot.slane %v1982, 6
      %v1985 = vor.u32 %v1981, %v1984
      %v1986 = vsel %vm1678, %v1977, %v1985
      %v1987 = vrot.slane %v1985, 4
      %v1989 = vshrl.u32 %v1670, 16
      %v1991 = vrot.slane %v1989, 5
      %v1992 = vshll.u32 %v1670, 16
      %v1994 = vrot.slane %v1992, 6
      %v1995 = vor.u32 %v1991, %v1994
      %v1996 = vsel %vm1678, %v1987, %v1995
      %v1997 = vrot.slane %v1995, 4
      %v1999 = vshrl.u32 %v1671, 16
      %v2001 = vrot.slane %v1999, 5
      %v2002 = vshll.u32 %v1671, 16
      %v2004 = vrot.slane %v2002, 6
      %v2005 = vor.u32 %v2001, %v2004
      %v2006 = vsel %vm1678, %v1997, %v2005
      %v2007 = vrot.slane %v2005, 4
      %v2009 = vshrl.u32 %v1672, 16
      %v2011 = vrot.slane %v2009, 5
      %v2012 = vshll.u32 %v1672, 16
      %v2014 = vrot.slane %v2012, 6
      %v2015 = vor.u32 %v2011, %v2014
      %v2016 = vsel %vm1678, %v2007, %v2015
      %v2017 = vrot.slane %v2015, 4
      %v2019 = vshrl.u32 %v1673, 16
      %v2021 = vrot.slane %v2019, 5
      %v2022 = vshll.u32 %v1673, 16
      %v2024 = vrot.slane %v2022, 6
      %v2025 = vor.u32 %v2021, %v2024
      %v2026 = vsel %vm1678, %v2017, %v2025
      %v2027 = vrot.slane %v2025, 4
      %v2029 = vshrl.u32 %v1674, 16
      %v2031 = vrot.slane %v2029, 5
      %v2032 = vshll.u32 %v1674, 16
      %v2034 = vrot.slane %v2032, 6
      %v2035 = vor.u32 %v2031, %v2034
      %v2036 = vsel %vm1678, %v2027, %v2035
      %v2037 = vrot.slane %v2035, 4
      %v2039 = vshrl.u32 %v1675, 16
      %v2041 = vrot.slane %v2039, 5
      %v2042 = vshll.u32 %v1675, 16
      %v2044 = vrot.slane %v2042, 6
      %v2045 = vor.u32 %v2041, %v2044
      %v2046 = vsel %vm1678, %v2037, %v2045
      %2047 = vrot.lane.b32.xlu0 %v1696, 16
      %v2048 = vpop.permute.xlu0 %2047
      %2049 = vrot.lane.b32.xlu0 %v1706, 16
      %v2050 = vpop.permute.xlu0 %2049
      %2051 = vrot.lane.b32.xlu0 %v1716, 16
      %v2052 = vpop.permute.xlu0 %2051
      %2053 = vrot.lane.b32.xlu0 %v1726, 16
      %v2054 = vpop.permute.xlu0 %2053
      %2055 = vrot.lane.b32.xlu0 %v1736, 16
      %v2056 = vpop.permute.xlu0 %2055
      %2057 = vrot.lane.b32.xlu0 %v1746, 16
      %v2058 = vpop.permute.xlu0 %2057
      %2059 = vrot.lane.b32.xlu0 %v1756, 16
      %v2060 = vpop.permute.xlu0 %2059
      %2061 = vrot.lane.b32.xlu0 %v1766, 16
      %v2062 = vpop.permute.xlu0 %2061
      %2063 = vrot.lane.b32.xlu0 %v1776, 16
      %v2064 = vpop.permute.xlu0 %2063
      %2065 = vrot.lane.b32.xlu0 %v1786, 16
      %v2066 = vpop.permute.xlu0 %2065
      %2067 = vrot.lane.b32.xlu0 %v1796, 16
      %v2068 = vpop.permute.xlu0 %2067
      %2069 = vrot.lane.b32.xlu0 %v1806, 16
      %v2070 = vpop.permute.xlu0 %2069
      %2071 = vrot.lane.b32.xlu0 %v1816, 16
      %v2072 = vpop.permute.xlu0 %2071
      %2073 = vrot.lane.b32.xlu0 %v1826, 16
      %v2074 = vpop.permute.xlu0 %2073
      %2075 = vrot.lane.b32.xlu0 %v1836, 16
      %v2076 = vpop.permute.xlu0 %2075
      %2077 = vrot.lane.b32.xlu0 %v1846, 16
      %v2078 = vpop.permute.xlu0 %2077
      %2079 = vrot.lane.b32.xlu0 %v1856, 16
      %v2080 = vpop.permute.xlu0 %2079
      %2081 = vrot.lane.b32.xlu0 %v1866, 16
      %v2082 = vpop.permute.xlu0 %2081
      %2083 = vrot.lane.b32.xlu0 %v1876, 16
      %v2084 = vpop.permute.xlu0 %2083
      %2085 = vrot.lane.b32.xlu0 %v1886, 16
      %v2086 = vpop.permute.xlu0 %2085
      %2087 = vrot.lane.b32.xlu0 %v1896, 16
      %v2088 = vpop.permute.xlu0 %2087
      %2089 = vrot.lane.b32.xlu0 %v1906, 16
      %v2090 = vpop.permute.xlu0 %2089
      %2091 = vrot.lane.b32.xlu0 %v1916, 16
      %v2092 = vpop.permute.xlu0 %2091
      %2093 = vrot.lane.b32.xlu0 %v1926, 16
      %v2094 = vpop.permute.xlu0 %2093
      %2095 = vrot.lane.b32.xlu0 %v1936, 16
      %v2096 = vpop.permute.xlu0 %2095
      %2097 = vrot.lane.b32.xlu0 %v1946, 16
      %v2098 = vpop.permute.xlu0 %2097
      %2099 = vrot.lane.b32.xlu0 %v1956, 16
      %v2100 = vpop.permute.xlu0 %2099
      %2101 = vrot.lane.b32.xlu0 %v1966, 16
      %v2102 = vpop.permute.xlu0 %2101
      %2103 = vrot.lane.b32.xlu0 %v1976, 16
      %v2104 = vpop.permute.xlu0 %2103
      %2105 = vrot.lane.b32.xlu0 %v1986, 16
      %v2106 = vpop.permute.xlu0 %2105
      %2107 = vrot.lane.b32.xlu0 %v1996, 16
      %v2108 = vpop.permute.xlu0 %2107
      %2109 = vrot.lane.b32.xlu0 %v2006, 16
      %v2110 = vpop.permute.xlu0 %2109
      %2111 = vrot.lane.b32.xlu0 %v2016, 16
      %v2112 = vpop.permute.xlu0 %2111
      %2113 = vrot.lane.b32.xlu0 %v2026, 16
      %v2114 = vpop.permute.xlu0 %2113
      %2115 = vrot.lane.b32.xlu0 %v2036, 16
      %v2116 = vpop.permute.xlu0 %2115
      %2117 = vrot.lane.b32.xlu0 %v2046, 16
      %v2118 = vpop.permute.xlu0 %2117
      %vm2155 = vcmask 158848
      %2156 = vst.msk [vmem:[#allocation3] sm:$0xf] %vm2155, %v2048
      %2157 = vst.msk [vmem:[#allocation3 + $0x4] sm:$0xf] %vm2155, %v2050
      %2158 = vst.msk [vmem:[#allocation3 + $0x8] sm:$0xf] %vm2155, %v2052
      %2159 = vst.msk [vmem:[#allocation3 + $0xc] sm:$0xf] %vm2155, %v2054
      %2160 = vst.msk [vmem:[#allocation3 + $0x10] sm:$0xf] %vm2155, %v2056
      %2161 = vst.msk [vmem:[#allocation3 + $0x14] sm:$0xf] %vm2155, %v2058
      %2162 = vst.msk [vmem:[#allocation3 + $0x18] sm:$0xf] %vm2155, %v2060
      %2163 = vst.msk [vmem:[#allocation3 + $0x1c] sm:$0xf] %vm2155, %v2062
      %2164 = vst.msk [vmem:[#allocation3 + $0x20] sm:$0xf] %vm2155, %v2064
      %2165 = vst.msk [vmem:[#allocation3 + $0x24] sm:$0xf] %vm2155, %v2066
      %2166 = vst.msk [vmem:[#allocation3 + $0x28] sm:$0xf] %vm2155, %v2068
      %2167 = vst.msk [vmem:[#allocation3 + $0x2c] sm:$0xf] %vm2155, %v2070
      %2168 = vst.msk [vmem:[#allocation3 + $0x30] sm:$0xf] %vm2155, %v2072
      %2169 = vst.msk [vmem:[#allocation3 + $0x34] sm:$0xf] %vm2155, %v2074
      %2170 = vst.msk [vmem:[#allocation3 + $0x38] sm:$0xf] %vm2155, %v2076
      %2171 = vst.msk [vmem:[#allocation3 + $0x3c] sm:$0xf] %vm2155, %v2078
      %2172 = vst.msk [vmem:[#allocation3 + $0x40] sm:$0xf] %vm2155, %v2080
      %2173 = vst.msk [vmem:[#allocation3 + $0x44] sm:$0xf] %vm2155, %v2082
      %2174 = vst.msk [vmem:[#allocation3 + $0x48] sm:$0xf] %vm2155, %v2084
      %2175 = vst.msk [vmem:[#allocation3 + $0x4c] sm:$0xf] %vm2155, %v2086
      %2176 = vst.msk [vmem:[#allocation3 + $0x50] sm:$0xf] %vm2155, %v2088
      %2177 = vst.msk [vmem:[#allocation3 + $0x54] sm:$0xf] %vm2155, %v2090
      %2178 = vst.msk [vmem:[#allocation3 + $0x58] sm:$0xf] %vm2155, %v2092
      %2179 = vst.msk [vmem:[#allocation3 + $0x5c] sm:$0xf] %vm2155, %v2094
      %2180 = vst.msk [vmem:[#allocation3 + $0x60] sm:$0xf] %vm2155, %v2096
      %2181 = vst.msk [vmem:[#allocation3 + $0x64] sm:$0xf] %vm2155, %v2098
      %2182 = vst.msk [vmem:[#allocation3 + $0x68] sm:$0xf] %vm2155, %v2100
      %2183 = vst.msk [vmem:[#allocation3 + $0x6c] sm:$0xf] %vm2155, %v2102
      %2184 = vst.msk [vmem:[#allocation3 + $0x70] sm:$0xf] %vm2155, %v2104
      %2185 = vst.msk [vmem:[#allocation3 + $0x74] sm:$0xf] %vm2155, %v2106
      %2186 = vst.msk [vmem:[#allocation3 + $0x78] sm:$0xf] %vm2155, %v2108
      %2187 = vst.msk [vmem:[#allocation3 + $0x7c] sm:$0xf] %vm2155, %v2110
      %2188 = vst.msk [vmem:[#allocation3 + $0x80] sm:$0xf] %vm2155, %v2112
      %2189 = vst.msk [vmem:[#allocation3 + $0x84] sm:$0xf] %vm2155, %v2114
      %2190 = vst.msk [vmem:[#allocation3 + $0x88] sm:$0xf] %vm2155, %v2116
      %2191 = vst.msk [vmem:[#allocation3 + $0x8c] sm:$0xf] %vm2155, %v2118
      %v2192 = vld [vmem:[#allocation2 + $0x8] sm:$0xc]
      %v2193 = vld [vmem:[#allocation2 + $0xc] sm:$0xf]
      %v2194 = vld [vmem:[#allocation2 + $0x10] sm:$0xf]
      %v2195 = vld [vmem:[#allocation2 + $0x14] sm:$0xf]
      %v2196 = vld [vmem:[#allocation2 + $0x18] sm:$0xf]
      %v2197 = vld [vmem:[#allocation2 + $0x1c] sm:$0xf]
      %v2198 = vld [vmem:[#allocation2 + $0x20] sm:$0xf]
      %v2199 = vld [vmem:[#allocation2 + $0x24] sm:$0xf]
      %v2200 = vld [vmem:[#allocation2 + $0x28] sm:$0xf]
      %v2201 = vld [vmem:[#allocation2 + $0x2c] sm:$0xf]
      %v2202 = vld [vmem:[#allocation2 + $0x30] sm:$0xf]
      %v2203 = vld [vmem:[#allocation2 + $0x34] sm:$0xf]
      %v2204 = vld [vmem:[#allocation2 + $0x38] sm:$0xf]
      %v2205 = vld [vmem:[#allocation2 + $0x3c] sm:$0xf]
      %v2206 = vld [vmem:[#allocation2 + $0x40] sm:$0xf]
      %v2207 = vld [vmem:[#allocation2 + $0x44] sm:$0xf]
      %v2208 = vld [vmem:[#allocation2 + $0x48] sm:$0xf]
      %v2209 = vld [vmem:[#allocation2 + $0x4c] sm:$0xf]
      %v2210 = vld [vmem:[#allocation2 + $0x50] sm:$0xf]
      %v2211 = vld [vmem:[#allocation2 + $0x54] sm:$0xf]
      %v2212 = vld [vmem:[#allocation2 + $0x58] sm:$0xf]
      %v2213 = vld [vmem:[#allocation2 + $0x5c] sm:$0xf]
      %v2214 = vld [vmem:[#allocation2 + $0x60] sm:$0xf]
      %v2215 = vld [vmem:[#allocation2 + $0x64] sm:$0xf]
      %v2216 = vld [vmem:[#allocation2 + $0x68] sm:$0xf]
      %v2217 = vld [vmem:[#allocation2 + $0x6c] sm:$0xf]
      %v2218 = vld [vmem:[#allocation2 + $0x70] sm:$0xf]
      %v2219 = vld [vmem:[#allocation2 + $0x74] sm:$0xf]
      %v2220 = vld [vmem:[#allocation2 + $0x78] sm:$0xf]
      %v2221 = vld [vmem:[#allocation2 + $0x7c] sm:$0xf]
      %v2222 = vld [vmem:[#allocation2 + $0x80] sm:$0xf]
      %v2223 = vld [vmem:[#allocation2 + $0x84] sm:$0xf]
      %v2224 = vld [vmem:[#allocation2 + $0x88] sm:$0xf]
      %v2225 = vld [vmem:[#allocation2 + $0x8c] sm:$0xf]
      %v2226 = vld [vmem:[#allocation2 + $0x90] sm:$0xf]
      %v2227 = vld [vmem:[#allocation2 + $0x94] sm:$0xf]
      %v2228 = vld [vmem:[#allocation2 + $0x98] sm:$0x3]
      %vm2266 = vcmask 1041408
      %vm2267 = vcmask 1045508
      %vm2268 = vmor %vm2266, %vm2267
      %v2269 = vrot.slane %v2192, 6
      %v2270 = vrot.slane %v2269, 4
      %v2271 = vrot.slane %v2193, 6
      %v2272 = vsel %vm2268, %v2270, %v2271
      %v2273 = vrot.slane %v2271, 4
      %v2274 = vrot.slane %v2194, 6
      %v2275 = vsel %vm2268, %v2273, %v2274
      %v2276 = vrot.slane %v2274, 4
      %v2277 = vrot.slane %v2195, 6
      %v2278 = vsel %vm2268, %v2276, %v2277
      %v2279 = vrot.slane %v2277, 4
      %v2280 = vrot.slane %v2196, 6
      %v2281 = vsel %vm2268, %v2279, %v2280
      %v2282 = vrot.slane %v2280, 4
      %v2283 = vrot.slane %v2197, 6
      %v2284 = vsel %vm2268, %v2282, %v2283
      %v2285 = vrot.slane %v2283, 4
      %v2286 = vrot.slane %v2198, 6
      %v2287 = vsel %vm2268, %v2285, %v2286
      %v2288 = vrot.slane %v2286, 4
      %v2289 = vrot.slane %v2199, 6
      %v2290 = vsel %vm2268, %v2288, %v2289
      %v2291 = vrot.slane %v2289, 4
      %v2292 = vrot.slane %v2200, 6
      %v2293 = vsel %vm2268, %v2291, %v2292
      %v2294 = vrot.slane %v2292, 4
      %v2295 = vrot.slane %v2201, 6
      %v2296 = vsel %vm2268, %v2294, %v2295
      %v2297 = vrot.slane %v2295, 4
      %v2298 = vrot.slane %v2202, 6
      %v2299 = vsel %vm2268, %v2297, %v2298
      %v2300 = vrot.slane %v2298, 4
      %v2301 = vrot.slane %v2203, 6
      %v2302 = vsel %vm2268, %v2300, %v2301
      %v2303 = vrot.slane %v2301, 4
      %v2304 = vrot.slane %v2204, 6
      %v2305 = vsel %vm2268, %v2303, %v2304
      %v2306 = vrot.slane %v2304, 4
      %v2307 = vrot.slane %v2205, 6
      %v2308 = vsel %vm2268, %v2306, %v2307
      %v2309 = vrot.slane %v2307, 4
      %v2310 = vrot.slane %v2206, 6
      %v2311 = vsel %vm2268, %v2309, %v2310
      %v2312 = vrot.slane %v2310, 4
      %v2313 = vrot.slane %v2207, 6
      %v2314 = vsel %vm2268, %v2312, %v2313
      %v2315 = vrot.slane %v2313, 4
      %v2316 = vrot.slane %v2208, 6
      %v2317 = vsel %vm2268, %v2315, %v2316
      %v2318 = vrot.slane %v2316, 4
      %v2319 = vrot.slane %v2209, 6
      %v2320 = vsel %vm2268, %v2318, %v2319
      %v2321 = vrot.slane %v2319, 4
      %v2322 = vrot.slane %v2210, 6
      %v2323 = vsel %vm2268, %v2321, %v2322
      %v2324 = vrot.slane %v2322, 4
      %v2325 = vrot.slane %v2211, 6
      %v2326 = vsel %vm2268, %v2324, %v2325
      %v2327 = vrot.slane %v2325, 4
      %v2328 = vrot.slane %v2212, 6
      %v2329 = vsel %vm2268, %v2327, %v2328
      %v2330 = vrot.slane %v2328, 4
      %v2331 = vrot.slane %v2213, 6
      %v2332 = vsel %vm2268, %v2330, %v2331
      %v2333 = vrot.slane %v2331, 4
      %v2334 = vrot.slane %v2214, 6
      %v2335 = vsel %vm2268, %v2333, %v2334
      %v2336 = vrot.slane %v2334, 4
      %v2337 = vrot.slane %v2215, 6
      %v2338 = vsel %vm2268, %v2336, %v2337
      %v2339 = vrot.slane %v2337, 4
      %v2340 = vrot.slane %v2216, 6
      %v2341 = vsel %vm2268, %v2339, %v2340
      %v2342 = vrot.slane %v2340, 4
      %v2343 = vrot.slane %v2217, 6
      %v2344 = vsel %vm2268, %v2342, %v2343
      %v2345 = vrot.slane %v2343, 4
      %v2346 = vrot.slane %v2218, 6
      %v2347 = vsel %vm2268, %v2345, %v2346
      %v2348 = vrot.slane %v2346, 4
      %v2349 = vrot.slane %v2219, 6
      %v2350 = vsel %vm2268, %v2348, %v2349
      %v2351 = vrot.slane %v2349, 4
      %v2352 = vrot.slane %v2220, 6
      %v2353 = vsel %vm2268, %v2351, %v2352
      %v2354 = vrot.slane %v2352, 4
      %v2355 = vrot.slane %v2221, 6
      %v2356 = vsel %vm2268, %v2354, %v2355
      %v2357 = vrot.slane %v2355, 4
      %v2358 = vrot.slane %v2222, 6
      %v2359 = vsel %vm2268, %v2357, %v2358
      %v2360 = vrot.slane %v2358, 4
      %v2361 = vrot.slane %v2223, 6
      %v2362 = vsel %vm2268, %v2360, %v2361
      %v2363 = vrot.slane %v2361, 4
      %v2364 = vrot.slane %v2224, 6
      %v2365 = vsel %vm2268, %v2363, %v2364
      %v2366 = vrot.slane %v2364, 4
      %v2367 = vrot.slane %v2225, 6
      %v2368 = vsel %vm2268, %v2366, %v2367
      %v2369 = vrot.slane %v2367, 4
      %v2370 = vrot.slane %v2226, 6
      %v2371 = vsel %vm2268, %v2369, %v2370
      %v2372 = vrot.slane %v2370, 4
      %v2373 = vrot.slane %v2227, 6
      %v2374 = vsel %vm2268, %v2372, %v2373
      %v2375 = vrot.slane %v2373, 4
      %v2376 = vrot.slane %v2228, 6
      %v2377 = vsel %vm2268, %v2375, %v2376
      %2378 = vrot.lane.b32.xlu0 %v2272, 20
      %v2379 = vpop.permute.xlu0 %2378
      %2380 = vrot.lane.b32.xlu0 %v2275, 20
      %v2381 = vpop.permute.xlu0 %2380
      %2382 = vrot.lane.b32.xlu0 %v2278, 20
      %v2383 = vpop.permute.xlu0 %2382
      %2384 = vrot.lane.b32.xlu0 %v2281, 20
      %v2385 = vpop.permute.xlu0 %2384
      %2386 = vrot.lane.b32.xlu0 %v2284, 20
      %v2387 = vpop.permute.xlu0 %2386
      %2388 = vrot.lane.b32.xlu0 %v2287, 20
      %v2389 = vpop.permute.xlu0 %2388
      %2390 = vrot.lane.b32.xlu0 %v2290, 20
      %v2391 = vpop.permute.xlu0 %2390
      %2392 = vrot.lane.b32.xlu0 %v2293, 20
      %v2393 = vpop.permute.xlu0 %2392
      %2394 = vrot.lane.b32.xlu0 %v2296, 20
      %v2395 = vpop.permute.xlu0 %2394
      %2396 = vrot.lane.b32.xlu0 %v2299, 20
      %v2397 = vpop.permute.xlu0 %2396
      %2398 = vrot.lane.b32.xlu0 %v2302, 20
      %v2399 = vpop.permute.xlu0 %2398
      %2400 = vrot.lane.b32.xlu0 %v2305, 20
      %v2401 = vpop.permute.xlu0 %2400
      %2402 = vrot.lane.b32.xlu0 %v2308, 20
      %v2403 = vpop.permute.xlu0 %2402
      %2404 = vrot.lane.b32.xlu0 %v2311, 20
      %v2405 = vpop.permute.xlu0 %2404
      %2406 = vrot.lane.b32.xlu0 %v2314, 20
      %v2407 = vpop.permute.xlu0 %2406
      %2408 = vrot.lane.b32.xlu0 %v2317, 20
      %v2409 = vpop.permute.xlu0 %2408
      %2410 = vrot.lane.b32.xlu0 %v2320, 20
      %v2411 = vpop.permute.xlu0 %2410
      %2412 = vrot.lane.b32.xlu0 %v2323, 20
      %v2413 = vpop.permute.xlu0 %2412
      %2414 = vrot.lane.b32.xlu0 %v2326, 20
      %v2415 = vpop.permute.xlu0 %2414
      %2416 = vrot.lane.b32.xlu0 %v2329, 20
      %v2417 = vpop.permute.xlu0 %2416
      %2418 = vrot.lane.b32.xlu0 %v2332, 20
      %v2419 = vpop.permute.xlu0 %2418
      %2420 = vrot.lane.b32.xlu0 %v2335, 20
      %v2421 = vpop.permute.xlu0 %2420
      %2422 = vrot.lane.b32.xlu0 %v2338, 20
      %v2423 = vpop.permute.xlu0 %2422
      %2424 = vrot.lane.b32.xlu0 %v2341, 20
      %v2425 = vpop.permute.xlu0 %2424
      %2426 = vrot.lane.b32.xlu0 %v2344, 20
      %v2427 = vpop.permute.xlu0 %2426
      %2428 = vrot.lane.b32.xlu0 %v2347, 20
      %v2429 = vpop.permute.xlu0 %2428
      %2430 = vrot.lane.b32.xlu0 %v2350, 20
      %v2431 = vpop.permute.xlu0 %2430
      %2432 = vrot.lane.b32.xlu0 %v2353, 20
      %v2433 = vpop.permute.xlu0 %2432
      %2434 = vrot.lane.b32.xlu0 %v2356, 20
      %v2435 = vpop.permute.xlu0 %2434
      %2436 = vrot.lane.b32.xlu0 %v2359, 20
      %v2437 = vpop.permute.xlu0 %2436
      %2438 = vrot.lane.b32.xlu0 %v2362, 20
      %v2439 = vpop.permute.xlu0 %2438
      %2440 = vrot.lane.b32.xlu0 %v2365, 20
      %v2441 = vpop.permute.xlu0 %2440
      %2442 = vrot.lane.b32.xlu0 %v2368, 20
      %v2443 = vpop.permute.xlu0 %2442
      %2444 = vrot.lane.b32.xlu0 %v2371, 20
      %v2445 = vpop.permute.xlu0 %2444
      %2446 = vrot.lane.b32.xlu0 %v2374, 20
      %v2447 = vpop.permute.xlu0 %2446
      %2448 = vrot.lane.b32.xlu0 %v2377, 20
      %v2449 = vpop.permute.xlu0 %2448
      %vm2486 = vcmask 191648
      %2487 = vst.msk [vmem:[#allocation3] sm:$0xf] %vm2486, %v2379
      %2488 = vst.msk [vmem:[#allocation3 + $0x4] sm:$0xf] %vm2486, %v2381
      %2489 = vst.msk [vmem:[#allocation3 + $0x8] sm:$0xf] %vm2486, %v2383
      %2490 = vst.msk [vmem:[#allocation3 + $0xc] sm:$0xf] %vm2486, %v2385
      %2491 = vst.msk [vmem:[#allocation3 + $0x10] sm:$0xf] %vm2486, %v2387
      %2492 = vst.msk [vmem:[#allocation3 + $0x14] sm:$0xf] %vm2486, %v2389
      %2493 = vst.msk [vmem:[#allocation3 + $0x18] sm:$0xf] %vm2486, %v2391
      %2494 = vst.msk [vmem:[#allocation3 + $0x1c] sm:$0xf] %vm2486, %v2393
      %2495 = vst.msk [vmem:[#allocation3 + $0x20] sm:$0xf] %vm2486, %v2395
      %2496 = vst.msk [vmem:[#allocation3 + $0x24] sm:$0xf] %vm2486, %v2397
      %2497 = vst.msk [vmem:[#allocation3 + $0x28] sm:$0xf] %vm2486, %v2399
      %2498 = vst.msk [vmem:[#allocation3 + $0x2c] sm:$0xf] %vm2486, %v2401
      %2499 = vst.msk [vmem:[#allocation3 + $0x30] sm:$0xf] %vm2486, %v2403
      %2500 = vst.msk [vmem:[#allocation3 + $0x34] sm:$0xf] %vm2486, %v2405
      %2501 = vst.msk [vmem:[#allocation3 + $0x38] sm:$0xf] %vm2486, %v2407
      %2502 = vst.msk [vmem:[#allocation3 + $0x3c] sm:$0xf] %vm2486, %v2409
      %2503 = vst.msk [vmem:[#allocation3 + $0x40] sm:$0xf] %vm2486, %v2411
      %2504 = vst.msk [vmem:[#allocation3 + $0x44] sm:$0xf] %vm2486, %v2413
      %2505 = vst.msk [vmem:[#allocation3 + $0x48] sm:$0xf] %vm2486, %v2415
      %2506 = vst.msk [vmem:[#allocation3 + $0x4c] sm:$0xf] %vm2486, %v2417
      %2507 = vst.msk [vmem:[#allocation3 + $0x50] sm:$0xf] %vm2486, %v2419
      %2508 = vst.msk [vmem:[#allocation3 + $0x54] sm:$0xf] %vm2486, %v2421
      %2509 = vst.msk [vmem:[#allocation3 + $0x58] sm:$0xf] %vm2486, %v2423
      %2510 = vst.msk [vmem:[#allocation3 + $0x5c] sm:$0xf] %vm2486, %v2425
      %2511 = vst.msk [vmem:[#allocation3 + $0x60] sm:$0xf] %vm2486, %v2427
      %2512 = vst.msk [vmem:[#allocation3 + $0x64] sm:$0xf] %vm2486, %v2429
      %2513 = vst.msk [vmem:[#allocation3 + $0x68] sm:$0xf] %vm2486, %v2431
      %2514 = vst.msk [vmem:[#allocation3 + $0x6c] sm:$0xf] %vm2486, %v2433
      %2515 = vst.msk [vmem:[#allocation3 + $0x70] sm:$0xf] %vm2486, %v2435
      %2516 = vst.msk [vmem:[#allocation3 + $0x74] sm:$0xf] %vm2486, %v2437
      %2517 = vst.msk [vmem:[#allocation3 + $0x78] sm:$0xf] %vm2486, %v2439
      %2518 = vst.msk [vmem:[#allocation3 + $0x7c] sm:$0xf] %vm2486, %v2441
      %2519 = vst.msk [vmem:[#allocation3 + $0x80] sm:$0xf] %vm2486, %v2443
      %2520 = vst.msk [vmem:[#allocation3 + $0x84] sm:$0xf] %vm2486, %v2445
      %2521 = vst.msk [vmem:[#allocation3 + $0x88] sm:$0xf] %vm2486, %v2447
      %2522 = vst.msk [vmem:[#allocation3 + $0x8c] sm:$0xf] %vm2486, %v2449
      %v2523 = vld [vmem:[#allocation2 + $0x10] sm:$0xc]
      %v2524 = vld [vmem:[#allocation2 + $0x14] sm:$0xf]
      %v2525 = vld [vmem:[#allocation2 + $0x18] sm:$0xf]
      %v2526 = vld [vmem:[#allocation2 + $0x1c] sm:$0xf]
      %v2527 = vld [vmem:[#allocation2 + $0x20] sm:$0xf]
      %v2528 = vld [vmem:[#allocation2 + $0x24] sm:$0xf]
      %v2529 = vld [vmem:[#allocation2 + $0x28] sm:$0xf]
      %v2530 = vld [vmem:[#allocation2 + $0x2c] sm:$0xf]
      %v2531 = vld [vmem:[#allocation2 + $0x30] sm:$0xf]
      %v2532 = vld [vmem:[#allocation2 + $0x34] sm:$0xf]
      %v2533 = vld [vmem:[#allocation2 + $0x38] sm:$0xf]
      %v2534 = vld [vmem:[#allocation2 + $0x3c] sm:$0xf]
      %v2535 = vld [vmem:[#allocation2 + $0x40] sm:$0xf]
      %v2536 = vld [vmem:[#allocation2 + $0x44] sm:$0xf]
      %v2537 = vld [vmem:[#allocation2 + $0x48] sm:$0xf]
      %v2538 = vld [vmem:[#allocation2 + $0x4c] sm:$0xf]
      %v2539 = vld [vmem:[#allocation2 + $0x50] sm:$0xf]
      %v2540 = vld [vmem:[#allocation2 + $0x54] sm:$0xf]
      %v2541 = vld [vmem:[#allocation2 + $0x58] sm:$0xf]
      %v2542 = vld [vmem:[#allocation2 + $0x5c] sm:$0xf]
      %v2543 = vld [vmem:[#allocation2 + $0x60] sm:$0xf]
      %v2544 = vld [vmem:[#allocation2 + $0x64] sm:$0xf]
      %v2545 = vld [vmem:[#allocation2 + $0x68] sm:$0xf]
      %v2546 = vld [vmem:[#allocation2 + $0x6c] sm:$0xf]
      %v2547 = vld [vmem:[#allocation2 + $0x70] sm:$0xf]
      %v2548 = vld [vmem:[#allocation2 + $0x74] sm:$0xf]
      %v2549 = vld [vmem:[#allocation2 + $0x78] sm:$0xf]
      %v2550 = vld [vmem:[#allocation2 + $0x7c] sm:$0xf]
      %v2551 = vld [vmem:[#allocation2 + $0x80] sm:$0xf]
      %v2552 = vld [vmem:[#allocation2 + $0x84] sm:$0xf]
      %v2553 = vld [vmem:[#allocation2 + $0x88] sm:$0xf]
      %v2554 = vld [vmem:[#allocation2 + $0x8c] sm:$0xf]
      %v2555 = vld [vmem:[#allocation2 + $0x90] sm:$0xf]
      %v2556 = vld [vmem:[#allocation2 + $0x94] sm:$0xf]
      %v2557 = vld [vmem:[#allocation2 + $0x98] sm:$0xf]
      %v2558 = vld [vmem:[#allocation2 + $0x9c] sm:$0xf]
      %v2559 = vld [vmem:[#allocation2 + $0xa0] sm:$0x3]
      %v2597 = vrot.slane %v2523, 6
      %v2598 = vrot.slane %v2597, 4
      %v2599 = vrot.slane %v2524, 6
      %v2600 = vsel %vm2268, %v2598, %v2599
      %v2601 = vrot.slane %v2599, 4
      %v2602 = vrot.slane %v2525, 6
      %v2603 = vsel %vm2268, %v2601, %v2602
      %v2604 = vrot.slane %v2602, 4
      %v2605 = vrot.slane %v2526, 6
      %v2606 = vsel %vm2268, %v2604, %v2605
      %v2607 = vrot.slane %v2605, 4
      %v2608 = vrot.slane %v2527, 6
      %v2609 = vsel %vm2268, %v2607, %v2608
      %v2610 = vrot.slane %v2608, 4
      %v2611 = vrot.slane %v2528, 6
      %v2612 = vsel %vm2268, %v2610, %v2611
      %v2613 = vrot.slane %v2611, 4
      %v2614 = vrot.slane %v2529, 6
      %v2615 = vsel %vm2268, %v2613, %v2614
      %v2616 = vrot.slane %v2614, 4
      %v2617 = vrot.slane %v2530, 6
      %v2618 = vsel %vm2268, %v2616, %v2617
      %v2619 = vrot.slane %v2617, 4
      %v2620 = vrot.slane %v2531, 6
      %v2621 = vsel %vm2268, %v2619, %v2620
      %v2622 = vrot.slane %v2620, 4
      %v2623 = vrot.slane %v2532, 6
      %v2624 = vsel %vm2268, %v2622, %v2623
      %v2625 = vrot.slane %v2623, 4
      %v2626 = vrot.slane %v2533, 6
      %v2627 = vsel %vm2268, %v2625, %v2626
      %v2628 = vrot.slane %v2626, 4
      %v2629 = vrot.slane %v2534, 6
      %v2630 = vsel %vm2268, %v2628, %v2629
      %v2631 = vrot.slane %v2629, 4
      %v2632 = vrot.slane %v2535, 6
      %v2633 = vsel %vm2268, %v2631, %v2632
      %v2634 = vrot.slane %v2632, 4
      %v2635 = vrot.slane %v2536, 6
      %v2636 = vsel %vm2268, %v2634, %v2635
      %v2637 = vrot.slane %v2635, 4
      %v2638 = vrot.slane %v2537, 6
      %v2639 = vsel %vm2268, %v2637, %v2638
      %v2640 = vrot.slane %v2638, 4
      %v2641 = vrot.slane %v2538, 6
      %v2642 = vsel %vm2268, %v2640, %v2641
      %v2643 = vrot.slane %v2641, 4
      %v2644 = vrot.slane %v2539, 6
      %v2645 = vsel %vm2268, %v2643, %v2644
      %v2646 = vrot.slane %v2644, 4
      %v2647 = vrot.slane %v2540, 6
      %v2648 = vsel %vm2268, %v2646, %v2647
      %v2649 = vrot.slane %v2647, 4
      %v2650 = vrot.slane %v2541, 6
      %v2651 = vsel %vm2268, %v2649, %v2650
      %v2652 = vrot.slane %v2650, 4
      %v2653 = vrot.slane %v2542, 6
      %v2654 = vsel %vm2268, %v2652, %v2653
      %v2655 = vrot.slane %v2653, 4
      %v2656 = vrot.slane %v2543, 6
      %v2657 = vsel %vm2268, %v2655, %v2656
      %v2658 = vrot.slane %v2656, 4
      %v2659 = vrot.slane %v2544, 6
      %v2660 = vsel %vm2268, %v2658, %v2659
      %v2661 = vrot.slane %v2659, 4
      %v2662 = vrot.slane %v2545, 6
      %v2663 = vsel %vm2268, %v2661, %v2662
      %v2664 = vrot.slane %v2662, 4
      %v2665 = vrot.slane %v2546, 6
      %v2666 = vsel %vm2268, %v2664, %v2665
      %v2667 = vrot.slane %v2665, 4
      %v2668 = vrot.slane %v2547, 6
      %v2669 = vsel %vm2268, %v2667, %v2668
      %v2670 = vrot.slane %v2668, 4
      %v2671 = vrot.slane %v2548, 6
      %v2672 = vsel %vm2268, %v2670, %v2671
      %v2673 = vrot.slane %v2671, 4
      %v2674 = vrot.slane %v2549, 6
      %v2675 = vsel %vm2268, %v2673, %v2674
      %v2676 = vrot.slane %v2674, 4
      %v2677 = vrot.slane %v2550, 6
      %v2678 = vsel %vm2268, %v2676, %v2677
      %v2679 = vrot.slane %v2677, 4
      %v2680 = vrot.slane %v2551, 6
      %v2681 = vsel %vm2268, %v2679, %v2680
      %v2682 = vrot.slane %v2680, 4
      %v2683 = vrot.slane %v2552, 6
      %v2684 = vsel %vm2268, %v2682, %v2683
      %v2685 = vrot.slane %v2683, 4
      %v2686 = vrot.slane %v2553, 6
      %v2687 = vsel %vm2268, %v2685, %v2686
      %v2688 = vrot.slane %v2686, 4
      %v2689 = vrot.slane %v2554, 6
      %v2690 = vsel %vm2268, %v2688, %v2689
      %v2691 = vrot.slane %v2689, 4
      %v2692 = vrot.slane %v2555, 6
      %v2693 = vsel %vm2268, %v2691, %v2692
      %v2694 = vrot.slane %v2692, 4
      %v2695 = vrot.slane %v2556, 6
      %v2696 = vsel %vm2268, %v2694, %v2695
      %v2697 = vrot.slane %v2695, 4
      %v2698 = vrot.slane %v2557, 6
      %v2699 = vsel %vm2268, %v2697, %v2698
      %v2700 = vrot.slane %v2698, 4
      %v2701 = vrot.slane %v2558, 6
      %v2702 = vsel %vm2268, %v2700, %v2701
      %v2703 = vrot.slane %v2701, 4
      %v2704 = vrot.slane %v2559, 6
      %v2705 = vsel %vm2268, %v2703, %v2704
      %2706 = vrot.lane.b32.xlu0 %v2600, 24
      %v2707 = vpop.permute.xlu0 %2706
      %2708 = vrot.lane.b32.xlu0 %v2603, 24
      %v2709 = vpop.permute.xlu0 %2708
      %2710 = vrot.lane.b32.xlu0 %v2606, 24
      %v2711 = vpop.permute.xlu0 %2710
      %2712 = vrot.lane.b32.xlu0 %v2609, 24
      %v2713 = vpop.permute.xlu0 %2712
      %2714 = vrot.lane.b32.xlu0 %v2612, 24
      %v2715 = vpop.permute.xlu0 %2714
      %2716 = vrot.lane.b32.xlu0 %v2615, 24
      %v2717 = vpop.permute.xlu0 %2716
      %2718 = vrot.lane.b32.xlu0 %v2618, 24
      %v2719 = vpop.permute.xlu0 %2718
      %2720 = vrot.lane.b32.xlu0 %v2621, 24
      %v2721 = vpop.permute.xlu0 %2720
      %2722 = vrot.lane.b32.xlu0 %v2624, 24
      %v2723 = vpop.permute.xlu0 %2722
      %2724 = vrot.lane.b32.xlu0 %v2627, 24
      %v2725 = vpop.permute.xlu0 %2724
      %2726 = vrot.lane.b32.xlu0 %v2630, 24
      %v2727 = vpop.permute.xlu0 %2726
      %2728 = vrot.lane.b32.xlu0 %v2633, 24
      %v2729 = vpop.permute.xlu0 %2728
      %2730 = vrot.lane.b32.xlu0 %v2636, 24
      %v2731 = vpop.permute.xlu0 %2730
      %2732 = vrot.lane.b32.xlu0 %v2639, 24
      %v2733 = vpop.permute.xlu0 %2732
      %2734 = vrot.lane.b32.xlu0 %v2642, 24
      %v2735 = vpop.permute.xlu0 %2734
      %2736 = vrot.lane.b32.xlu0 %v2645, 24
      %v2737 = vpop.permute.xlu0 %2736
      %2738 = vrot.lane.b32.xlu0 %v2648, 24
      %v2739 = vpop.permute.xlu0 %2738
      %2740 = vrot.lane.b32.xlu0 %v2651, 24
      %v2741 = vpop.permute.xlu0 %2740
      %2742 = vrot.lane.b32.xlu0 %v2654, 24
      %v2743 = vpop.permute.xlu0 %2742
      %2744 = vrot.lane.b32.xlu0 %v2657, 24
      %v2745 = vpop.permute.xlu0 %2744
      %2746 = vrot.lane.b32.xlu0 %v2660, 24
      %v2747 = vpop.permute.xlu0 %2746
      %2748 = vrot.lane.b32.xlu0 %v2663, 24
      %v2749 = vpop.permute.xlu0 %2748
      %2750 = vrot.lane.b32.xlu0 %v2666, 24
      %v2751 = vpop.permute.xlu0 %2750
      %2752 = vrot.lane.b32.xlu0 %v2669, 24
      %v2753 = vpop.permute.xlu0 %2752
      %2754 = vrot.lane.b32.xlu0 %v2672, 24
      %v2755 = vpop.permute.xlu0 %2754
      %2756 = vrot.lane.b32.xlu0 %v2675, 24
      %v2757 = vpop.permute.xlu0 %2756
      %2758 = vrot.lane.b32.xlu0 %v2678, 24
      %v2759 = vpop.permute.xlu0 %2758
      %2760 = vrot.lane.b32.xlu0 %v2681, 24
      %v2761 = vpop.permute.xlu0 %2760
      %2762 = vrot.lane.b32.xlu0 %v2684, 24
      %v2763 = vpop.permute.xlu0 %2762
      %2764 = vrot.lane.b32.xlu0 %v2687, 24
      %v2765 = vpop.permute.xlu0 %2764
      %2766 = vrot.lane.b32.xlu0 %v2690, 24
      %v2767 = vpop.permute.xlu0 %2766
      %2768 = vrot.lane.b32.xlu0 %v2693, 24
      %v2769 = vpop.permute.xlu0 %2768
      %2770 = vrot.lane.b32.xlu0 %v2696, 24
      %v2771 = vpop.permute.xlu0 %2770
      %2772 = vrot.lane.b32.xlu0 %v2699, 24
      %v2773 = vpop.permute.xlu0 %2772
      %2774 = vrot.lane.b32.xlu0 %v2702, 24
      %v2775 = vpop.permute.xlu0 %2774
      %2776 = vrot.lane.b32.xlu0 %v2705, 24
      %v2777 = vpop.permute.xlu0 %2776
      %vm2814 = vcmask 224448
      %2815 = vst.msk [vmem:[#allocation3] sm:$0xf] %vm2814, %v2707
      %2816 = vst.msk [vmem:[#allocation3 + $0x4] sm:$0xf] %vm2814, %v2709
      %2817 = vst.msk [vmem:[#allocation3 + $0x8] sm:$0xf] %vm2814, %v2711
      %2818 = vst.msk [vmem:[#allocation3 + $0xc] sm:$0xf] %vm2814, %v2713
      %2819 = vst.msk [vmem:[#allocation3 + $0x10] sm:$0xf] %vm2814, %v2715
      %2820 = vst.msk [vmem:[#allocation3 + $0x14] sm:$0xf] %vm2814, %v2717
      %2821 = vst.msk [vmem:[#allocation3 + $0x18] sm:$0xf] %vm2814, %v2719
      %2822 = vst.msk [vmem:[#allocation3 + $0x1c] sm:$0xf] %vm2814, %v2721
      %2823 = vst.msk [vmem:[#allocation3 + $0x20] sm:$0xf] %vm2814, %v2723
      %2824 = vst.msk [vmem:[#allocation3 + $0x24] sm:$0xf] %vm2814, %v2725
      %2825 = vst.msk [vmem:[#allocation3 + $0x28] sm:$0xf] %vm2814, %v2727
      %2826 = vst.msk [vmem:[#allocation3 + $0x2c] sm:$0xf] %vm2814, %v2729
      %2827 = vst.msk [vmem:[#allocation3 + $0x30] sm:$0xf] %vm2814, %v2731
      %2828 = vst.msk [vmem:[#allocation3 + $0x34] sm:$0xf] %vm2814, %v2733
      %2829 = vst.msk [vmem:[#allocation3 + $0x38] sm:$0xf] %vm2814, %v2735
      %2830 = vst.msk [vmem:[#allocation3 + $0x3c] sm:$0xf] %vm2814, %v2737
      %2831 = vst.msk [vmem:[#allocation3 + $0x40] sm:$0xf] %vm2814, %v2739
      %2832 = vst.msk [vmem:[#allocation3 + $0x44] sm:$0xf] %vm2814, %v2741
      %2833 = vst.msk [vmem:[#allocation3 + $0x48] sm:$0xf] %vm2814, %v2743
      %2834 = vst.msk [vmem:[#allocation3 + $0x4c] sm:$0xf] %vm2814, %v2745
      %2835 = vst.msk [vmem:[#allocation3 + $0x50] sm:$0xf] %vm2814, %v2747
      %2836 = vst.msk [vmem:[#allocation3 + $0x54] sm:$0xf] %vm2814, %v2749
      %2837 = vst.msk [vmem:[#allocation3 + $0x58] sm:$0xf] %vm2814, %v2751
      %2838 = vst.msk [vmem:[#allocation3 + $0x5c] sm:$0xf] %vm2814, %v2753
      %2839 = vst.msk [vmem:[#allocation3 + $0x60] sm:$0xf] %vm2814, %v2755
      %2840 = vst.msk [vmem:[#allocation3 + $0x64] sm:$0xf] %vm2814, %v2757
      %2841 = vst.msk [vmem:[#allocation3 + $0x68] sm:$0xf] %vm2814, %v2759
      %2842 = vst.msk [vmem:[#allocation3 + $0x6c] sm:$0xf] %vm2814, %v2761
      %2843 = vst.msk [vmem:[#allocation3 + $0x70] sm:$0xf] %vm2814, %v2763
      %2844 = vst.msk [vmem:[#allocation3 + $0x74] sm:$0xf] %vm2814, %v2765
      %2845 = vst.msk [vmem:[#allocation3 + $0x78] sm:$0xf] %vm2814, %v2767
      %2846 = vst.msk [vmem:[#allocation3 + $0x7c] sm:$0xf] %vm2814, %v2769
      %2847 = vst.msk [vmem:[#allocation3 + $0x80] sm:$0xf] %vm2814, %v2771
      %2848 = vst.msk [vmem:[#allocation3 + $0x84] sm:$0xf] %vm2814, %v2773
      %2849 = vst.msk [vmem:[#allocation3 + $0x88] sm:$0xf] %vm2814, %v2775
      %2850 = vst.msk [vmem:[#allocation3 + $0x8c] sm:$0xf] %vm2814, %v2777
      %v2851 = vld [vmem:[#allocation2 + $0x10] sm:$0xc]
      %v2852 = vld [vmem:[#allocation2 + $0x14] sm:$0xf]
      %v2853 = vld [vmem:[#allocation2 + $0x18] sm:$0xf]
      %v2854 = vld [vmem:[#allocation2 + $0x1c] sm:$0xf]
      %v2855 = vld [vmem:[#allocation2 + $0x20] sm:$0xf]
      %v2856 = vld [vmem:[#allocation2 + $0x24] sm:$0xf]
      %v2857 = vld [vmem:[#allocation2 + $0x28] sm:$0xf]
      %v2858 = vld [vmem:[#allocation2 + $0x2c] sm:$0xf]
      %v2859 = vld [vmem:[#allocation2 + $0x30] sm:$0xf]
      %v2860 = vld [vmem:[#allocation2 + $0x34] sm:$0xf]
      %v2861 = vld [vmem:[#allocation2 + $0x38] sm:$0xf]
      %v2862 = vld [vmem:[#allocation2 + $0x3c] sm:$0xf]
      %v2863 = vld [vmem:[#allocation2 + $0x40] sm:$0xf]
      %v2864 = vld [vmem:[#allocation2 + $0x44] sm:$0xf]
      %v2865 = vld [vmem:[#allocation2 + $0x48] sm:$0xf]
      %v2866 = vld [vmem:[#allocation2 + $0x4c] sm:$0xf]
      %v2867 = vld [vmem:[#allocation2 + $0x50] sm:$0xf]
      %v2868 = vld [vmem:[#allocation2 + $0x54] sm:$0xf]
      %v2869 = vld [vmem:[#allocation2 + $0x58] sm:$0xf]
      %v2870 = vld [vmem:[#allocation2 + $0x5c] sm:$0xf]
      %v2871 = vld [vmem:[#allocation2 + $0x60] sm:$0xf]
      %v2872 = vld [vmem:[#allocation2 + $0x64] sm:$0xf]
      %v2873 = vld [vmem:[#allocation2 + $0x68] sm:$0xf]
      %v2874 = vld [vmem:[#allocation2 + $0x6c] sm:$0xf]
      %v2875 = vld [vmem:[#allocation2 + $0x70] sm:$0xf]
      %v2876 = vld [vmem:[#allocation2 + $0x74] sm:$0xf]
      %v2877 = vld [vmem:[#allocation2 + $0x78] sm:$0xf]
      %v2878 = vld [vmem:[#allocation2 + $0x7c] sm:$0xf]
      %v2879 = vld [vmem:[#allocation2 + $0x80] sm:$0xf]
      %v2880 = vld [vmem:[#allocation2 + $0x84] sm:$0xf]
      %v2881 = vld [vmem:[#allocation2 + $0x88] sm:$0xf]
      %v2882 = vld [vmem:[#allocation2 + $0x8c] sm:$0xf]
      %v2883 = vld [vmem:[#allocation2 + $0x90] sm:$0xf]
      %v2884 = vld [vmem:[#allocation2 + $0x94] sm:$0xf]
      %v2885 = vld [vmem:[#allocation2 + $0x98] sm:$0xf]
      %v2886 = vld [vmem:[#allocation2 + $0x9c] sm:$0xf]
      %v2887 = vld [vmem:[#allocation2 + $0xa0] sm:$0x7]
      %vm2888 = vsmask.f32 1280
      %vm2889 = vsmask.f32 5392
      %vm2890 = vmor %vm2888, %vm2889
      %v2892 = vshrl.u32 %v2851, 16
      %v2894 = vrot.slane %v2892, 6
      %v2895 = vshll.u32 %v2851, 16
      %v2897 = vrot.slane %v2895, 7
      %v2898 = vor.u32 %v2894, %v2897
      %v2899 = vrot.slane %v2898, 4
      %v2901 = vshrl.u32 %v2852, 16
      %v2903 = vrot.slane %v2901, 6
      %v2904 = vshll.u32 %v2852, 16
      %v2906 = vrot.slane %v2904, 7
      %v2907 = vor.u32 %v2903, %v2906
      %v2908 = vsel %vm2890, %v2899, %v2907
      %v2909 = vrot.slane %v2907, 4
      %v2911 = vshrl.u32 %v2853, 16
      %v2913 = vrot.slane %v2911, 6
      %v2914 = vshll.u32 %v2853, 16
      %v2916 = vrot.slane %v2914, 7
      %v2917 = vor.u32 %v2913, %v2916
      %v2918 = vsel %vm2890, %v2909, %v2917
      %v2919 = vrot.slane %v2917, 4
      %v2921 = vshrl.u32 %v2854, 16
      %v2923 = vrot.slane %v2921, 6
      %v2924 = vshll.u32 %v2854, 16
      %v2926 = vrot.slane %v2924, 7
      %v2927 = vor.u32 %v2923, %v2926
      %v2928 = vsel %vm2890, %v2919, %v2927
      %v2929 = vrot.slane %v2927, 4
      %v2931 = vshrl.u32 %v2855, 16
      %v2933 = vrot.slane %v2931, 6
      %v2934 = vshll.u32 %v2855, 16
      %v2936 = vrot.slane %v2934, 7
      %v2937 = vor.u32 %v2933, %v2936
      %v2938 = vsel %vm2890, %v2929, %v2937
      %v2939 = vrot.slane %v2937, 4
      %v2941 = vshrl.u32 %v2856, 16
      %v2943 = vrot.slane %v2941, 6
      %v2944 = vshll.u32 %v2856, 16
      %v2946 = vrot.slane %v2944, 7
      %v2947 = vor.u32 %v2943, %v2946
      %v2948 = vsel %vm2890, %v2939, %v2947
      %v2949 = vrot.slane %v2947, 4
      %v2951 = vshrl.u32 %v2857, 16
      %v2953 = vrot.slane %v2951, 6
      %v2954 = vshll.u32 %v2857, 16
      %v2956 = vrot.slane %v2954, 7
      %v2957 = vor.u32 %v2953, %v2956
      %v2958 = vsel %vm2890, %v2949, %v2957
      %v2959 = vrot.slane %v2957, 4
      %v2961 = vshrl.u32 %v2858, 16
      %v2963 = vrot.slane %v2961, 6
      %v2964 = vshll.u32 %v2858, 16
      %v2966 = vrot.slane %v2964, 7
      %v2967 = vor.u32 %v2963, %v2966
      %v2968 = vsel %vm2890, %v2959, %v2967
      %v2969 = vrot.slane %v2967, 4
      %v2971 = vshrl.u32 %v2859, 16
      %v2973 = vrot.slane %v2971, 6
      %v2974 = vshll.u32 %v2859, 16
      %v2976 = vrot.slane %v2974, 7
      %v2977 = vor.u32 %v2973, %v2976
      %v2978 = vsel %vm2890, %v2969, %v2977
      %v2979 = vrot.slane %v2977, 4
      %v2981 = vshrl.u32 %v2860, 16
      %v2983 = vrot.slane %v2981, 6
      %v2984 = vshll.u32 %v2860, 16
      %v2986 = vrot.slane %v2984, 7
      %v2987 = vor.u32 %v2983, %v2986
      %v2988 = vsel %vm2890, %v2979, %v2987
      %v2989 = vrot.slane %v2987, 4
      %v2991 = vshrl.u32 %v2861, 16
      %v2993 = vrot.slane %v2991, 6
      %v2994 = vshll.u32 %v2861, 16
      %v2996 = vrot.slane %v2994, 7
      %v2997 = vor.u32 %v2993, %v2996
      %v2998 = vsel %vm2890, %v2989, %v2997
      %v2999 = vrot.slane %v2997, 4
      %v3001 = vshrl.u32 %v2862, 16
      %v3003 = vrot.slane %v3001, 6
      %v3004 = vshll.u32 %v2862, 16
      %v3006 = vrot.slane %v3004, 7
      %v3007 = vor.u32 %v3003, %v3006
      %v3008 = vsel %vm2890, %v2999, %v3007
      %v3009 = vrot.slane %v3007, 4
      %v3011 = vshrl.u32 %v2863, 16
      %v3013 = vrot.slane %v3011, 6
      %v3014 = vshll.u32 %v2863, 16
      %v3016 = vrot.slane %v3014, 7
      %v3017 = vor.u32 %v3013, %v3016
      %v3018 = vsel %vm2890, %v3009, %v3017
      %v3019 = vrot.slane %v3017, 4
      %v3021 = vshrl.u32 %v2864, 16
      %v3023 = vrot.slane %v3021, 6
      %v3024 = vshll.u32 %v2864, 16
      %v3026 = vrot.slane %v3024, 7
      %v3027 = vor.u32 %v3023, %v3026
      %v3028 = vsel %vm2890, %v3019, %v3027
      %v3029 = vrot.slane %v3027, 4
      %v3031 = vshrl.u32 %v2865, 16
      %v3033 = vrot.slane %v3031, 6
      %v3034 = vshll.u32 %v2865, 16
      %v3036 = vrot.slane %v3034, 7
      %v3037 = vor.u32 %v3033, %v3036
      %v3038 = vsel %vm2890, %v3029, %v3037
      %v3039 = vrot.slane %v3037, 4
      %v3041 = vshrl.u32 %v2866, 16
      %v3043 = vrot.slane %v3041, 6
      %v3044 = vshll.u32 %v2866, 16
      %v3046 = vrot.slane %v3044, 7
      %v3047 = vor.u32 %v3043, %v3046
      %v3048 = vsel %vm2890, %v3039, %v3047
      %v3049 = vrot.slane %v3047, 4
      %v3051 = vshrl.u32 %v2867, 16
      %v3053 = vrot.slane %v3051, 6
      %v3054 = vshll.u32 %v2867, 16
      %v3056 = vrot.slane %v3054, 7
      %v3057 = vor.u32 %v3053, %v3056
      %v3058 = vsel %vm2890, %v3049, %v3057
      %v3059 = vrot.slane %v3057, 4
      %v3061 = vshrl.u32 %v2868, 16
      %v3063 = vrot.slane %v3061, 6
      %v3064 = vshll.u32 %v2868, 16
      %v3066 = vrot.slane %v3064, 7
      %v3067 = vor.u32 %v3063, %v3066
      %v3068 = vsel %vm2890, %v3059, %v3067
      %v3069 = vrot.slane %v3067, 4
      %v3071 = vshrl.u32 %v2869, 16
      %v3073 = vrot.slane %v3071, 6
      %v3074 = vshll.u32 %v2869, 16
      %v3076 = vrot.slane %v3074, 7
      %v3077 = vor.u32 %v3073, %v3076
      %v3078 = vsel %vm2890, %v3069, %v3077
      %v3079 = vrot.slane %v3077, 4
      %v3081 = vshrl.u32 %v2870, 16
      %v3083 = vrot.slane %v3081, 6
      %v3084 = vshll.u32 %v2870, 16
      %v3086 = vrot.slane %v3084, 7
      %v3087 = vor.u32 %v3083, %v3086
      %v3088 = vsel %vm2890, %v3079, %v3087
      %v3089 = vrot.slane %v3087, 4
      %v3091 = vshrl.u32 %v2871, 16
      %v3093 = vrot.slane %v3091, 6
      %v3094 = vshll.u32 %v2871, 16
      %v3096 = vrot.slane %v3094, 7
      %v3097 = vor.u32 %v3093, %v3096
      %v3098 = vsel %vm2890, %v3089, %v3097
      %v3099 = vrot.slane %v3097, 4
      %v3101 = vshrl.u32 %v2872, 16
      %v3103 = vrot.slane %v3101, 6
      %v3104 = vshll.u32 %v2872, 16
      %v3106 = vrot.slane %v3104, 7
      %v3107 = vor.u32 %v3103, %v3106
      %v3108 = vsel %vm2890, %v3099, %v3107
      %v3109 = vrot.slane %v3107, 4
      %v3111 = vshrl.u32 %v2873, 16
      %v3113 = vrot.slane %v3111, 6
      %v3114 = vshll.u32 %v2873, 16
      %v3116 = vrot.slane %v3114, 7
      %v3117 = vor.u32 %v3113, %v3116
      %v3118 = vsel %vm2890, %v3109, %v3117
      %v3119 = vrot.slane %v3117, 4
      %v3121 = vshrl.u32 %v2874, 16
      %v3123 = vrot.slane %v3121, 6
      %v3124 = vshll.u32 %v2874, 16
      %v3126 = vrot.slane %v3124, 7
      %v3127 = vor.u32 %v3123, %v3126
      %v3128 = vsel %vm2890, %v3119, %v3127
      %v3129 = vrot.slane %v3127, 4
      %v3131 = vshrl.u32 %v2875, 16
      %v3133 = vrot.slane %v3131, 6
      %v3134 = vshll.u32 %v2875, 16
      %v3136 = vrot.slane %v3134, 7
      %v3137 = vor.u32 %v3133, %v3136
      %v3138 = vsel %vm2890, %v3129, %v3137
      %v3139 = vrot.slane %v3137, 4
      %v3141 = vshrl.u32 %v2876, 16
      %v3143 = vrot.slane %v3141, 6
      %v3144 = vshll.u32 %v2876, 16
      %v3146 = vrot.slane %v3144, 7
      %v3147 = vor.u32 %v3143, %v3146
      %v3148 = vsel %vm2890, %v3139, %v3147
      %v3149 = vrot.slane %v3147, 4
      %v3151 = vshrl.u32 %v2877, 16
      %v3153 = vrot.slane %v3151, 6
      %v3154 = vshll.u32 %v2877, 16
      %v3156 = vrot.slane %v3154, 7
      %v3157 = vor.u32 %v3153, %v3156
      %v3158 = vsel %vm2890, %v3149, %v3157
      %v3159 = vrot.slane %v3157, 4
      %v3161 = vshrl.u32 %v2878, 16
      %v3163 = vrot.slane %v3161, 6
      %v3164 = vshll.u32 %v2878, 16
      %v3166 = vrot.slane %v3164, 7
      %v3167 = vor.u32 %v3163, %v3166
      %v3168 = vsel %vm2890, %v3159, %v3167
      %v3169 = vrot.slane %v3167, 4
      %v3171 = vshrl.u32 %v2879, 16
      %v3173 = vrot.slane %v3171, 6
      %v3174 = vshll.u32 %v2879, 16
      %v3176 = vrot.slane %v3174, 7
      %v3177 = vor.u32 %v3173, %v3176
      %v3178 = vsel %vm2890, %v3169, %v3177
      %v3179 = vrot.slane %v3177, 4
      %v3181 = vshrl.u32 %v2880, 16
      %v3183 = vrot.slane %v3181, 6
      %v3184 = vshll.u32 %v2880, 16
      %v3186 = vrot.slane %v3184, 7
      %v3187 = vor.u32 %v3183, %v3186
      %v3188 = vsel %vm2890, %v3179, %v3187
      %v3189 = vrot.slane %v3187, 4
      %v3191 = vshrl.u32 %v2881, 16
      %v3193 = vrot.slane %v3191, 6
      %v3194 = vshll.u32 %v2881, 16
      %v3196 = vrot.slane %v3194, 7
      %v3197 = vor.u32 %v3193, %v3196
      %v3198 = vsel %vm2890, %v3189, %v3197
      %v3199 = vrot.slane %v3197, 4
      %v3201 = vshrl.u32 %v2882, 16
      %v3203 = vrot.slane %v3201, 6
      %v3204 = vshll.u32 %v2882, 16
      %v3206 = vrot.slane %v3204, 7
      %v3207 = vor.u32 %v3203, %v3206
      %v3208 = vsel %vm2890, %v3199, %v3207
      %v3209 = vrot.slane %v3207, 4
      %v3211 = vshrl.u32 %v2883, 16
      %v3213 = vrot.slane %v3211, 6
      %v3214 = vshll.u32 %v2883, 16
      %v3216 = vrot.slane %v3214, 7
      %v3217 = vor.u32 %v3213, %v3216
      %v3218 = vsel %vm2890, %v3209, %v3217
      %v3219 = vrot.slane %v3217, 4
      %v3221 = vshrl.u32 %v2884, 16
      %v3223 = vrot.slane %v3221, 6
      %v3224 = vshll.u32 %v2884, 16
      %v3226 = vrot.slane %v3224, 7
      %v3227 = vor.u32 %v3223, %v3226
      %v3228 = vsel %vm2890, %v3219, %v3227
      %v3229 = vrot.slane %v3227, 4
      %v3231 = vshrl.u32 %v2885, 16
      %v3233 = vrot.slane %v3231, 6
      %v3234 = vshll.u32 %v2885, 16
      %v3236 = vrot.slane %v3234, 7
      %v3237 = vor.u32 %v3233, %v3236
      %v3238 = vsel %vm2890, %v3229, %v3237
      %v3239 = vrot.slane %v3237, 4
      %v3241 = vshrl.u32 %v2886, 16
      %v3243 = vrot.slane %v3241, 6
      %v3244 = vshll.u32 %v2886, 16
      %v3246 = vrot.slane %v3244, 7
      %v3247 = vor.u32 %v3243, %v3246
      %v3248 = vsel %vm2890, %v3239, %v3247
      %v3249 = vrot.slane %v3247, 4
      %v3251 = vshrl.u32 %v2887, 16
      %v3253 = vrot.slane %v3251, 6
      %v3254 = vshll.u32 %v2887, 16
      %v3256 = vrot.slane %v3254, 7
      %v3257 = vor.u32 %v3253, %v3256
      %v3258 = vsel %vm2890, %v3249, %v3257
      %3259 = vrot.lane.b32.xlu0 %v2908, 28
      %v3260 = vpop.permute.xlu0 %3259
      %3261 = vrot.lane.b32.xlu0 %v2918, 28
      %v3262 = vpop.permute.xlu0 %3261
      %3263 = vrot.lane.b32.xlu0 %v2928, 28
      %v3264 = vpop.permute.xlu0 %3263
      %3265 = vrot.lane.b32.xlu0 %v2938, 28
      %v3266 = vpop.permute.xlu0 %3265
      %3267 = vrot.lane.b32.xlu0 %v2948, 28
      %v3268 = vpop.permute.xlu0 %3267
      %3269 = vrot.lane.b32.xlu0 %v2958, 28
      %v3270 = vpop.permute.xlu0 %3269
      %3271 = vrot.lane.b32.xlu0 %v2968, 28
      %v3272 = vpop.permute.xlu0 %3271
      %3273 = vrot.lane.b32.xlu0 %v2978, 28
      %v3274 = vpop.permute.xlu0 %3273
      %3275 = vrot.lane.b32.xlu0 %v2988, 28
      %v3276 = vpop.permute.xlu0 %3275
      %3277 = vrot.lane.b32.xlu0 %v2998, 28
      %v3278 = vpop.permute.xlu0 %3277
      %3279 = vrot.lane.b32.xlu0 %v3008, 28
      %v3280 = vpop.permute.xlu0 %3279
      %3281 = vrot.lane.b32.xlu0 %v3018, 28
      %v3282 = vpop.permute.xlu0 %3281
      %3283 = vrot.lane.b32.xlu0 %v3028, 28
      %v3284 = vpop.permute.xlu0 %3283
      %3285 = vrot.lane.b32.xlu0 %v3038, 28
      %v3286 = vpop.permute.xlu0 %3285
      %3287 = vrot.lane.b32.xlu0 %v3048, 28
      %v3288 = vpop.permute.xlu0 %3287
      %3289 = vrot.lane.b32.xlu0 %v3058, 28
      %v3290 = vpop.permute.xlu0 %3289
      %3291 = vrot.lane.b32.xlu0 %v3068, 28
      %v3292 = vpop.permute.xlu0 %3291
      %3293 = vrot.lane.b32.xlu0 %v3078, 28
      %v3294 = vpop.permute.xlu0 %3293
      %3295 = vrot.lane.b32.xlu0 %v3088, 28
      %v3296 = vpop.permute.xlu0 %3295
      %3297 = vrot.lane.b32.xlu0 %v3098, 28
      %v3298 = vpop.permute.xlu0 %3297
      %3299 = vrot.lane.b32.xlu0 %v3108, 28
      %v3300 = vpop.permute.xlu0 %3299
      %3301 = vrot.lane.b32.xlu0 %v3118, 28
      %v3302 = vpop.permute.xlu0 %3301
      %3303 = vrot.lane.b32.xlu0 %v3128, 28
      %v3304 = vpop.permute.xlu0 %3303
      %3305 = vrot.lane.b32.xlu0 %v3138, 28
      %v3306 = vpop.permute.xlu0 %3305
      %3307 = vrot.lane.b32.xlu0 %v3148, 28
      %v3308 = vpop.permute.xlu0 %3307
      %3309 = vrot.lane.b32.xlu0 %v3158, 28
      %v3310 = vpop.permute.xlu0 %3309
      %3311 = vrot.lane.b32.xlu0 %v3168, 28
      %v3312 = vpop.permute.xlu0 %3311
      %3313 = vrot.lane.b32.xlu0 %v3178, 28
      %v3314 = vpop.permute.xlu0 %3313
      %3315 = vrot.lane.b32.xlu0 %v3188, 28
      %v3316 = vpop.permute.xlu0 %3315
      %3317 = vrot.lane.b32.xlu0 %v3198, 28
      %v3318 = vpop.permute.xlu0 %3317
      %3319 = vrot.lane.b32.xlu0 %v3208, 28
      %v3320 = vpop.permute.xlu0 %3319
      %3321 = vrot.lane.b32.xlu0 %v3218, 28
      %v3322 = vpop.permute.xlu0 %3321
      %3323 = vrot.lane.b32.xlu0 %v3228, 28
      %v3324 = vpop.permute.xlu0 %3323
      %3325 = vrot.lane.b32.xlu0 %v3238, 28
      %v3326 = vpop.permute.xlu0 %3325
      %3327 = vrot.lane.b32.xlu0 %v3248, 28
      %v3328 = vpop.permute.xlu0 %3327
      %3329 = vrot.lane.b32.xlu0 %v3258, 28
      %v3330 = vpop.permute.xlu0 %3329
      %vm3367 = vcmask 257248
      %3368 = vst.msk [vmem:[#allocation3] sm:$0xf] %vm3367, %v3260
      %3369 = vst.msk [vmem:[#allocation3 + $0x4] sm:$0xf] %vm3367, %v3262
      %3370 = vst.msk [vmem:[#allocation3 + $0x8] sm:$0xf] %vm3367, %v3264
      %3371 = vst.msk [vmem:[#allocation3 + $0xc] sm:$0xf] %vm3367, %v3266
      %3372 = vst.msk [vmem:[#allocation3 + $0x10] sm:$0xf] %vm3367, %v3268
      %3373 = vst.msk [vmem:[#allocation3 + $0x14] sm:$0xf] %vm3367, %v3270
      %3374 = vst.msk [vmem:[#allocation3 + $0x18] sm:$0xf] %vm3367, %v3272
      %3375 = vst.msk [vmem:[#allocation3 + $0x1c] sm:$0xf] %vm3367, %v3274
      %3376 = vst.msk [vmem:[#allocation3 + $0x20] sm:$0xf] %vm3367, %v3276
      %3377 = vst.msk [vmem:[#allocation3 + $0x24] sm:$0xf] %vm3367, %v3278
      %3378 = vst.msk [vmem:[#allocation3 + $0x28] sm:$0xf] %vm3367, %v3280
      %3379 = vst.msk [vmem:[#allocation3 + $0x2c] sm:$0xf] %vm3367, %v3282
      %3380 = vst.msk [vmem:[#allocation3 + $0x30] sm:$0xf] %vm3367, %v3284
      %3381 = vst.msk [vmem:[#allocation3 + $0x34] sm:$0xf] %vm3367, %v3286
      %3382 = vst.msk [vmem:[#allocation3 + $0x38] sm:$0xf] %vm3367, %v3288
      %3383 = vst.msk [vmem:[#allocation3 + $0x3c] sm:$0xf] %vm3367, %v3290
      %3384 = vst.msk [vmem:[#allocation3 + $0x40] sm:$0xf] %vm3367, %v3292
      %3385 = vst.msk [vmem:[#allocation3 + $0x44] sm:$0xf] %vm3367, %v3294
      %3386 = vst.msk [vmem:[#allocation3 + $0x48] sm:$0xf] %vm3367, %v3296
      %3387 = vst.msk [vmem:[#allocation3 + $0x4c] sm:$0xf] %vm3367, %v3298
      %3388 = vst.msk [vmem:[#allocation3 + $0x50] sm:$0xf] %vm3367, %v3300
      %3389 = vst.msk [vmem:[#allocation3 + $0x54] sm:$0xf] %vm3367, %v3302
      %3390 = vst.msk [vmem:[#allocation3 + $0x58] sm:$0xf] %vm3367, %v3304
      %3391 = vst.msk [vmem:[#allocation3 + $0x5c] sm:$0xf] %vm3367, %v3306
      %3392 = vst.msk [vmem:[#allocation3 + $0x60] sm:$0xf] %vm3367, %v3308
      %3393 = vst.msk [vmem:[#allocation3 + $0x64] sm:$0xf] %vm3367, %v3310
      %3394 = vst.msk [vmem:[#allocation3 + $0x68] sm:$0xf] %vm3367, %v3312
      %3395 = vst.msk [vmem:[#allocation3 + $0x6c] sm:$0xf] %vm3367, %v3314
      %3396 = vst.msk [vmem:[#allocation3 + $0x70] sm:$0xf] %vm3367, %v3316
      %3397 = vst.msk [vmem:[#allocation3 + $0x74] sm:$0xf] %vm3367, %v3318
      %3398 = vst.msk [vmem:[#allocation3 + $0x78] sm:$0xf] %vm3367, %v3320
      %3399 = vst.msk [vmem:[#allocation3 + $0x7c] sm:$0xf] %vm3367, %v3322
      %3400 = vst.msk [vmem:[#allocation3 + $0x80] sm:$0xf] %vm3367, %v3324
      %3401 = vst.msk [vmem:[#allocation3 + $0x84] sm:$0xf] %vm3367, %v3326
      %3402 = vst.msk [vmem:[#allocation3 + $0x88] sm:$0xf] %vm3367, %v3328
      %3403 = vst.msk [vmem:[#allocation3 + $0x8c] sm:$0xf] %vm3367, %v3330
      %v3404 = vld [vmem:[#allocation2 + $0x10] sm:$0x8]
      %v3405 = vld [vmem:[#allocation2 + $0x14] sm:$0xf]
      %v3406 = vld [vmem:[#allocation2 + $0x18] sm:$0xf]
      %v3407 = vld [vmem:[#allocation2 + $0x1c] sm:$0xf]
      %v3408 = vld [vmem:[#allocation2 + $0x20] sm:$0xf]
      %v3409 = vld [vmem:[#allocation2 + $0x24] sm:$0xf]
      %v3410 = vld [vmem:[#allocation2 + $0x28] sm:$0xf]
      %v3411 = vld [vmem:[#allocation2 + $0x2c] sm:$0xf]
      %v3412 = vld [vmem:[#allocation2 + $0x30] sm:$0xf]
      %v3413 = vld [vmem:[#allocation2 + $0x34] sm:$0xf]
      %v3414 = vld [vmem:[#allocation2 + $0x38] sm:$0xf]
      %v3415 = vld [vmem:[#allocation2 + $0x3c] sm:$0xf]
      %v3416 = vld [vmem:[#allocation2 + $0x40] sm:$0xf]
      %v3417 = vld [vmem:[#allocation2 + $0x44] sm:$0xf]
      %v3418 = vld [vmem:[#allocation2 + $0x48] sm:$0xf]
      %v3419 = vld [vmem:[#allocation2 + $0x4c] sm:$0xf]
      %v3420 = vld [vmem:[#allocation2 + $0x50] sm:$0xf]
      %v3421 = vld [vmem:[#allocation2 + $0x54] sm:$0xf]
      %v3422 = vld [vmem:[#allocation2 + $0x58] sm:$0xf]
      %v3423 = vld [vmem:[#allocation2 + $0x5c] sm:$0xf]
      %v3424 = vld [vmem:[#allocation2 + $0x60] sm:$0xf]
      %v3425 = vld [vmem:[#allocation2 + $0x64] sm:$0xf]
      %v3426 = vld [vmem:[#allocation2 + $0x68] sm:$0xf]
      %v3427 = vld [vmem:[#allocation2 + $0x6c] sm:$0xf]
      %v3428 = vld [vmem:[#allocation2 + $0x70] sm:$0xf]
      %v3429 = vld [vmem:[#allocation2 + $0x74] sm:$0xf]
      %v3430 = vld [vmem:[#allocation2 + $0x78] sm:$0xf]
      %v3431 = vld [vmem:[#allocation2 + $0x7c] sm:$0xf]
      %v3432 = vld [vmem:[#allocation2 + $0x80] sm:$0xf]
      %v3433 = vld [vmem:[#allocation2 + $0x84] sm:$0xf]
      %v3434 = vld [vmem:[#allocation2 + $0x88] sm:$0xf]
      %v3435 = vld [vmem:[#allocation2 + $0x8c] sm:$0xf]
      %v3436 = vld [vmem:[#allocation2 + $0x90] sm:$0xf]
      %v3437 = vld [vmem:[#allocation2 + $0x94] sm:$0xf]
      %v3438 = vld [vmem:[#allocation2 + $0x98] sm:$0xf]
      %v3439 = vld [vmem:[#allocation2 + $0x9c] sm:$0xf]
      %v3440 = vld [vmem:[#allocation2 + $0xa0] sm:$0x7]
      %vm3478 = vcmask 1040384
      %vm3479 = vcmask 1044484
      %vm3480 = vmor %vm3478, %vm3479
      %v3481 = vrot.slane %v3404, 7
      %v3482 = vrot.slane %v3481, 4
      %v3483 = vrot.slane %v3405, 7
      %v3484 = vsel %vm3480, %v3482, %v3483
      %v3485 = vrot.slane %v3483, 4
      %v3486 = vrot.slane %v3406, 7
      %v3487 = vsel %vm3480, %v3485, %v3486
      %v3488 = vrot.slane %v3486, 4
      %v3489 = vrot.slane %v3407, 7
      %v3490 = vsel %vm3480, %v3488, %v3489
      %v3491 = vrot.slane %v3489, 4
      %v3492 = vrot.slane %v3408, 7
      %v3493 = vsel %vm3480, %v3491, %v3492
      %v3494 = vrot.slane %v3492, 4
      %v3495 = vrot.slane %v3409, 7
      %v3496 = vsel %vm3480, %v3494, %v3495
      %v3497 = vrot.slane %v3495, 4
      %v3498 = vrot.slane %v3410, 7
      %v3499 = vsel %vm3480, %v3497, %v3498
      %v3500 = vrot.slane %v3498, 4
      %v3501 = vrot.slane %v3411, 7
      %v3502 = vsel %vm3480, %v3500, %v3501
      %v3503 = vrot.slane %v3501, 4
      %v3504 = vrot.slane %v3412, 7
      %v3505 = vsel %vm3480, %v3503, %v3504
      %v3506 = vrot.slane %v3504, 4
      %v3507 = vrot.slane %v3413, 7
      %v3508 = vsel %vm3480, %v3506, %v3507
      %v3509 = vrot.slane %v3507, 4
      %v3510 = vrot.slane %v3414, 7
      %v3511 = vsel %vm3480, %v3509, %v3510
      %v3512 = vrot.slane %v3510, 4
      %v3513 = vrot.slane %v3415, 7
      %v3514 = vsel %vm3480, %v3512, %v3513
      %v3515 = vrot.slane %v3513, 4
      %v3516 = vrot.slane %v3416, 7
      %v3517 = vsel %vm3480, %v3515, %v3516
      %v3518 = vrot.slane %v3516, 4
      %v3519 = vrot.slane %v3417, 7
      %v3520 = vsel %vm3480, %v3518, %v3519
      %v3521 = vrot.slane %v3519, 4
      %v3522 = vrot.slane %v3418, 7
      %v3523 = vsel %vm3480, %v3521, %v3522
      %v3524 = vrot.slane %v3522, 4
      %v3525 = vrot.slane %v3419, 7
      %v3526 = vsel %vm3480, %v3524, %v3525
      %v3527 = vrot.slane %v3525, 4
      %v3528 = vrot.slane %v3420, 7
      %v3529 = vsel %vm3480, %v3527, %v3528
      %v3530 = vrot.slane %v3528, 4
      %v3531 = vrot.slane %v3421, 7
      %v3532 = vsel %vm3480, %v3530, %v3531
      %v3533 = vrot.slane %v3531, 4
      %v3534 = vrot.slane %v3422, 7
      %v3535 = vsel %vm3480, %v3533, %v3534
      %v3536 = vrot.slane %v3534, 4
      %v3537 = vrot.slane %v3423, 7
      %v3538 = vsel %vm3480, %v3536, %v3537
      %v3539 = vrot.slane %v3537, 4
      %v3540 = vrot.slane %v3424, 7
      %v3541 = vsel %vm3480, %v3539, %v3540
      %v3542 = vrot.slane %v3540, 4
      %v3543 = vrot.slane %v3425, 7
      %v3544 = vsel %vm3480, %v3542, %v3543
      %v3545 = vrot.slane %v3543, 4
      %v3546 = vrot.slane %v3426, 7
      %v3547 = vsel %vm3480, %v3545, %v3546
      %v3548 = vrot.slane %v3546, 4
      %v3549 = vrot.slane %v3427, 7
      %v3550 = vsel %vm3480, %v3548, %v3549
      %v3551 = vrot.slane %v3549, 4
      %v3552 = vrot.slane %v3428, 7
      %v3553 = vsel %vm3480, %v3551, %v3552
      %v3554 = vrot.slane %v3552, 4
      %v3555 = vrot.slane %v3429, 7
      %v3556 = vsel %vm3480, %v3554, %v3555
      %v3557 = vrot.slane %v3555, 4
      %v3558 = vrot.slane %v3430, 7
      %v3559 = vsel %vm3480, %v3557, %v3558
      %v3560 = vrot.slane %v3558, 4
      %v3561 = vrot.slane %v3431, 7
      %v3562 = vsel %vm3480, %v3560, %v3561
      %v3563 = vrot.slane %v3561, 4
      %v3564 = vrot.slane %v3432, 7
      %v3565 = vsel %vm3480, %v3563, %v3564
      %v3566 = vrot.slane %v3564, 4
      %v3567 = vrot.slane %v3433, 7
      %v3568 = vsel %vm3480, %v3566, %v3567
      %v3569 = vrot.slane %v3567, 4
      %v3570 = vrot.slane %v3434, 7
      %v3571 = vsel %vm3480, %v3569, %v3570
      %v3572 = vrot.slane %v3570, 4
      %v3573 = vrot.slane %v3435, 7
      %v3574 = vsel %vm3480, %v3572, %v3573
      %v3575 = vrot.slane %v3573, 4
      %v3576 = vrot.slane %v3436, 7
      %v3577 = vsel %vm3480, %v3575, %v3576
      %v3578 = vrot.slane %v3576, 4
      %v3579 = vrot.slane %v3437, 7
      %v3580 = vsel %vm3480, %v3578, %v3579
      %v3581 = vrot.slane %v3579, 4
      %v3582 = vrot.slane %v3438, 7
      %v3583 = vsel %vm3480, %v3581, %v3582
      %v3584 = vrot.slane %v3582, 4
      %v3585 = vrot.slane %v3439, 7
      %v3586 = vsel %vm3480, %v3584, %v3585
      %v3587 = vrot.slane %v3585, 4
      %v3588 = vrot.slane %v3440, 7
      %v3589 = vsel %vm3480, %v3587, %v3588
      %3590 = vrot.lane.b32.xlu0 %v3484, 32
      %v3591 = vpop.permute.xlu0 %3590
      %3592 = vrot.lane.b32.xlu0 %v3487, 32
      %v3593 = vpop.permute.xlu0 %3592
      %3594 = vrot.lane.b32.xlu0 %v3490, 32
      %v3595 = vpop.permute.xlu0 %3594
      %3596 = vrot.lane.b32.xlu0 %v3493, 32
      %v3597 = vpop.permute.xlu0 %3596
      %3598 = vrot.lane.b32.xlu0 %v3496, 32
      %v3599 = vpop.permute.xlu0 %3598
      %3600 = vrot.lane.b32.xlu0 %v3499, 32
      %v3601 = vpop.permute.xlu0 %3600
      %3602 = vrot.lane.b32.xlu0 %v3502, 32
      %v3603 = vpop.permute.xlu0 %3602
      %3604 = vrot.lane.b32.xlu0 %v3505, 32
      %v3605 = vpop.permute.xlu0 %3604
      %3606 = vrot.lane.b32.xlu0 %v3508, 32
      %v3607 = vpop.permute.xlu0 %3606
      %3608 = vrot.lane.b32.xlu0 %v3511, 32
      %v3609 = vpop.permute.xlu0 %3608
      %3610 = vrot.lane.b32.xlu0 %v3514, 32
      %v3611 = vpop.permute.xlu0 %3610
      %3612 = vrot.lane.b32.xlu0 %v3517, 32
      %v3613 = vpop.permute.xlu0 %3612
      %3614 = vrot.lane.b32.xlu0 %v3520, 32
      %v3615 = vpop.permute.xlu0 %3614
      %3616 = vrot.lane.b32.xlu0 %v3523, 32
      %v3617 = vpop.permute.xlu0 %3616
      %3618 = vrot.lane.b32.xlu0 %v3526, 32
      %v3619 = vpop.permute.xlu0 %3618
      %3620 = vrot.lane.b32.xlu0 %v3529, 32
      %v3621 = vpop.permute.xlu0 %3620
      %3622 = vrot.lane.b32.xlu0 %v3532, 32
      %v3623 = vpop.permute.xlu0 %3622
      %3624 = vrot.lane.b32.xlu0 %v3535, 32
      %v3625 = vpop.permute.xlu0 %3624
      %3626 = vrot.lane.b32.xlu0 %v3538, 32
      %v3627 = vpop.permute.xlu0 %3626
      %3628 = vrot.lane.b32.xlu0 %v3541, 32
      %v3629 = vpop.permute.xlu0 %3628
      %3630 = vrot.lane.b32.xlu0 %v3544, 32
      %v3631 = vpop.permute.xlu0 %3630
      %3632 = vrot.lane.b32.xlu0 %v3547, 32
      %v3633 = vpop.permute.xlu0 %3632
      %3634 = vrot.lane.b32.xlu0 %v3550, 32
      %v3635 = vpop.permute.xlu0 %3634
      %3636 = vrot.lane.b32.xlu0 %v3553, 32
      %v3637 = vpop.permute.xlu0 %3636
      %3638 = vrot.lane.b32.xlu0 %v3556, 32
      %v3639 = vpop.permute.xlu0 %3638
      %3640 = vrot.lane.b32.xlu0 %v3559, 32
      %v3641 = vpop.permute.xlu0 %3640
      %3642 = vrot.lane.b32.xlu0 %v3562, 32
      %v3643 = vpop.permute.xlu0 %3642
      %3644 = vrot.lane.b32.xlu0 %v3565, 32
      %v3645 = vpop.permute.xlu0 %3644
      %3646 = vrot.lane.b32.xlu0 %v3568, 32
      %v3647 = vpop.permute.xlu0 %3646
      %3648 = vrot.lane.b32.xlu0 %v3571, 32
      %v3649 = vpop.permute.xlu0 %3648
      %3650 = vrot.lane.b32.xlu0 %v3574, 32
      %v3651 = vpop.permute.xlu0 %3650
      %3652 = vrot.lane.b32.xlu0 %v3577, 32
      %v3653 = vpop.permute.xlu0 %3652
      %3654 = vrot.lane.b32.xlu0 %v3580, 32
      %v3655 = vpop.permute.xlu0 %3654
      %3656 = vrot.lane.b32.xlu0 %v3583, 32
      %v3657 = vpop.permute.xlu0 %3656
      %3658 = vrot.lane.b32.xlu0 %v3586, 32
      %v3659 = vpop.permute.xlu0 %3658
      %3660 = vrot.lane.b32.xlu0 %v3589, 32
      %v3661 = vpop.permute.xlu0 %3660
      %vm3698 = vcmask 290048
      %3699 = vst.msk [vmem:[#allocation3] sm:$0xf] %vm3698, %v3591
      %3700 = vst.msk [vmem:[#allocation3 + $0x4] sm:$0xf] %vm3698, %v3593
      %3701 = vst.msk [vmem:[#allocation3 + $0x8] sm:$0xf] %vm3698, %v3595
      %3702 = vst.msk [vmem:[#allocation3 + $0xc] sm:$0xf] %vm3698, %v3597
      %3703 = vst.msk [vmem:[#allocation3 + $0x10] sm:$0xf] %vm3698, %v3599
      %3704 = vst.msk [vmem:[#allocation3 + $0x14] sm:$0xf] %vm3698, %v3601
      %3705 = vst.msk [vmem:[#allocation3 + $0x18] sm:$0xf] %vm3698, %v3603
      %3706 = vst.msk [vmem:[#allocation3 + $0x1c] sm:$0xf] %vm3698, %v3605
      %3707 = vst.msk [vmem:[#allocation3 + $0x20] sm:$0xf] %vm3698, %v3607
      %3708 = vst.msk [vmem:[#allocation3 + $0x24] sm:$0xf] %vm3698, %v3609
      %3709 = vst.msk [vmem:[#allocation3 + $0x28] sm:$0xf] %vm3698, %v3611
      %3710 = vst.msk [vmem:[#allocation3 + $0x2c] sm:$0xf] %vm3698, %v3613
      %3711 = vst.msk [vmem:[#allocation3 + $0x30] sm:$0xf] %vm3698, %v3615
      %3712 = vst.msk [vmem:[#allocation3 + $0x34] sm:$0xf] %vm3698, %v3617
      %3713 = vst.msk [vmem:[#allocation3 + $0x38] sm:$0xf] %vm3698, %v3619
      %3714 = vst.msk [vmem:[#allocation3 + $0x3c] sm:$0xf] %vm3698, %v3621
      %3715 = vst.msk [vmem:[#allocation3 + $0x40] sm:$0xf] %vm3698, %v3623
      %3716 = vst.msk [vmem:[#allocation3 + $0x44] sm:$0xf] %vm3698, %v3625
      %3717 = vst.msk [vmem:[#allocation3 + $0x48] sm:$0xf] %vm3698, %v3627
      %3718 = vst.msk [vmem:[#allocation3 + $0x4c] sm:$0xf] %vm3698, %v3629
      %3719 = vst.msk [vmem:[#allocation3 + $0x50] sm:$0xf] %vm3698, %v3631
      %3720 = vst.msk [vmem:[#allocation3 + $0x54] sm:$0xf] %vm3698, %v3633
      %3721 = vst.msk [vmem:[#allocation3 + $0x58] sm:$0xf] %vm3698, %v3635
      %3722 = vst.msk [vmem:[#allocation3 + $0x5c] sm:$0xf] %vm3698, %v3637
      %3723 = vst.msk [vmem:[#allocation3 + $0x60] sm:$0xf] %vm3698, %v3639
      %3724 = vst.msk [vmem:[#allocation3 + $0x64] sm:$0xf] %vm3698, %v3641
      %3725 = vst.msk [vmem:[#allocation3 + $0x68] sm:$0xf] %vm3698, %v3643
      %3726 = vst.msk [vmem:[#allocation3 + $0x6c] sm:$0xf] %vm3698, %v3645
      %3727 = vst.msk [vmem:[#allocation3 + $0x70] sm:$0xf] %vm3698, %v3647
      %3728 = vst.msk [vmem:[#allocation3 + $0x74] sm:$0xf] %vm3698, %v3649
      %3729 = vst.msk [vmem:[#allocation3 + $0x78] sm:$0xf] %vm3698, %v3651
      %3730 = vst.msk [vmem:[#allocation3 + $0x7c] sm:$0xf] %vm3698, %v3653
      %3731 = vst.msk [vmem:[#allocation3 + $0x80] sm:$0xf] %vm3698, %v3655
      %3732 = vst.msk [vmem:[#allocation3 + $0x84] sm:$0xf] %vm3698, %v3657
      %3733 = vst.msk [vmem:[#allocation3 + $0x88] sm:$0xf] %vm3698, %v3659
      %3734 = vst.msk [vmem:[#allocation3 + $0x8c] sm:$0xf] %vm3698, %v3661
      %v3735 = vld [vmem:[#allocation3] sm:$0xf]
      %v3736 = vld [vmem:[#allocation3 + $0x4] sm:$0xf]
      %v3737 = vld [vmem:[#allocation3 + $0x8] sm:$0xf]
      %v3738 = vld [vmem:[#allocation3 + $0xc] sm:$0xf]
      %v3739 = vld [vmem:[#allocation3 + $0x10] sm:$0xf]
      %v3740 = vld [vmem:[#allocation3 + $0x14] sm:$0xf]
      %v3741 = vld [vmem:[#allocation3 + $0x18] sm:$0xf]
      %v3742 = vld [vmem:[#allocation3 + $0x1c] sm:$0xf]
      %v3743 = vld [vmem:[#allocation3 + $0x20] sm:$0xf]
      %v3744 = vld [vmem:[#allocation3 + $0x24] sm:$0xf]
      %v3745 = vld [vmem:[#allocation3 + $0x28] sm:$0xf]
      %v3746 = vld [vmem:[#allocation3 + $0x2c] sm:$0xf]
      %v3747 = vld [vmem:[#allocation3 + $0x30] sm:$0xf]
      %v3748 = vld [vmem:[#allocation3 + $0x34] sm:$0xf]
      %v3749 = vld [vmem:[#allocation3 + $0x38] sm:$0xf]
      %v3750 = vld [vmem:[#allocation3 + $0x3c] sm:$0xf]
      %v3751 = vld [vmem:[#allocation3 + $0x40] sm:$0xf]
      %v3752 = vld [vmem:[#allocation3 + $0x44] sm:$0xf]
      %v3753 = vld [vmem:[#allocation3 + $0x48] sm:$0xf]
      %v3754 = vld [vmem:[#allocation3 + $0x4c] sm:$0xf]
      %v3755 = vld [vmem:[#allocation3 + $0x50] sm:$0xf]
      %v3756 = vld [vmem:[#allocation3 + $0x54] sm:$0xf]
      %v3757 = vld [vmem:[#allocation3 + $0x58] sm:$0xf]
      %v3758 = vld [vmem:[#allocation3 + $0x5c] sm:$0xf]
      %v3759 = vld [vmem:[#allocation3 + $0x60] sm:$0xf]
      %v3760 = vld [vmem:[#allocation3 + $0x64] sm:$0xf]
      %v3761 = vld [vmem:[#allocation3 + $0x68] sm:$0xf]
      %v3762 = vld [vmem:[#allocation3 + $0x6c] sm:$0xf]
      %v3763 = vld [vmem:[#allocation3 + $0x70] sm:$0xf]
      %v3764 = vld [vmem:[#allocation3 + $0x74] sm:$0xf]
      %v3765 = vld [vmem:[#allocation3 + $0x78] sm:$0xf]
      %v3766 = vld [vmem:[#allocation3 + $0x7c] sm:$0xf]
      %v3767 = vld [vmem:[#allocation3 + $0x80] sm:$0xf]
      %v3768 = vld [vmem:[#allocation3 + $0x84] sm:$0xf]
      %v3769 = vld [vmem:[#allocation3 + $0x88] sm:$0xf]
      %v3770 = vld [vmem:[#allocation3 + $0x8c] sm:$0xf]
      %v3771 = vld [vmem:[%s2] sm:$0xf]
      %v3772 = vld [vmem:[%s2 + $0x4] sm:$0xf]
      %v3773 = vld [vmem:[%s2 + $0x8] sm:$0xf]
      %v3774 = vld [vmem:[%s2 + $0xc] sm:$0xf]
      %v3775 = vld [vmem:[%s2 + $0x10] sm:$0x3]
      %v3776 = vld [vmem:[%s3] sm:$0x1]
      %v3778 = vlaneseq
      %v3779 = vshrl.u32 %v3778, 7
      %v3780 = vsub.s32 0, %v3779
      %v3781 = vrot.slane %v3776, %v3780
      %v3819 = vunpack.c.l.b16 %v3735
      %v3820 = vunpack.c.l.b16 %v3736
      %v3821 = vunpack.c.l.b16 %v3737
      %v3822 = vunpack.c.l.b16 %v3738
      %v3823 = vunpack.c.l.b16 %v3739
      %v3824 = vunpack.c.l.b16 %v3740
      %v3825 = vunpack.c.l.b16 %v3741
      %v3826 = vunpack.c.l.b16 %v3742
      %v3827 = vunpack.c.l.b16 %v3743
      %v3828 = vunpack.c.l.b16 %v3744
      %v3829 = vunpack.c.l.b16 %v3745
      %v3830 = vunpack.c.l.b16 %v3746
      %v3831 = vunpack.c.l.b16 %v3747
      %v3832 = vunpack.c.l.b16 %v3748
      %v3833 = vunpack.c.l.b16 %v3749
      %v3834 = vunpack.c.l.b16 %v3750
      %v3835 = vunpack.c.l.b16 %v3751
      %v3836 = vunpack.c.l.b16 %v3752
      %v3837 = vunpack.c.l.b16 %v3753
      %v3838 = vunpack.c.l.b16 %v3754
      %v3839 = vunpack.c.l.b16 %v3755
      %v3840 = vunpack.c.l.b16 %v3756
      %v3841 = vunpack.c.l.b16 %v3757
      %v3842 = vunpack.c.l.b16 %v3758
      %v3843 = vunpack.c.l.b16 %v3759
      %v3844 = vunpack.c.l.b16 %v3760
      %v3845 = vunpack.c.l.b16 %v3761
      %v3846 = vunpack.c.l.b16 %v3762
      %v3847 = vunpack.c.l.b16 %v3763
      %v3848 = vunpack.c.l.b16 %v3764
      %v3849 = vunpack.c.l.b16 %v3765
      %v3850 = vunpack.c.l.b16 %v3766
      %v3851 = vunpack.c.l.b16 %v3767
      %v3852 = vunpack.c.l.b16 %v3768
      %v3853 = vunpack.c.l.b16 %v3769
      %v3854 = vunpack.c.l.b16 %v3770
      %v3855 = vpack.c.b16 %v3820, %v3819
      %v3856 = vpack.c.b16 %v3822, %v3821
      %v3857 = vpack.c.b16 %v3824, %v3823
      %v3858 = vpack.c.b16 %v3826, %v3825
      %v3859 = vpack.c.b16 %v3828, %v3827
      %v3860 = vpack.c.b16 %v3830, %v3829
      %v3861 = vpack.c.b16 %v3832, %v3831
      %v3862 = vpack.c.b16 %v3834, %v3833
      %v3863 = vpack.c.b16 %v3836, %v3835
      %v3864 = vpack.c.b16 %v3838, %v3837
      %v3865 = vpack.c.b16 %v3840, %v3839
      %v3866 = vpack.c.b16 %v3842, %v3841
      %v3867 = vpack.c.b16 %v3844, %v3843
      %v3868 = vpack.c.b16 %v3846, %v3845
      %v3869 = vpack.c.b16 %v3848, %v3847
      %v3870 = vpack.c.b16 %v3850, %v3849
      %v3871 = vpack.c.b16 %v3852, %v3851
      %v3872 = vpack.c.b16 %v3854, %v3853
      %v3878 = vunpack.c.l.b16 %v3771
      %v3879 = vunpack.c.l.b16 %v3772
      %v3880 = vunpack.c.l.b16 %v3773
      %v3881 = vunpack.c.l.b16 %v3774
      %v3882 = vunpack.c.l.b16 %v3775
      %v3883 = vpack.c.b16 %v3879, %v3878
      %v3884 = vpack.c.b16 %v3881, %v3880
      %v3885 = vpack.c.b16 %v3882, %v3882
      %vm3888 = vcmask 293888
      %v3890 = vsel %vm3888, %v3855, 0
      %v3893 = vsel %vm3888, %v3856, 0
      %v3896 = vsel %vm3888, %v3857, 0
      %v3899 = vsel %vm3888, %v3858, 0
      %v3902 = vsel %vm3888, %v3859, 0
      %v3905 = vsel %vm3888, %v3860, 0
      %v3908 = vsel %vm3888, %v3861, 0
      %v3911 = vsel %vm3888, %v3862, 0
      %v3914 = vsel %vm3888, %v3863, 0
      %v3917 = vsel %vm3888, %v3864, 0
      %v3920 = vsel %vm3888, %v3865, 0
      %v3923 = vsel %vm3888, %v3866, 0
      %v3926 = vsel %vm3888, %v3867, 0
      %v3929 = vsel %vm3888, %v3868, 0
      %v3932 = vsel %vm3888, %v3869, 0
      %v3935 = vsel %vm3888, %v3870, 0
      %v3938 = vsel %vm3888, %v3871, 0
      %v3941 = vsel %vm3888, %v3872, 0
      %vm3943 = vcmask 1041408
      %v3945 = vsel %vm3943, %v3885, 0
      %3947 = vmatprep.subr.bf16.mxu0 0
      %3948 = vmatpush1.bf16.msra.mxu0 0
      %3949 = vmatprep.subr.bf16.mxu0 0
      %3950 = vmatpush1.bf16.msra.mxu0 0
      %3951 = vmatprep.subr.bf16.mxu0 0
      %3952 = vmatpush1.bf16.msra.mxu0 0
      %3953 = vmatprep.subr.bf16.mxu0 0
      %3954 = vmatpush1.bf16.msra.mxu0 0
      %3955 = vmatprep.subr.bf16.mxu0 0
      %3956 = vmatpush1.bf16.msra.mxu0 0
      %3957 = vmatprep.subr.bf16.mxu0 0
      %3958 = vmatpush1.bf16.msra.mxu0 %v3945
      %3959 = vmatprep.subr.bf16.mxu0 0
      %3960 = vmatpush1.bf16.msra.mxu0 %v3884
      %3961 = vmatprep.subr.bf16.mxu0 0
      %3962 = vmatpush1.bf16.msra.mxu0 %v3883
      %3963 = vmatprep.subr.bf16.mxu0 0
      %3964 = vmatpush2.bf16.msra.mxu0 0
      %3965 = vmatprep.subr.bf16.mxu0 0
      %3966 = vmatpush2.bf16.msra.mxu0 0
      %3967 = vmatprep.subr.bf16.mxu0 0
      %3968 = vmatpush2.bf16.msra.mxu0 0
      %3969 = vmatprep.subr.bf16.mxu0 0
      %3970 = vmatpush2.bf16.msra.mxu0 0
      %3971 = vmatprep.subr.bf16.mxu0 0
      %3972 = vmatpush2.bf16.msra.mxu0 0
      %3973 = vmatprep.subr.bf16.mxu0 0
      %3974 = vmatpush2.bf16.msra.mxu0 0
      %3975 = vmatprep.subr.bf16.mxu0 0
      %3976 = vmatpush2.bf16.msra.mxu0 0
      %3977 = vmatprep.subr.bf16.mxu0 0
      %3978 = vmatpush2.bf16.msra.mxu0 0
      %3979 = vmatprep.mubr.bf16.mxu0 0
      %3980 = vmatmul.mubr.bf16.gmra.mxu0 %v3890
      %v3981 = vpop.f32.mrf.mxu0
      %v3982 = vadd.f32 %v3781, %v3981
      %v3983 = vpop.f32.mrf.mxu0
      %v3984 = vpop.f32.mrf.mxu0
      %v3985 = vadd.f32 %v3781, %v3984
      %v3986 = vpop.f32.mrf.mxu0
      %3987 = vmatprep.mubr.bf16.mxu0 0
      %3988 = vmatmul.mubr.bf16.gmra.mxu0 %v3893
      %v3989 = vpop.f32.mrf.mxu0
      %v3990 = vadd.f32 %v3781, %v3989
      %v3991 = vpop.f32.mrf.mxu0
      %v3992 = vpop.f32.mrf.mxu0
      %v3993 = vadd.f32 %v3781, %v3992
      %v3994 = vpop.f32.mrf.mxu0
      %3995 = vmatprep.mubr.bf16.mxu0 0
      %3996 = vmatmul.mubr.bf16.gmra.mxu0 %v3896
      %v3997 = vpop.f32.mrf.mxu0
      %v3998 = vadd.f32 %v3781, %v3997
      %v3999 = vpop.f32.mrf.mxu0
      %v4000 = vpop.f32.mrf.mxu0
      %v4001 = vadd.f32 %v3781, %v4000
      %v4002 = vpop.f32.mrf.mxu0
      %4003 = vmatprep.mubr.bf16.mxu0 0
      %4004 = vmatmul.mubr.bf16.gmra.mxu0 %v3899
      %v4005 = vpop.f32.mrf.mxu0
      %v4006 = vadd.f32 %v3781, %v4005
      %v4007 = vpop.f32.mrf.mxu0
      %v4008 = vpop.f32.mrf.mxu0
      %v4009 = vadd.f32 %v3781, %v4008
      %v4010 = vpop.f32.mrf.mxu0
      %4011 = vmatprep.mubr.bf16.mxu0 0
      %4012 = vmatmul.mubr.bf16.gmra.mxu0 %v3902
      %v4013 = vpop.f32.mrf.mxu0
      %v4014 = vadd.f32 %v3781, %v4013
      %v4015 = vpop.f32.mrf.mxu0
      %v4016 = vpop.f32.mrf.mxu0
      %v4017 = vadd.f32 %v3781, %v4016
      %v4018 = vpop.f32.mrf.mxu0
      %4019 = vmatprep.mubr.bf16.mxu0 0
      %4020 = vmatmul.mubr.bf16.gmra.mxu0 %v3905
      %v4021 = vpop.f32.mrf.mxu0
      %v4022 = vadd.f32 %v3781, %v4021
      %v4023 = vpop.f32.mrf.mxu0
      %v4024 = vpop.f32.mrf.mxu0
      %v4025 = vadd.f32 %v3781, %v4024
      %v4026 = vpop.f32.mrf.mxu0
      %4027 = vmatprep.mubr.bf16.mxu0 0
      %4028 = vmatmul.mubr.bf16.gmra.mxu0 %v3908
      %v4029 = vpop.f32.mrf.mxu0
      %v4030 = vadd.f32 %v3781, %v4029
      %v4031 = vpop.f32.mrf.mxu0
      %v4032 = vpop.f32.mrf.mxu0
      %v4033 = vadd.f32 %v3781, %v4032
      %v4034 = vpop.f32.mrf.mxu0
      %4035 = vmatprep.mubr.bf16.mxu0 0
      %4036 = vmatmul.mubr.bf16.gmra.mxu0 %v3911
      %v4037 = vpop.f32.mrf.mxu0
      %v4038 = vadd.f32 %v3781, %v4037
      %v4039 = vpop.f32.mrf.mxu0
      %v4040 = vpop.f32.mrf.mxu0
      %v4041 = vadd.f32 %v3781, %v4040
      %v4042 = vpop.f32.mrf.mxu0
      %4043 = vmatprep.mubr.bf16.mxu0 0
      %4044 = vmatmul.mubr.bf16.gmra.mxu0 %v3914
      %v4045 = vpop.f32.mrf.mxu0
      %v4046 = vadd.f32 %v3781, %v4045
      %v4047 = vpop.f32.mrf.mxu0
      %v4048 = vpop.f32.mrf.mxu0
      %v4049 = vadd.f32 %v3781, %v4048
      %v4050 = vpop.f32.mrf.mxu0
      %4051 = vmatprep.mubr.bf16.mxu0 0
      %4052 = vmatmul.mubr.bf16.gmra.mxu0 %v3917
      %v4053 = vpop.f32.mrf.mxu0
      %v4054 = vadd.f32 %v3781, %v4053
      %v4055 = vpop.f32.mrf.mxu0
      %v4056 = vpop.f32.mrf.mxu0
      %v4057 = vadd.f32 %v3781, %v4056
      %v4058 = vpop.f32.mrf.mxu0
      %4059 = vmatprep.mubr.bf16.mxu0 0
      %4060 = vmatmul.mubr.bf16.gmra.mxu0 %v3920
      %v4061 = vpop.f32.mrf.mxu0
      %v4062 = vadd.f32 %v3781, %v4061
      %v4063 = vpop.f32.mrf.mxu0
      %v4064 = vpop.f32.mrf.mxu0
      %v4065 = vadd.f32 %v3781, %v4064
      %v4066 = vpop.f32.mrf.mxu0
      %4067 = vmatprep.mubr.bf16.mxu0 0
      %4068 = vmatmul.mubr.bf16.gmra.mxu0 %v3923
      %v4069 = vpop.f32.mrf.mxu0
      %v4070 = vadd.f32 %v3781, %v4069
      %v4071 = vpop.f32.mrf.mxu0
      %v4072 = vpop.f32.mrf.mxu0
      %v4073 = vadd.f32 %v3781, %v4072
      %v4074 = vpop.f32.mrf.mxu0
      %4075 = vmatprep.mubr.bf16.mxu0 0
      %4076 = vmatmul.mubr.bf16.gmra.mxu0 %v3926
      %v4077 = vpop.f32.mrf.mxu0
      %v4078 = vadd.f32 %v3781, %v4077
      %v4079 = vpop.f32.mrf.mxu0
      %v4080 = vpop.f32.mrf.mxu0
      %v4081 = vadd.f32 %v3781, %v4080
      %v4082 = vpop.f32.mrf.mxu0
      %4083 = vmatprep.mubr.bf16.mxu0 0
      %4084 = vmatmul.mubr.bf16.gmra.mxu0 %v3929
      %v4085 = vpop.f32.mrf.mxu0
      %v4086 = vadd.f32 %v3781, %v4085
      %v4087 = vpop.f32.mrf.mxu0
      %v4088 = vpop.f32.mrf.mxu0
      %v4089 = vadd.f32 %v3781, %v4088
      %v4090 = vpop.f32.mrf.mxu0
      %4091 = vmatprep.mubr.bf16.mxu0 0
      %4092 = vmatmul.mubr.bf16.gmra.mxu0 %v3932
      %v4093 = vpop.f32.mrf.mxu0
      %v4094 = vadd.f32 %v3781, %v4093
      %v4095 = vpop.f32.mrf.mxu0
      %v4096 = vpop.f32.mrf.mxu0
      %v4097 = vadd.f32 %v3781, %v4096
      %v4098 = vpop.f32.mrf.mxu0
      %4099 = vmatprep.mubr.bf16.mxu0 0
      %4100 = vmatmul.mubr.bf16.gmra.mxu0 %v3935
      %v4101 = vpop.f32.mrf.mxu0
      %v4102 = vadd.f32 %v3781, %v4101
      %v4103 = vpop.f32.mrf.mxu0
      %v4104 = vpop.f32.mrf.mxu0
      %v4105 = vadd.f32 %v3781, %v4104
      %v4106 = vpop.f32.mrf.mxu0
      %4107 = vmatprep.mubr.bf16.mxu0 0
      %4108 = vmatmul.mubr.bf16.gmra.mxu0 %v3938
      %v4109 = vpop.f32.mrf.mxu0
      %v4110 = vadd.f32 %v3781, %v4109
      %v4111 = vpop.f32.mrf.mxu0
      %v4112 = vpop.f32.mrf.mxu0
      %v4113 = vadd.f32 %v3781, %v4112
      %v4114 = vpop.f32.mrf.mxu0
      %4115 = vmatprep.mubr.bf16.mxu0 0
      %4116 = vmatmul.mubr.bf16.gmra.mxu0 %v3941
      %v4117 = vpop.f32.mrf.mxu0
      %v4118 = vadd.f32 %v3781, %v4117
      %v4119 = vpop.f32.mrf.mxu0
      %v4120 = vpop.f32.mrf.mxu0
      %v4121 = vadd.f32 %v3781, %v4120
      %v4122 = vpop.f32.mrf.mxu0
      %4123 = vdwg.mxu0
      %vm4124 = vcmp.gt.f32.partialorder %v3982, 0.0
      %vm4125 = vcmp.gt.f32.partialorder %v3985, 0.0
      %vm4126 = vcmp.gt.f32.partialorder %v3990, 0.0
      %vm4127 = vcmp.gt.f32.partialorder %v3993, 0.0
      %vm4128 = vcmp.gt.f32.partialorder %v3998, 0.0
      %vm4129 = vcmp.gt.f32.partialorder %v4001, 0.0
      %vm4130 = vcmp.gt.f32.partialorder %v4006, 0.0
      %vm4131 = vcmp.gt.f32.partialorder %v4009, 0.0
      %vm4132 = vcmp.gt.f32.partialorder %v4014, 0.0
      %vm4133 = vcmp.gt.f32.partialorder %v4017, 0.0
      %vm4134 = vcmp.gt.f32.partialorder %v4022, 0.0
      %vm4135 = vcmp.gt.f32.partialorder %v4025, 0.0
      %vm4136 = vcmp.gt.f32.partialorder %v4030, 0.0
      %vm4137 = vcmp.gt.f32.partialorder %v4033, 0.0
      %vm4138 = vcmp.gt.f32.partialorder %v4038, 0.0
      %vm4139 = vcmp.gt.f32.partialorder %v4041, 0.0
      %vm4140 = vcmp.gt.f32.partialorder %v4046, 0.0
      %vm4141 = vcmp.gt.f32.partialorder %v4049, 0.0
      %vm4142 = vcmp.gt.f32.partialorder %v4054, 0.0
      %vm4143 = vcmp.gt.f32.partialorder %v4057, 0.0
      %vm4144 = vcmp.gt.f32.partialorder %v4062, 0.0
      %vm4145 = vcmp.gt.f32.partialorder %v4065, 0.0
      %vm4146 = vcmp.gt.f32.partialorder %v4070, 0.0
      %vm4147 = vcmp.gt.f32.partialorder %v4073, 0.0
      %vm4148 = vcmp.gt.f32.partialorder %v4078, 0.0
      %vm4149 = vcmp.gt.f32.partialorder %v4081, 0.0
      %vm4150 = vcmp.gt.f32.partialorder %v4086, 0.0
      %vm4151 = vcmp.gt.f32.partialorder %v4089, 0.0
      %vm4152 = vcmp.gt.f32.partialorder %v4094, 0.0
      %vm4153 = vcmp.gt.f32.partialorder %v4097, 0.0
      %vm4154 = vcmp.gt.f32.partialorder %v4102, 0.0
      %vm4155 = vcmp.gt.f32.partialorder %v4105, 0.0
      %vm4156 = vcmp.gt.f32.partialorder %v4110, 0.0
      %vm4157 = vcmp.gt.f32.partialorder %v4113, 0.0
      %vm4158 = vcmp.gt.f32.partialorder %v4118, 0.0
      %vm4159 = vcmp.gt.f32.partialorder %v4121, 0.0
      %v4160 = vmul.f32 %v3982, 0.1
      %v4161 = vmul.f32 %v3985, 0.1
      %v4162 = vmul.f32 %v3990, 0.1
      %v4163 = vmul.f32 %v3993, 0.1
      %v4164 = vmul.f32 %v3998, 0.1
      %v4165 = vmul.f32 %v4001, 0.1
      %v4166 = vmul.f32 %v4006, 0.1
      %v4167 = vmul.f32 %v4009, 0.1
      %v4168 = vmul.f32 %v4014, 0.1
      %v4169 = vmul.f32 %v4017, 0.1
      %v4170 = vmul.f32 %v4022, 0.1
      %v4171 = vmul.f32 %v4025, 0.1
      %v4172 = vmul.f32 %v4030, 0.1
      %v4173 = vmul.f32 %v4033, 0.1
      %v4174 = vmul.f32 %v4038, 0.1
      %v4175 = vmul.f32 %v4041, 0.1
      %v4176 = vmul.f32 %v4046, 0.1
      %v4177 = vmul.f32 %v4049, 0.1
      %v4178 = vmul.f32 %v4054, 0.1
      %v4179 = vmul.f32 %v4057, 0.1
      %v4180 = vmul.f32 %v4062, 0.1
      %v4181 = vmul.f32 %v4065, 0.1
      %v4182 = vmul.f32 %v4070, 0.1
      %v4183 = vmul.f32 %v4073, 0.1
      %v4184 = vmul.f32 %v4078, 0.1
      %v4185 = vmul.f32 %v4081, 0.1
      %v4186 = vmul.f32 %v4086, 0.1
      %v4187 = vmul.f32 %v4089, 0.1
      %v4188 = vmul.f32 %v4094, 0.1
      %v4189 = vmul.f32 %v4097, 0.1
      %v4190 = vmul.f32 %v4102, 0.1
      %v4191 = vmul.f32 %v4105, 0.1
      %v4192 = vmul.f32 %v4110, 0.1
      %v4193 = vmul.f32 %v4113, 0.1
      %v4194 = vmul.f32 %v4118, 0.1
      %v4195 = vmul.f32 %v4121, 0.1
      %v4196 = vsel %vm4124, %v3982, %v4160
      %v4197 = vsel %vm4125, %v3985, %v4161
      %v4198 = vsel %vm4126, %v3990, %v4162
      %v4199 = vsel %vm4127, %v3993, %v4163
      %v4200 = vsel %vm4128, %v3998, %v4164
      %v4201 = vsel %vm4129, %v4001, %v4165
      %v4202 = vsel %vm4130, %v4006, %v4166
      %v4203 = vsel %vm4131, %v4009, %v4167
      %v4204 = vsel %vm4132, %v4014, %v4168
      %v4205 = vsel %vm4133, %v4017, %v4169
      %v4206 = vsel %vm4134, %v4022, %v4170
      %v4207 = vsel %vm4135, %v4025, %v4171
      %v4208 = vsel %vm4136, %v4030, %v4172
      %v4209 = vsel %vm4137, %v4033, %v4173
      %v4210 = vsel %vm4138, %v4038, %v4174
      %v4211 = vsel %vm4139, %v4041, %v4175
      %v4212 = vsel %vm4140, %v4046, %v4176
      %v4213 = vsel %vm4141, %v4049, %v4177
      %v4214 = vsel %vm4142, %v4054, %v4178
      %v4215 = vsel %vm4143, %v4057, %v4179
      %v4216 = vsel %vm4144, %v4062, %v4180
      %v4217 = vsel %vm4145, %v4065, %v4181
      %v4218 = vsel %vm4146, %v4070, %v4182
      %v4219 = vsel %vm4147, %v4073, %v4183
      %v4220 = vsel %vm4148, %v4078, %v4184
      %v4221 = vsel %vm4149, %v4081, %v4185
      %v4222 = vsel %vm4150, %v4086, %v4186
      %v4223 = vsel %vm4151, %v4089, %v4187
      %v4224 = vsel %vm4152, %v4094, %v4188
      %v4225 = vsel %vm4153, %v4097, %v4189
      %v4226 = vsel %vm4154, %v4102, %v4190
      %v4227 = vsel %vm4155, %v4105, %v4191
      %v4228 = vsel %vm4156, %v4110, %v4192
      %v4229 = vsel %vm4157, %v4113, %v4193
      %v4230 = vsel %vm4158, %v4118, %v4194
      %v4231 = vsel %vm4159, %v4121, %v4195
      %4232 = vst [vmem:[%s272] sm:$0xff] %v4196
      %4233 = vst [vmem:[%s272 + $0x8] sm:$0xff] %v4197
      %4234 = vst [vmem:[%s272 + $0x10] sm:$0xff] %v4198
      %4235 = vst [vmem:[%s272 + $0x18] sm:$0xff] %v4199
      %4236 = vst [vmem:[%s272 + $0x20] sm:$0xff] %v4200
      %4237 = vst [vmem:[%s272 + $0x28] sm:$0xff] %v4201
      %4238 = vst [vmem:[%s272 + $0x30] sm:$0xff] %v4202
      %4239 = vst [vmem:[%s272 + $0x38] sm:$0xff] %v4203
      %4240 = vst [vmem:[%s272 + $0x40] sm:$0xff] %v4204
      %4241 = vst [vmem:[%s272 + $0x48] sm:$0xff] %v4205
      %4242 = vst [vmem:[%s272 + $0x50] sm:$0xff] %v4206
      %4243 = vst [vmem:[%s272 + $0x58] sm:$0xff] %v4207
      %4244 = vst [vmem:[%s272 + $0x60] sm:$0xff] %v4208
      %4245 = vst [vmem:[%s272 + $0x68] sm:$0xff] %v4209
      %4246 = vst [vmem:[%s272 + $0x70] sm:$0xff] %v4210
      %4247 = vst [vmem:[%s272 + $0x78] sm:$0xff] %v4211
      %4248 = vst [vmem:[%s272 + $0x80] sm:$0xff] %v4212
      %4249 = vst [vmem:[%s272 + $0x88] sm:$0xff] %v4213
      %4250 = vst [vmem:[%s272 + $0x90] sm:$0xff] %v4214
      %4251 = vst [vmem:[%s272 + $0x98] sm:$0xff] %v4215
      %4252 = vst [vmem:[%s272 + $0xa0] sm:$0xff] %v4216
      %4253 = vst [vmem:[%s272 + $0xa8] sm:$0xff] %v4217
      %4254 = vst [vmem:[%s272 + $0xb0] sm:$0xff] %v4218
      %4255 = vst [vmem:[%s272 + $0xb8] sm:$0xff] %v4219
      %4256 = vst [vmem:[%s272 + $0xc0] sm:$0xff] %v4220
      %4257 = vst [vmem:[%s272 + $0xc8] sm:$0xff] %v4221
      %4258 = vst [vmem:[%s272 + $0xd0] sm:$0xff] %v4222
      %4259 = vst [vmem:[%s272 + $0xd8] sm:$0xff] %v4223
      %4260 = vst [vmem:[%s272 + $0xe0] sm:$0xff] %v4224
      %4261 = vst [vmem:[%s272 + $0xe8] sm:$0xff] %v4225
      %4262 = vst [vmem:[%s272 + $0xf0] sm:$0xff] %v4226
      %4263 = vst [vmem:[%s272 + $0xf8] sm:$0xff] %v4227
      %4264 = vst [vmem:[%s272 + $0x100] sm:$0xff] %v4228
      %4265 = vst [vmem:[%s272 + $0x108] sm:$0xff] %v4229
      %4266 = vst [vmem:[%s272 + $0x110] sm:$0xff] %v4230
      %4267 = vst [vmem:[%s272 + $0x118] sm:$0xff] %v4231
      %s4268 = sadd.s32 %s19, %s20
      %s4269 = smul.u32 36, %s4268
      %p4270 = scmp.lt.s32.totalorder %s4269, 71
      %s4271 = scalar_select %p4270, %s4269, 71
      %s4272 = smul.addr %s4271, 8
      %s4273 = scalar_lea.vmem %s4, %s4272
      // Predicated region
      $region37: #{cnn_block_forward.1} parent=35 // pred_check
        %p4274 = pneg %p151
      $region38: #{cnn_block_forward.1} parent=35 // pred_check_branch
        %4276 = sbr.rel (%p4274) target = $region40
      $region39: #{cnn_block_forward.1} parent=35 // pred_region
        %s4277 = sadd.s32 %s19, %s20
        %s4278 = smul.u32 36, %s4277
      $region40: #{cnn_block_forward.1} parent=35 // pred_fallthru
        _
    $region36: #{cnn_block_forward.1} parent=5 // pred_fallthru
      _
    %p4279 = scmp.le.s32.totalorder 2, %s10
    // Predicated region
    $region41: #{cnn_block_forward.1} parent=5 // pred_check
      %p4280 = pneg %p4279
    $region42: #{cnn_block_forward.1} parent=5 // pred_check_branch
      %4282 = sbr.rel (%p4280) target = $region44
    $region43: #{cnn_block_forward.1} parent=5 // pred_region
      %s4283 = ssub.s32 %s10, 2
      // Predicated region
      $region45: #{cnn_block_forward.1} parent=43 // pred_check
        %p4284 = pneg %p157
      $region46: #{cnn_block_forward.1} parent=43 // pred_check_branch
        %4286 = sbr.rel (%p4284) target = $region48
      $region47: #{cnn_block_forward.1} parent=43 // pred_region
        %s4287 = sadd.s32 %s21, %s22
        %s4288 = smul.u32 36, %s4287
        %p4289 = scmp.lt.s32.totalorder %s4288, 71
        %s4290 = scalar_select %p4289, %s4288, 71
        %s4291 = smul.addr %s4290, 8
        %s4292 = scalar_lea.vmem %s4, %s4291
      $region48: #{cnn_block_forward.1} parent=43 // pred_fallthru
        _
    $region44: #{cnn_block_forward.1} parent=5 // pred_fallthru
      _
  $region6: #{cnn_block_forward.1} parent=0 // loop_footer
    %s14 = sadd.s32 1, %s10
  $region7: #{cnn_block_forward.1} parent=0 // loop_footer_branch
    %9 = sbr.rel target = $region3
  $region8: #{cnn_block_forward.1} parent=0 // loop_exit
    _

</llo_original>
